<compile_context>
chip_gen: v7x
topology: tpu7x:2x2x1
jax: 0.10.0
libtpu: 0.0.40
codegen_flags: <defaults>
</compile_context>

<pallas_src>
import functools

import jax
import jax.numpy as jnp
from jax.experimental import pallas as pl
from jax.experimental.pallas import tpu as pltpu

EPS = 1e-5     # BatchNorm eps (PyTorch default)
SLOPE = 0.1    # LeakyReLU negative slope


# ----------------------------------------------------------------------------
# Fused Pallas kernel: whole IGS forward for one (B*N) view per grid step.
# Activations are (channels, h*w) f32 values, spatial flattened on lanes.
# ----------------------------------------------------------------------------
def _igs_kernel(poly_ref, x_ref,
                m1s_ref, ml1_ref, ml2_ref, ml3_ref, ml4_ref,
                sub2_ref, sub3_ref, sub4_ref,
                w1c1_ref, w21_ref, w1c2_ref, w22_ref,
                w1c3_ref, w23_ref, w1c4_ref, w24_ref, wda_ref,
                out_ref, *, C, fH, fW):
    f32 = jnp.float32
    cc = C // 2
    h1, w1 = 8 * fH, 8 * fW          # resolution after ResBlock 1
    h2, w2 = 4 * fH, 4 * fW
    h3, w3 = 2 * fH, 2 * fW
    h4, w4 = fH, fW

    def leaky(v):
        return jnp.maximum(v, SLOPE * v)

    def roll_lanes(v, amt, n):
        """jnp.roll semantics along axis 1 (lanes); wrapped values are masked by caller."""
        amt = amt % n
        if amt == 0:
            return v
        if n % 128 == 0:                       # native XLU rotate for aligned widths
            return pltpu.roll(v, amt, axis=1)
        return jnp.roll(v, amt, axis=1)        # tiny planes: static slices + concat

    def conv3x3(a, h, w, mask, w_ref, bias_row=True):
        """3x3 stride-1 conv (padding=1) as one MXU matmul.

        a:    (cin, h*w) activations, spatial flattened on lanes.
        mask: (9, h*w) 0/1 boundary masks, one row per tap t=(dy+1)*3+(dx+1).
        w_ref:(cout', 9*cin [+1]) folded weights (+ bias column if bias_row).
        """
        n = h * w
        taps = []
        for dy in (-1, 0, 1):
            for dx in (-1, 0, 1):
                t = (dy + 1) * 3 + (dx + 1)
                shift = dy * w + dx
                v = roll_lanes(a, -shift, n)          # v[:, i] = a[:, i + shift]
                if shift != 0:
                    v = v * mask[t:t + 1, :]          # zero padding at the borders
                taps.append(v)
        if bias_row:
            taps.append(jnp.ones((1, n), f32))        # folded-BN bias via extra row
        patch = jnp.concatenate(taps, axis=0)          # (9*cin [+1], h*w)
        return jnp.dot(w_ref[...], patch, preferred_element_type=f32)

    def rb1_conv1(poly, mask, w_ref):
        """ResBlock-1 conv1 (1->cc, 3x3, stride 2) + 1x1 stride-2 shortcut, one matmul.

        poly: (4, h1*w1) polyphase rows of the illumination map,
              poly[ry*2+rx, a*w1+b] = illu[2a+ry, 2b+rx].
        """
        n = h1 * w1
        taps = []
        for dy in (-1, 0, 1):
            for dx in (-1, 0, 1):
                t = (dy + 1) * 3 + (dx + 1)
                p = (0 if dy == 0 else 2) + (0 if dx == 0 else 1)
                v = poly[p:p + 1, :]
                amt = (w1 if dy == -1 else 0) + (1 if dx == -1 else 0)
                if amt:
                    v = roll_lanes(v, amt, n) * mask[t:t + 1, :]
                taps.append(v)
        taps.append(jnp.ones((1, n), f32))
        patch = jnp.concatenate(taps, axis=0)          # (10, h1*w1)
        return jnp.dot(w_ref[...], patch, preferred_element_type=f32)

    def resblock(a, h, w, cout, mask_hi, mask_lo, sub_ref, w1c_ref, w2_ref):
        """Stride-2 ResBlock: combined conv1+shortcut at full res, 0/1 subsample
        matmul down to (h/2, w/2), then conv2 and the residual join + LeakyReLU."""
        full = conv3x3(a, h, w, mask_hi, w1c_ref)                        # (2*cout, h*w)
        both = jnp.dot(full.astype(jnp.bfloat16), sub_ref[...],
                       preferred_element_type=f32)                       # (2*cout, h*w/4)
        hid = leaky(both[:cout, :])
        sc = both[cout:, :]
        o2 = conv3x3(hid, h // 2, w // 2, mask_lo, w2_ref)               # (cout, h*w/4)
        return leaky(o2 + sc)

    # grid-invariant constants (loaded once into VMEM by the pipeline)
    m1s = m1s_ref[...]
    ml1 = ml1_ref[...]
    ml2 = ml2_ref[...]
    ml3 = ml3_ref[...]
    ml4 = ml4_ref[...]

    # ---- illumination branch: ResBlock 1 (1 -> C/2, stride 2) ------------------
    poly = poly_ref[0]                                                   # (4, h1*w1)
    o1 = rb1_conv1(poly, m1s, w1c1_ref)                                  # (2*cc, h1*w1)
    hid = leaky(o1[:cc, :])
    sc = o1[cc:, :]
    o2 = conv3x3(hid, h1, w1, ml1, w21_ref)                              # (cc, h1*w1)
    a = leaky(o2 + sc)

    # ---- ResBlocks 2-4 (each stride 2) ------------------------------------------
    a = resblock(a, h1, w1, cc, ml1, ml2, sub2_ref, w1c2_ref, w22_ref)   # (cc, h2*w2)
    a = resblock(a, h2, w2, cc, ml2, ml3, sub3_ref, w1c3_ref, w23_ref)   # (cc, h3*w3)
    d = resblock(a, h3, w3, C, ml3, ml4, sub4_ref, w1c4_ref, w24_ref)    # (C, fH*fW)

    # ---- DA layer + gating + residual (fused epilogue) --------------------------
    # TODO(synk): DCN_layer_illu (illumination-guided deformable conv) source was not
    # provided; placeholder = plain 3x3 conv on x gated by sigmoid(illu_map_d).
    xv = x_ref[0]                                                        # (C, fH*fW)
    feat = conv3x3(xv, h4, w4, ml4, wda_ref, bias_row=False)             # (C, fH*fW)
    out_ref[0] = feat * jax.nn.sigmoid(d) + xv


# ----------------------------------------------------------------------------
# Wrapper: BN folding, weight packing, precomputed masks / subsample matrices.
# ----------------------------------------------------------------------------
def _fold_conv_bn(w, bn):
    gamma, beta, mean, var = bn
    scale = gamma * jax.lax.rsqrt(var + EPS)
    return w * scale[:, None, None, None], beta - mean * scale


def _conv_mat(w):
    """(cout, cin, 3, 3) -> (cout, 9*cin); column index = (ky*3+kx)*cin + ci."""
    cout, cin = w.shape[0], w.shape[1]
    return jnp.transpose(w, (0, 2, 3, 1)).reshape(cout, 9 * cin).astype(jnp.float32)


def _block_weights(p):
    """Folded + packed weights of one ResBlock.

    Returns:
      w1c: (2*cout, 9*cin + 1)  conv1 rows on top, 1x1-shortcut rows below,
                                last column = folded BN bias.
      w2c: (cout, 9*cout + 1)   conv2 weights + bias column.
    """
    w1, b1 = _fold_conv_bn(p["conv1"], p["bn1"])
    w2, b2 = _fold_conv_bn(p["conv2"], p["bn2"])
    ws, bs = _fold_conv_bn(p["convs"], p["bns"])
    cout, cin = w1.shape[0], w1.shape[1]
    w1m = _conv_mat(w1)
    wsm = jnp.zeros((cout, 9 * cin), jnp.float32)
    wsm = wsm.at[:, 4 * cin:5 * cin].set(ws[:, :, 0, 0])      # shortcut == centre tap
    top = jnp.concatenate([w1m, b1[:, None]], axis=1)
    bot = jnp.concatenate([wsm, bs[:, None]], axis=1)
    w1c = jnp.concatenate([top, bot], axis=0).astype(jnp.float32)
    w2c = jnp.concatenate([_conv_mat(w2), b2[:, None]], axis=1).astype(jnp.float32)
    return w1c, w2c


def _std_masks(h, w):
    """(9, h*w) 0/1 masks of the 3x3 padding=1 taps, tap index t=(dy+1)*3+(dx+1)."""
    a = jnp.arange(h)
    b = jnp.arange(w)
    rows = []
    for dy in (-1, 0, 1):
        rv = (a + dy >= 0) & (a + dy < h)
        for dx in (-1, 0, 1):
            cv = (b + dx >= 0) & (b + dx < w)
            rows.append((rv[:, None] & cv[None, :]).reshape(-1))
    return jnp.stack(rows).astype(jnp.float32)


def _rb1_masks(oh, ow):
    """Masks for ResBlock-1's stride-2 taps built from the polyphase rows."""
    a = jnp.arange(oh)
    b = jnp.arange(ow)
    rows = []
    for dy in (-1, 0, 1):
        rv = a >= (1 if dy == -1 else 0)
        for dx in (-1, 0, 1):
            cv = b >= (1 if dx == -1 else 0)
            rows.append((rv[:, None] & cv[None, :]).reshape(-1))
    return jnp.stack(rows).astype(jnp.float32)


def _sub_matrix(h, w):
    """(h*w, (h/2)*(w/2)) 0/1 matrix selecting the stride-2 (even, even) positions."""
    oh, ow = h // 2, w // 2
    r = jnp.arange(h * w) // w
    c = jnp.arange(h * w) % w
    a = jnp.arange(oh * ow) // ow
    b = jnp.arange(oh * ow) % ow
    sel = (r[:, None] == 2 * a[None, :]) & (c[:, None] == 2 * b[None, :])
    return sel.astype(jnp.bfloat16)


def _const_spec(arr):
    nd = arr.ndim
    return pl.BlockSpec(arr.shape, lambda v, _nd=nd: (0,) * _nd)


def igs_forward(params, x, illu_map):
    """x: (B, N, C, fH, fW); illu_map: (B*N, 1, H, W) with (H, W) = 16*(fH, fW)."""
    B, N, C, fH, fW = x.shape
    BN = B * N
    H, W = illu_map.shape[-2], illu_map.shape[-1]
    assert H == 16 * fH and W == 16 * fW, "illumination map must be 16x the feature map"
    assert C % 2 == 0

    h1, w1 = 8 * fH, 8 * fW
    h2, w2 = 4 * fH, 4 * fW
    h3, w3 = 2 * fH, 2 * fW
    n1, n4 = h1 * w1, fH * fW

    # Layout plumbing (wrapper side): polyphase-split + flatten the illumination map,
    # flatten the image features -> lane-dense (channels, h*w) blocks for the kernel.
    illu = illu_map.reshape(BN, H, W).astype(jnp.float32)
    poly = jnp.stack([illu[:, 0::2, 0::2], illu[:, 0::2, 1::2],
                      illu[:, 1::2, 0::2], illu[:, 1::2, 1::2]], axis=1)
    poly = poly.reshape(BN, 4, n1)
    x_in = x.reshape(BN, C, n4).astype(jnp.float32)

    w1c1, w21 = _block_weights(params["rb1"])
    w1c2, w22 = _block_weights(params["rb2"])
    w1c3, w23 = _block_weights(params["rb3"])
    w1c4, w24 = _block_weights(params["rb4"])
    wda = _conv_mat(params["da"]["conv"])

    consts = [
        _rb1_masks(h1, w1),          # m1s
        _std_masks(h1, w1),          # ml1
        _std_masks(h2, w2),          # ml2
        _std_masks(h3, w3),          # ml3
        _std_masks(fH, fW),          # ml4
        _sub_matrix(h1, w1),         # sub2
        _sub_matrix(h2, w2),         # sub3
        _sub_matrix(h3, w3),         # sub4
        w1c1, w21, w1c2, w22, w1c3, w23, w1c4, w24, wda,
    ]

    kernel = functools.partial(_igs_kernel, C=C, fH=fH, fW=fW)
    out = pl.pallas_call(
        kernel,
        out_shape=jax.ShapeDtypeStruct((BN, C, n4), jnp.float32),
        grid=(BN,),
        in_specs=[pl.BlockSpec((1, 4, n1), lambda v: (v, 0, 0)),
                  pl.BlockSpec((1, C, n4), lambda v: (v, 0, 0))]
                 + [_const_spec(a) for a in consts],
        out_specs=pl.BlockSpec((1, C, n4), lambda v: (v, 0, 0)),
        compiler_params=pltpu.CompilerParams(dimension_semantics=("parallel",)),
    )(poly, x_in, *consts)
    return out.reshape(B, N, C, fH, fW)


# ----------------------------------------------------------------------------
# Deterministic parameter init (synthetic; shapes match the PyTorch module)
# ----------------------------------------------------------------------------
def init_bn(key, c):
    k1, k2, k3, k4 = jax.random.split(key, 4)
    gamma = 1.0 + 0.1 * jax.random.normal(k1, (c,), jnp.float32)
    beta = 0.1 * jax.random.normal(k2, (c,), jnp.float32)
    mean = 0.1 * jax.random.normal(k3, (c,), jnp.float32)
    var = 0.5 + 0.1 * jnp.abs(jax.random.normal(k4, (c,), jnp.float32))
    return gamma, beta, mean, var


def init_conv(key, cout, cin, k):
    return 0.1 * jax.random.normal(key, (cout, cin, k, k), jnp.float32)


def init_resblock(key, cin, cout):
    ks = jax.random.split(key, 6)
    return dict(
        conv1=init_conv(ks[0], cout, cin, 3), bn1=init_bn(ks[1], cout),
        conv2=init_conv(ks[2], cout, cout, 3), bn2=init_bn(ks[3], cout),
        convs=init_conv(ks[4], cout, cin, 1), bns=init_bn(ks[5], cout),
    )


if __name__ == "__main__":
    B, N, C, fH, fW = 1, 2, 8, 4, 4          # channels_in == channels_out == 8
    H, W = fH * 16, fW * 16                  # 4 stride-2 ResBlocks downsample illu 16x

    key = jax.random.PRNGKey(0)
    kx, kil, kp = jax.random.split(key, 3)
    x = jax.random.normal(kx, (B, N, C, fH, fW), jnp.float32)
    illu_map = jax.random.uniform(kil, (B * N, 1, H, W), jnp.float32)

    kp1, kp2, kp3, kp4, kp5 = jax.random.split(kp, 5)
    params = dict(
        rb1=init_resblock(kp1, 1, C // 2),
        rb2=init_resblock(kp2, C // 2, C // 2),
        rb3=init_resblock(kp3, C // 2, C // 2),
        rb4=init_resblock(kp4, C // 2, C),
        da=dict(conv=init_conv(kp5, C, C, 3)),
    )

    out = jax.jit(igs_forward)(params, x, illu_map)
    jax.block_until_ready(out)
    assert out.shape == (B, N, C, fH, fW)
    assert bool(jnp.isfinite(out).all())
    print("KERNEL_OK")
</pallas_src>

<mosaic_0001>
module attributes {stable_mosaic.version = 11 : i64} {
  func.func @_igs_kernel(%arg0: i32, %arg1: memref<1x4x1024xf32, #tpu.memory_space<vmem>>, %arg2: memref<1x8x16xf32, #tpu.memory_space<vmem>>, %arg3: memref<9x1024xf32, #tpu.memory_space<vmem>>, %arg4: memref<9x1024xf32, #tpu.memory_space<vmem>>, %arg5: memref<9x256xf32, #tpu.memory_space<vmem>>, %arg6: memref<9x64xf32, #tpu.memory_space<vmem>>, %arg7: memref<9x16xf32, #tpu.memory_space<vmem>>, %arg8: memref<1024x256xbf16, #tpu.memory_space<vmem>>, %arg9: memref<256x64xbf16, #tpu.memory_space<vmem>>, %arg10: memref<64x16xbf16, #tpu.memory_space<vmem>>, %arg11: memref<8x10xf32, #tpu.memory_space<vmem>>, %arg12: memref<4x37xf32, #tpu.memory_space<vmem>>, %arg13: memref<8x37xf32, #tpu.memory_space<vmem>>, %arg14: memref<4x37xf32, #tpu.memory_space<vmem>>, %arg15: memref<8x37xf32, #tpu.memory_space<vmem>>, %arg16: memref<4x37xf32, #tpu.memory_space<vmem>>, %arg17: memref<16x37xf32, #tpu.memory_space<vmem>>, %arg18: memref<8x73xf32, #tpu.memory_space<vmem>>, %arg19: memref<8x72xf32, #tpu.memory_space<vmem>>, %arg20: memref<1x8x16xf32, #tpu.memory_space<vmem>>) attributes {dimension_semantics = [#tpu.dimension_semantics<parallel>], iteration_bounds = array<i64: 2>, scalar_prefetch = 0 : i64, scratch_operands = 0 : i64, tpu.core_type = #tpu.core_type<tc>, window_params = [{transform_indices = @transform_0, window_bounds = array<i64: 1, 4, 1024>}, {transform_indices = @transform_1, window_bounds = array<i64: 1, 8, 16>}, {pipeline_mode = #tpu.pipeline_mode<synchronous>, transform_indices = @transform_2, window_bounds = array<i64: 9, 1024>}, {pipeline_mode = #tpu.pipeline_mode<synchronous>, transform_indices = @transform_3, window_bounds = array<i64: 9, 1024>}, {pipeline_mode = #tpu.pipeline_mode<synchronous>, transform_indices = @transform_4, window_bounds = array<i64: 9, 256>}, {pipeline_mode = #tpu.pipeline_mode<synchronous>, transform_indices = @transform_5, window_bounds = array<i64: 9, 64>}, {pipeline_mode = #tpu.pipeline_mode<synchronous>, transform_indices = @transform_6, window_bounds = array<i64: 9, 16>}, {pipeline_mode = #tpu.pipeline_mode<synchronous>, transform_indices = @transform_7, window_bounds = array<i64: 1024, 256>}, {pipeline_mode = #tpu.pipeline_mode<synchronous>, transform_indices = @transform_8, window_bounds = array<i64: 256, 64>}, {pipeline_mode = #tpu.pipeline_mode<synchronous>, transform_indices = @transform_9, window_bounds = array<i64: 64, 16>}, {pipeline_mode = #tpu.pipeline_mode<synchronous>, transform_indices = @transform_10, window_bounds = array<i64: 8, 10>}, {pipeline_mode = #tpu.pipeline_mode<synchronous>, transform_indices = @transform_11, window_bounds = array<i64: 4, 37>}, {pipeline_mode = #tpu.pipeline_mode<synchronous>, transform_indices = @transform_12, window_bounds = array<i64: 8, 37>}, {pipeline_mode = #tpu.pipeline_mode<synchronous>, transform_indices = @transform_13, window_bounds = array<i64: 4, 37>}, {pipeline_mode = #tpu.pipeline_mode<synchronous>, transform_indices = @transform_14, window_bounds = array<i64: 8, 37>}, {pipeline_mode = #tpu.pipeline_mode<synchronous>, transform_indices = @transform_15, window_bounds = array<i64: 4, 37>}, {pipeline_mode = #tpu.pipeline_mode<synchronous>, transform_indices = @transform_16, window_bounds = array<i64: 16, 37>}, {pipeline_mode = #tpu.pipeline_mode<synchronous>, transform_indices = @transform_17, window_bounds = array<i64: 8, 73>}, {pipeline_mode = #tpu.pipeline_mode<synchronous>, transform_indices = @transform_18, window_bounds = array<i64: 8, 72>}, {transform_indices = @transform_19, window_bounds = array<i64: 1, 8, 16>}]} {
    %c0 = arith.constant 0 : index
    %c0_0 = arith.constant 0 : index
    %0 = vector.load %arg3[%c0, %c0_0] : memref<9x1024xf32, #tpu.memory_space<vmem>>, vector<9x1024xf32>
    %c0_1 = arith.constant 0 : index
    %c0_2 = arith.constant 0 : index
    %1 = vector.load %arg4[%c0_1, %c0_2] : memref<9x1024xf32, #tpu.memory_space<vmem>>, vector<9x1024xf32>
    %c0_3 = arith.constant 0 : index
    %c0_4 = arith.constant 0 : index
    %2 = vector.load %arg5[%c0_3, %c0_4] : memref<9x256xf32, #tpu.memory_space<vmem>>, vector<9x256xf32>
    %c0_5 = arith.constant 0 : index
    %c0_6 = arith.constant 0 : index
    %3 = vector.load %arg6[%c0_5, %c0_6] : memref<9x64xf32, #tpu.memory_space<vmem>>, vector<9x64xf32>
    %c0_7 = arith.constant 0 : index
    %c0_8 = arith.constant 0 : index
    %4 = vector.load %arg7[%c0_7, %c0_8] : memref<9x16xf32, #tpu.memory_space<vmem>>, vector<9x16xf32>
    %c0_9 = arith.constant 0 : index
    %c0_10 = arith.constant 0 : index
    %c0_11 = arith.constant 0 : index
    %5 = vector.load %arg1[%c0_9, %c0_10, %c0_11] : memref<1x4x1024xf32, #tpu.memory_space<vmem>>, vector<1x4x1024xf32>
    %6 = vector.shape_cast %5 : vector<1x4x1024xf32> to vector<4x1024xf32>
    %7 = vector.extract_strided_slice %6 {offsets = [3, 0], sizes = [1, 1024], strides = [1, 1]} : vector<4x1024xf32> to vector<1x1024xf32>
    %c33_i32 = arith.constant 33 : i32
    %8 = tpu.dynamic_rotate %7 by %c33_i32 dim 1 : vector<1x1024xf32>, i32 -> vector<1x1024xf32>
    %9 = vector.extract_strided_slice %0 {offsets = [0, 0], sizes = [1, 1024], strides = [1, 1]} : vector<9x1024xf32> to vector<1x1024xf32>
    %10 = arith.mulf %8, %9 : vector<1x1024xf32>
    %11 = vector.extract_strided_slice %6 {offsets = [2, 0], sizes = [1, 1024], strides = [1, 1]} : vector<4x1024xf32> to vector<1x1024xf32>
    %c32_i32 = arith.constant 32 : i32
    %12 = tpu.dynamic_rotate %11 by %c32_i32 dim 1 : vector<1x1024xf32>, i32 -> vector<1x1024xf32>
    %13 = vector.extract_strided_slice %0 {offsets = [1, 0], sizes = [1, 1024], strides = [1, 1]} : vector<9x1024xf32> to vector<1x1024xf32>
    %14 = arith.mulf %12, %13 : vector<1x1024xf32>
    %15 = vector.extract_strided_slice %6 {offsets = [3, 0], sizes = [1, 1024], strides = [1, 1]} : vector<4x1024xf32> to vector<1x1024xf32>
    %c32_i32_12 = arith.constant 32 : i32
    %16 = tpu.dynamic_rotate %15 by %c32_i32_12 dim 1 : vector<1x1024xf32>, i32 -> vector<1x1024xf32>
    %17 = vector.extract_strided_slice %0 {offsets = [2, 0], sizes = [1, 1024], strides = [1, 1]} : vector<9x1024xf32> to vector<1x1024xf32>
    %18 = arith.mulf %16, %17 : vector<1x1024xf32>
    %19 = vector.extract_strided_slice %6 {offsets = [1, 0], sizes = [1, 1024], strides = [1, 1]} : vector<4x1024xf32> to vector<1x1024xf32>
    %c1_i32 = arith.constant 1 : i32
    %20 = tpu.dynamic_rotate %19 by %c1_i32 dim 1 : vector<1x1024xf32>, i32 -> vector<1x1024xf32>
    %21 = vector.extract_strided_slice %0 {offsets = [3, 0], sizes = [1, 1024], strides = [1, 1]} : vector<9x1024xf32> to vector<1x1024xf32>
    %22 = arith.mulf %20, %21 : vector<1x1024xf32>
    %23 = vector.extract_strided_slice %6 {offsets = [0, 0], sizes = [1, 1024], strides = [1, 1]} : vector<4x1024xf32> to vector<1x1024xf32>
    %24 = vector.extract_strided_slice %6 {offsets = [1, 0], sizes = [1, 1024], strides = [1, 1]} : vector<4x1024xf32> to vector<1x1024xf32>
    %25 = vector.extract_strided_slice %6 {offsets = [3, 0], sizes = [1, 1024], strides = [1, 1]} : vector<4x1024xf32> to vector<1x1024xf32>
    %c1_i32_13 = arith.constant 1 : i32
    %26 = tpu.dynamic_rotate %25 by %c1_i32_13 dim 1 : vector<1x1024xf32>, i32 -> vector<1x1024xf32>
    %27 = vector.extract_strided_slice %0 {offsets = [6, 0], sizes = [1, 1024], strides = [1, 1]} : vector<9x1024xf32> to vector<1x1024xf32>
    %28 = arith.mulf %26, %27 : vector<1x1024xf32>
    %29 = vector.extract_strided_slice %6 {offsets = [2, 0], sizes = [1, 1024], strides = [1, 1]} : vector<4x1024xf32> to vector<1x1024xf32>
    %30 = vector.extract_strided_slice %6 {offsets = [3, 0], sizes = [1, 1024], strides = [1, 1]} : vector<4x1024xf32> to vector<1x1024xf32>
    %cst = arith.constant 1.000000e+00 : f32
    %31 = vector.broadcast %cst : f32 to vector<1x1024xf32>
    %32 = tpu.concatenate %10, %14, %18, %22, %23, %24, %28, %29, %30, %31 in 0 : vector<1x1024xf32>, vector<1x1024xf32>, vector<1x1024xf32>, vector<1x1024xf32>, vector<1x1024xf32>, vector<1x1024xf32>, vector<1x1024xf32>, vector<1x1024xf32>, vector<1x1024xf32>, vector<1x1024xf32> -> vector<10x1024xf32>
    %c0_14 = arith.constant 0 : index
    %c0_15 = arith.constant 0 : index
    %33 = vector.load %arg11[%c0_14, %c0_15] : memref<8x10xf32, #tpu.memory_space<vmem>>, vector<8x10xf32>
    %cst_16 = arith.constant dense<0.000000e+00> : vector<8x1024xf32>
    %34 = tpu.matmul %33, %32, %cst_16 {dimension_numbers = #tpu.dot_dimension_numbers<[1], [0], [0], [1], [0, 0, 1, 1], [], []>} : vector<8x10xf32>, vector<10x1024xf32>, vector<8x1024xf32> -> vector<8x1024xf32>
    %35 = vector.extract_strided_slice %34 {offsets = [0, 0], sizes = [4, 1024], strides = [1, 1]} : vector<8x1024xf32> to vector<4x1024xf32>
    %cst_17 = arith.constant 1.000000e-01 : f32
    %36 = vector.broadcast %cst_17 : f32 to vector<4x1024xf32>
    %37 = arith.mulf %36, %35 : vector<4x1024xf32>
    %38 = arith.maximumf %35, %37 : vector<4x1024xf32>
    %39 = vector.extract_strided_slice %34 {offsets = [4, 0], sizes = [4, 1024], strides = [1, 1]} : vector<8x1024xf32> to vector<4x1024xf32>
    %c33_i32_18 = arith.constant 33 : i32
    %40 = tpu.dynamic_rotate %38 by %c33_i32_18 dim 1 : vector<4x1024xf32>, i32 -> vector<4x1024xf32>
    %41 = vector.extract_strided_slice %1 {offsets = [0, 0], sizes = [1, 1024], strides = [1, 1]} : vector<9x1024xf32> to vector<1x1024xf32>
    %42 = vector.broadcast %41 : vector<1x1024xf32> to vector<4x1024xf32>
    %43 = arith.mulf %40, %42 : vector<4x1024xf32>
    %c32_i32_19 = arith.constant 32 : i32
    %44 = tpu.dynamic_rotate %38 by %c32_i32_19 dim 1 : vector<4x1024xf32>, i32 -> vector<4x1024xf32>
    %45 = vector.extract_strided_slice %1 {offsets = [1, 0], sizes = [1, 1024], strides = [1, 1]} : vector<9x1024xf32> to vector<1x1024xf32>
    %46 = vector.broadcast %45 : vector<1x1024xf32> to vector<4x1024xf32>
    %47 = arith.mulf %44, %46 : vector<4x1024xf32>
    %c31_i32 = arith.constant 31 : i32
    %48 = tpu.dynamic_rotate %38 by %c31_i32 dim 1 : vector<4x1024xf32>, i32 -> vector<4x1024xf32>
    %49 = vector.extract_strided_slice %1 {offsets = [2, 0], sizes = [1, 1024], strides = [1, 1]} : vector<9x1024xf32> to vector<1x1024xf32>
    %50 = vector.broadcast %49 : vector<1x1024xf32> to vector<4x1024xf32>
    %51 = arith.mulf %48, %50 : vector<4x1024xf32>
    %c1_i32_20 = arith.constant 1 : i32
    %52 = tpu.dynamic_rotate %38 by %c1_i32_20 dim 1 : vector<4x1024xf32>, i32 -> vector<4x1024xf32>
    %53 = vector.extract_strided_slice %1 {offsets = [3, 0], sizes = [1, 1024], strides = [1, 1]} : vector<9x1024xf32> to vector<1x1024xf32>
    %54 = vector.broadcast %53 : vector<1x1024xf32> to vector<4x1024xf32>
    %55 = arith.mulf %52, %54 : vector<4x1024xf32>
    %c1023_i32 = arith.constant 1023 : i32
    %56 = tpu.dynamic_rotate %38 by %c1023_i32 dim 1 : vector<4x1024xf32>, i32 -> vector<4x1024xf32>
    %57 = vector.extract_strided_slice %1 {offsets = [5, 0], sizes = [1, 1024], strides = [1, 1]} : vector<9x1024xf32> to vector<1x1024xf32>
    %58 = vector.broadcast %57 : vector<1x1024xf32> to vector<4x1024xf32>
    %59 = arith.mulf %56, %58 : vector<4x1024xf32>
    %c993_i32 = arith.constant 993 : i32
    %60 = tpu.dynamic_rotate %38 by %c993_i32 dim 1 : vector<4x1024xf32>, i32 -> vector<4x1024xf32>
    %61 = vector.extract_strided_slice %1 {offsets = [6, 0], sizes = [1, 1024], strides = [1, 1]} : vector<9x1024xf32> to vector<1x1024xf32>
    %62 = vector.broadcast %61 : vector<1x1024xf32> to vector<4x1024xf32>
    %63 = arith.mulf %60, %62 : vector<4x1024xf32>
    %c992_i32 = arith.constant 992 : i32
    %64 = tpu.dynamic_rotate %38 by %c992_i32 dim 1 : vector<4x1024xf32>, i32 -> vector<4x1024xf32>
    %65 = vector.extract_strided_slice %1 {offsets = [7, 0], sizes = [1, 1024], strides = [1, 1]} : vector<9x1024xf32> to vector<1x1024xf32>
    %66 = vector.broadcast %65 : vector<1x1024xf32> to vector<4x1024xf32>
    %67 = arith.mulf %64, %66 : vector<4x1024xf32>
    %c991_i32 = arith.constant 991 : i32
    %68 = tpu.dynamic_rotate %38 by %c991_i32 dim 1 : vector<4x1024xf32>, i32 -> vector<4x1024xf32>
    %69 = vector.extract_strided_slice %1 {offsets = [8, 0], sizes = [1, 1024], strides = [1, 1]} : vector<9x1024xf32> to vector<1x1024xf32>
    %70 = vector.broadcast %69 : vector<1x1024xf32> to vector<4x1024xf32>
    %71 = arith.mulf %68, %70 : vector<4x1024xf32>
    %cst_21 = arith.constant 1.000000e+00 : f32
    %72 = vector.broadcast %cst_21 : f32 to vector<1x1024xf32>
    %73 = tpu.concatenate %43, %47, %51, %55, %38, %59, %63, %67, %71, %72 in 0 : vector<4x1024xf32>, vector<4x1024xf32>, vector<4x1024xf32>, vector<4x1024xf32>, vector<4x1024xf32>, vector<4x1024xf32>, vector<4x1024xf32>, vector<4x1024xf32>, vector<4x1024xf32>, vector<1x1024xf32> -> vector<37x1024xf32>
    %c0_22 = arith.constant 0 : index
    %c0_23 = arith.constant 0 : index
    %74 = vector.load %arg12[%c0_22, %c0_23] : memref<4x37xf32, #tpu.memory_space<vmem>>, vector<4x37xf32>
    %cst_24 = arith.constant dense<0.000000e+00> : vector<4x1024xf32>
    %75 = tpu.matmul %74, %73, %cst_24 {dimension_numbers = #tpu.dot_dimension_numbers<[1], [0], [0], [1], [0, 0, 1, 1], [], []>} : vector<4x37xf32>, vector<37x1024xf32>, vector<4x1024xf32> -> vector<4x1024xf32>
    %76 = arith.addf %75, %39 : vector<4x1024xf32>
    %cst_25 = arith.constant 1.000000e-01 : f32
    %77 = vector.broadcast %cst_25 : f32 to vector<4x1024xf32>
    %78 = arith.mulf %77, %76 : vector<4x1024xf32>
    %79 = arith.maximumf %76, %78 : vector<4x1024xf32>
    %c33_i32_26 = arith.constant 33 : i32
    %80 = tpu.dynamic_rotate %79 by %c33_i32_26 dim 1 : vector<4x1024xf32>, i32 -> vector<4x1024xf32>
    %81 = vector.extract_strided_slice %1 {offsets = [0, 0], sizes = [1, 1024], strides = [1, 1]} : vector<9x1024xf32> to vector<1x1024xf32>
    %82 = vector.broadcast %81 : vector<1x1024xf32> to vector<4x1024xf32>
    %83 = arith.mulf %80, %82 : vector<4x1024xf32>
    %c32_i32_27 = arith.constant 32 : i32
    %84 = tpu.dynamic_rotate %79 by %c32_i32_27 dim 1 : vector<4x1024xf32>, i32 -> vector<4x1024xf32>
    %85 = vector.extract_strided_slice %1 {offsets = [1, 0], sizes = [1, 1024], strides = [1, 1]} : vector<9x1024xf32> to vector<1x1024xf32>
    %86 = vector.broadcast %85 : vector<1x1024xf32> to vector<4x1024xf32>
    %87 = arith.mulf %84, %86 : vector<4x1024xf32>
    %c31_i32_28 = arith.constant 31 : i32
    %88 = tpu.dynamic_rotate %79 by %c31_i32_28 dim 1 : vector<4x1024xf32>, i32 -> vector<4x1024xf32>
    %89 = vector.extract_strided_slice %1 {offsets = [2, 0], sizes = [1, 1024], strides = [1, 1]} : vector<9x1024xf32> to vector<1x1024xf32>
    %90 = vector.broadcast %89 : vector<1x1024xf32> to vector<4x1024xf32>
    %91 = arith.mulf %88, %90 : vector<4x1024xf32>
    %c1_i32_29 = arith.constant 1 : i32
    %92 = tpu.dynamic_rotate %79 by %c1_i32_29 dim 1 : vector<4x1024xf32>, i32 -> vector<4x1024xf32>
    %93 = vector.extract_strided_slice %1 {offsets = [3, 0], sizes = [1, 1024], strides = [1, 1]} : vector<9x1024xf32> to vector<1x1024xf32>
    %94 = vector.broadcast %93 : vector<1x1024xf32> to vector<4x1024xf32>
    %95 = arith.mulf %92, %94 : vector<4x1024xf32>
    %c1023_i32_30 = arith.constant 1023 : i32
    %96 = tpu.dynamic_rotate %79 by %c1023_i32_30 dim 1 : vector<4x1024xf32>, i32 -> vector<4x1024xf32>
    %97 = vector.extract_strided_slice %1 {offsets = [5, 0], sizes = [1, 1024], strides = [1, 1]} : vector<9x1024xf32> to vector<1x1024xf32>
    %98 = vector.broadcast %97 : vector<1x1024xf32> to vector<4x1024xf32>
    %99 = arith.mulf %96, %98 : vector<4x1024xf32>
    %c993_i32_31 = arith.constant 993 : i32
    %100 = tpu.dynamic_rotate %79 by %c993_i32_31 dim 1 : vector<4x1024xf32>, i32 -> vector<4x1024xf32>
    %101 = vector.extract_strided_slice %1 {offsets = [6, 0], sizes = [1, 1024], strides = [1, 1]} : vector<9x1024xf32> to vector<1x1024xf32>
    %102 = vector.broadcast %101 : vector<1x1024xf32> to vector<4x1024xf32>
    %103 = arith.mulf %100, %102 : vector<4x1024xf32>
    %c992_i32_32 = arith.constant 992 : i32
    %104 = tpu.dynamic_rotate %79 by %c992_i32_32 dim 1 : vector<4x1024xf32>, i32 -> vector<4x1024xf32>
    %105 = vector.extract_strided_slice %1 {offsets = [7, 0], sizes = [1, 1024], strides = [1, 1]} : vector<9x1024xf32> to vector<1x1024xf32>
    %106 = vector.broadcast %105 : vector<1x1024xf32> to vector<4x1024xf32>
    %107 = arith.mulf %104, %106 : vector<4x1024xf32>
    %c991_i32_33 = arith.constant 991 : i32
    %108 = tpu.dynamic_rotate %79 by %c991_i32_33 dim 1 : vector<4x1024xf32>, i32 -> vector<4x1024xf32>
    %109 = vector.extract_strided_slice %1 {offsets = [8, 0], sizes = [1, 1024], strides = [1, 1]} : vector<9x1024xf32> to vector<1x1024xf32>
    %110 = vector.broadcast %109 : vector<1x1024xf32> to vector<4x1024xf32>
    %111 = arith.mulf %108, %110 : vector<4x1024xf32>
    %cst_34 = arith.constant 1.000000e+00 : f32
    %112 = vector.broadcast %cst_34 : f32 to vector<1x1024xf32>
    %113 = tpu.concatenate %83, %87, %91, %95, %79, %99, %103, %107, %111, %112 in 0 : vector<4x1024xf32>, vector<4x1024xf32>, vector<4x1024xf32>, vector<4x1024xf32>, vector<4x1024xf32>, vector<4x1024xf32>, vector<4x1024xf32>, vector<4x1024xf32>, vector<4x1024xf32>, vector<1x1024xf32> -> vector<37x1024xf32>
    %c0_35 = arith.constant 0 : index
    %c0_36 = arith.constant 0 : index
    %114 = vector.load %arg13[%c0_35, %c0_36] : memref<8x37xf32, #tpu.memory_space<vmem>>, vector<8x37xf32>
    %cst_37 = arith.constant dense<0.000000e+00> : vector<8x1024xf32>
    %115 = tpu.matmul %114, %113, %cst_37 {dimension_numbers = #tpu.dot_dimension_numbers<[1], [0], [0], [1], [0, 0, 1, 1], [], []>} : vector<8x37xf32>, vector<37x1024xf32>, vector<8x1024xf32> -> vector<8x1024xf32>
    %116 = arith.truncf %115 : vector<8x1024xf32> to vector<8x1024xbf16>
    %c0_38 = arith.constant 0 : index
    %c0_39 = arith.constant 0 : index
    %117 = vector.load %arg8[%c0_38, %c0_39] : memref<1024x256xbf16, #tpu.memory_space<vmem>>, vector<1024x256xbf16>
    %cst_40 = arith.constant dense<0.000000e+00> : vector<8x256xf32>
    %118 = tpu.matmul %116, %117, %cst_40 {dimension_numbers = #tpu.dot_dimension_numbers<[1], [0], [0], [1], [0, 0, 1, 1], [], []>} : vector<8x1024xbf16>, vector<1024x256xbf16>, vector<8x256xf32> -> vector<8x256xf32>
    %119 = vector.extract_strided_slice %118 {offsets = [0, 0], sizes = [4, 256], strides = [1, 1]} : vector<8x256xf32> to vector<4x256xf32>
    %cst_41 = arith.constant 1.000000e-01 : f32
    %120 = vector.broadcast %cst_41 : f32 to vector<4x256xf32>
    %121 = arith.mulf %120, %119 : vector<4x256xf32>
    %122 = arith.maximumf %119, %121 : vector<4x256xf32>
    %123 = vector.extract_strided_slice %118 {offsets = [4, 0], sizes = [4, 256], strides = [1, 1]} : vector<8x256xf32> to vector<4x256xf32>
    %c17_i32 = arith.constant 17 : i32
    %124 = tpu.dynamic_rotate %122 by %c17_i32 dim 1 : vector<4x256xf32>, i32 -> vector<4x256xf32>
    %125 = vector.extract_strided_slice %2 {offsets = [0, 0], sizes = [1, 256], strides = [1, 1]} : vector<9x256xf32> to vector<1x256xf32>
    %126 = vector.broadcast %125 : vector<1x256xf32> to vector<4x256xf32>
    %127 = arith.mulf %124, %126 : vector<4x256xf32>
    %c16_i32 = arith.constant 16 : i32
    %128 = tpu.dynamic_rotate %122 by %c16_i32 dim 1 : vector<4x256xf32>, i32 -> vector<4x256xf32>
    %129 = vector.extract_strided_slice %2 {offsets = [1, 0], sizes = [1, 256], strides = [1, 1]} : vector<9x256xf32> to vector<1x256xf32>
    %130 = vector.broadcast %129 : vector<1x256xf32> to vector<4x256xf32>
    %131 = arith.mulf %128, %130 : vector<4x256xf32>
    %c15_i32 = arith.constant 15 : i32
    %132 = tpu.dynamic_rotate %122 by %c15_i32 dim 1 : vector<4x256xf32>, i32 -> vector<4x256xf32>
    %133 = vector.extract_strided_slice %2 {offsets = [2, 0], sizes = [1, 256], strides = [1, 1]} : vector<9x256xf32> to vector<1x256xf32>
    %134 = vector.broadcast %133 : vector<1x256xf32> to vector<4x256xf32>
    %135 = arith.mulf %132, %134 : vector<4x256xf32>
    %c1_i32_42 = arith.constant 1 : i32
    %136 = tpu.dynamic_rotate %122 by %c1_i32_42 dim 1 : vector<4x256xf32>, i32 -> vector<4x256xf32>
    %137 = vector.extract_strided_slice %2 {offsets = [3, 0], sizes = [1, 256], strides = [1, 1]} : vector<9x256xf32> to vector<1x256xf32>
    %138 = vector.broadcast %137 : vector<1x256xf32> to vector<4x256xf32>
    %139 = arith.mulf %136, %138 : vector<4x256xf32>
    %c255_i32 = arith.constant 255 : i32
    %140 = tpu.dynamic_rotate %122 by %c255_i32 dim 1 : vector<4x256xf32>, i32 -> vector<4x256xf32>
    %141 = vector.extract_strided_slice %2 {offsets = [5, 0], sizes = [1, 256], strides = [1, 1]} : vector<9x256xf32> to vector<1x256xf32>
    %142 = vector.broadcast %141 : vector<1x256xf32> to vector<4x256xf32>
    %143 = arith.mulf %140, %142 : vector<4x256xf32>
    %c241_i32 = arith.constant 241 : i32
    %144 = tpu.dynamic_rotate %122 by %c241_i32 dim 1 : vector<4x256xf32>, i32 -> vector<4x256xf32>
    %145 = vector.extract_strided_slice %2 {offsets = [6, 0], sizes = [1, 256], strides = [1, 1]} : vector<9x256xf32> to vector<1x256xf32>
    %146 = vector.broadcast %145 : vector<1x256xf32> to vector<4x256xf32>
    %147 = arith.mulf %144, %146 : vector<4x256xf32>
    %c240_i32 = arith.constant 240 : i32
    %148 = tpu.dynamic_rotate %122 by %c240_i32 dim 1 : vector<4x256xf32>, i32 -> vector<4x256xf32>
    %149 = vector.extract_strided_slice %2 {offsets = [7, 0], sizes = [1, 256], strides = [1, 1]} : vector<9x256xf32> to vector<1x256xf32>
    %150 = vector.broadcast %149 : vector<1x256xf32> to vector<4x256xf32>
    %151 = arith.mulf %148, %150 : vector<4x256xf32>
    %c239_i32 = arith.constant 239 : i32
    %152 = tpu.dynamic_rotate %122 by %c239_i32 dim 1 : vector<4x256xf32>, i32 -> vector<4x256xf32>
    %153 = vector.extract_strided_slice %2 {offsets = [8, 0], sizes = [1, 256], strides = [1, 1]} : vector<9x256xf32> to vector<1x256xf32>
    %154 = vector.broadcast %153 : vector<1x256xf32> to vector<4x256xf32>
    %155 = arith.mulf %152, %154 : vector<4x256xf32>
    %cst_43 = arith.constant 1.000000e+00 : f32
    %156 = vector.broadcast %cst_43 : f32 to vector<1x256xf32>
    %157 = tpu.concatenate %127, %131, %135, %139, %122, %143, %147, %151, %155, %156 in 0 : vector<4x256xf32>, vector<4x256xf32>, vector<4x256xf32>, vector<4x256xf32>, vector<4x256xf32>, vector<4x256xf32>, vector<4x256xf32>, vector<4x256xf32>, vector<4x256xf32>, vector<1x256xf32> -> vector<37x256xf32>
    %c0_44 = arith.constant 0 : index
    %c0_45 = arith.constant 0 : index
    %158 = vector.load %arg14[%c0_44, %c0_45] : memref<4x37xf32, #tpu.memory_space<vmem>>, vector<4x37xf32>
    %cst_46 = arith.constant dense<0.000000e+00> : vector<4x256xf32>
    %159 = tpu.matmul %158, %157, %cst_46 {dimension_numbers = #tpu.dot_dimension_numbers<[1], [0], [0], [1], [0, 0, 1, 1], [], []>} : vector<4x37xf32>, vector<37x256xf32>, vector<4x256xf32> -> vector<4x256xf32>
    %160 = arith.addf %159, %123 : vector<4x256xf32>
    %cst_47 = arith.constant 1.000000e-01 : f32
    %161 = vector.broadcast %cst_47 : f32 to vector<4x256xf32>
    %162 = arith.mulf %161, %160 : vector<4x256xf32>
    %163 = arith.maximumf %160, %162 : vector<4x256xf32>
    %c17_i32_48 = arith.constant 17 : i32
    %164 = tpu.dynamic_rotate %163 by %c17_i32_48 dim 1 : vector<4x256xf32>, i32 -> vector<4x256xf32>
    %165 = vector.extract_strided_slice %2 {offsets = [0, 0], sizes = [1, 256], strides = [1, 1]} : vector<9x256xf32> to vector<1x256xf32>
    %166 = vector.broadcast %165 : vector<1x256xf32> to vector<4x256xf32>
    %167 = arith.mulf %164, %166 : vector<4x256xf32>
    %c16_i32_49 = arith.constant 16 : i32
    %168 = tpu.dynamic_rotate %163 by %c16_i32_49 dim 1 : vector<4x256xf32>, i32 -> vector<4x256xf32>
    %169 = vector.extract_strided_slice %2 {offsets = [1, 0], sizes = [1, 256], strides = [1, 1]} : vector<9x256xf32> to vector<1x256xf32>
    %170 = vector.broadcast %169 : vector<1x256xf32> to vector<4x256xf32>
    %171 = arith.mulf %168, %170 : vector<4x256xf32>
    %c15_i32_50 = arith.constant 15 : i32
    %172 = tpu.dynamic_rotate %163 by %c15_i32_50 dim 1 : vector<4x256xf32>, i32 -> vector<4x256xf32>
    %173 = vector.extract_strided_slice %2 {offsets = [2, 0], sizes = [1, 256], strides = [1, 1]} : vector<9x256xf32> to vector<1x256xf32>
    %174 = vector.broadcast %173 : vector<1x256xf32> to vector<4x256xf32>
    %175 = arith.mulf %172, %174 : vector<4x256xf32>
    %c1_i32_51 = arith.constant 1 : i32
    %176 = tpu.dynamic_rotate %163 by %c1_i32_51 dim 1 : vector<4x256xf32>, i32 -> vector<4x256xf32>
    %177 = vector.extract_strided_slice %2 {offsets = [3, 0], sizes = [1, 256], strides = [1, 1]} : vector<9x256xf32> to vector<1x256xf32>
    %178 = vector.broadcast %177 : vector<1x256xf32> to vector<4x256xf32>
    %179 = arith.mulf %176, %178 : vector<4x256xf32>
    %c255_i32_52 = arith.constant 255 : i32
    %180 = tpu.dynamic_rotate %163 by %c255_i32_52 dim 1 : vector<4x256xf32>, i32 -> vector<4x256xf32>
    %181 = vector.extract_strided_slice %2 {offsets = [5, 0], sizes = [1, 256], strides = [1, 1]} : vector<9x256xf32> to vector<1x256xf32>
    %182 = vector.broadcast %181 : vector<1x256xf32> to vector<4x256xf32>
    %183 = arith.mulf %180, %182 : vector<4x256xf32>
    %c241_i32_53 = arith.constant 241 : i32
    %184 = tpu.dynamic_rotate %163 by %c241_i32_53 dim 1 : vector<4x256xf32>, i32 -> vector<4x256xf32>
    %185 = vector.extract_strided_slice %2 {offsets = [6, 0], sizes = [1, 256], strides = [1, 1]} : vector<9x256xf32> to vector<1x256xf32>
    %186 = vector.broadcast %185 : vector<1x256xf32> to vector<4x256xf32>
    %187 = arith.mulf %184, %186 : vector<4x256xf32>
    %c240_i32_54 = arith.constant 240 : i32
    %188 = tpu.dynamic_rotate %163 by %c240_i32_54 dim 1 : vector<4x256xf32>, i32 -> vector<4x256xf32>
    %189 = vector.extract_strided_slice %2 {offsets = [7, 0], sizes = [1, 256], strides = [1, 1]} : vector<9x256xf32> to vector<1x256xf32>
    %190 = vector.broadcast %189 : vector<1x256xf32> to vector<4x256xf32>
    %191 = arith.mulf %188, %190 : vector<4x256xf32>
    %c239_i32_55 = arith.constant 239 : i32
    %192 = tpu.dynamic_rotate %163 by %c239_i32_55 dim 1 : vector<4x256xf32>, i32 -> vector<4x256xf32>
    %193 = vector.extract_strided_slice %2 {offsets = [8, 0], sizes = [1, 256], strides = [1, 1]} : vector<9x256xf32> to vector<1x256xf32>
    %194 = vector.broadcast %193 : vector<1x256xf32> to vector<4x256xf32>
    %195 = arith.mulf %192, %194 : vector<4x256xf32>
    %cst_56 = arith.constant 1.000000e+00 : f32
    %196 = vector.broadcast %cst_56 : f32 to vector<1x256xf32>
    %197 = tpu.concatenate %167, %171, %175, %179, %163, %183, %187, %191, %195, %196 in 0 : vector<4x256xf32>, vector<4x256xf32>, vector<4x256xf32>, vector<4x256xf32>, vector<4x256xf32>, vector<4x256xf32>, vector<4x256xf32>, vector<4x256xf32>, vector<4x256xf32>, vector<1x256xf32> -> vector<37x256xf32>
    %c0_57 = arith.constant 0 : index
    %c0_58 = arith.constant 0 : index
    %198 = vector.load %arg15[%c0_57, %c0_58] : memref<8x37xf32, #tpu.memory_space<vmem>>, vector<8x37xf32>
    %cst_59 = arith.constant dense<0.000000e+00> : vector<8x256xf32>
    %199 = tpu.matmul %198, %197, %cst_59 {dimension_numbers = #tpu.dot_dimension_numbers<[1], [0], [0], [1], [0, 0, 1, 1], [], []>} : vector<8x37xf32>, vector<37x256xf32>, vector<8x256xf32> -> vector<8x256xf32>
    %200 = arith.truncf %199 : vector<8x256xf32> to vector<8x256xbf16>
    %c0_60 = arith.constant 0 : index
    %c0_61 = arith.constant 0 : index
    %201 = vector.load %arg9[%c0_60, %c0_61] : memref<256x64xbf16, #tpu.memory_space<vmem>>, vector<256x64xbf16>
    %cst_62 = arith.constant dense<0.000000e+00> : vector<8x64xf32>
    %202 = tpu.matmul %200, %201, %cst_62 {dimension_numbers = #tpu.dot_dimension_numbers<[1], [0], [0], [1], [0, 0, 1, 1], [], []>} : vector<8x256xbf16>, vector<256x64xbf16>, vector<8x64xf32> -> vector<8x64xf32>
    %203 = vector.extract_strided_slice %202 {offsets = [0, 0], sizes = [4, 64], strides = [1, 1]} : vector<8x64xf32> to vector<4x64xf32>
    %cst_63 = arith.constant 1.000000e-01 : f32
    %204 = vector.broadcast %cst_63 : f32 to vector<4x64xf32>
    %205 = arith.mulf %204, %203 : vector<4x64xf32>
    %206 = arith.maximumf %203, %205 : vector<4x64xf32>
    %207 = vector.extract_strided_slice %202 {offsets = [4, 0], sizes = [4, 64], strides = [1, 1]} : vector<8x64xf32> to vector<4x64xf32>
    %208 = vector.extract_strided_slice %206 {offsets = [0, 55], sizes = [4, 9], strides = [1, 1]} : vector<4x64xf32> to vector<4x9xf32>
    %209 = vector.extract_strided_slice %206 {offsets = [0, 0], sizes = [4, 55], strides = [1, 1]} : vector<4x64xf32> to vector<4x55xf32>
    %210 = tpu.concatenate %208, %209 in 1 : vector<4x9xf32>, vector<4x55xf32> -> vector<4x64xf32>
    %211 = vector.extract_strided_slice %3 {offsets = [0, 0], sizes = [1, 64], strides = [1, 1]} : vector<9x64xf32> to vector<1x64xf32>
    %212 = vector.broadcast %211 : vector<1x64xf32> to vector<4x64xf32>
    %213 = arith.mulf %210, %212 : vector<4x64xf32>
    %214 = vector.extract_strided_slice %206 {offsets = [0, 56], sizes = [4, 8], strides = [1, 1]} : vector<4x64xf32> to vector<4x8xf32>
    %215 = vector.extract_strided_slice %206 {offsets = [0, 0], sizes = [4, 56], strides = [1, 1]} : vector<4x64xf32> to vector<4x56xf32>
    %216 = tpu.concatenate %214, %215 in 1 : vector<4x8xf32>, vector<4x56xf32> -> vector<4x64xf32>
    %217 = vector.extract_strided_slice %3 {offsets = [1, 0], sizes = [1, 64], strides = [1, 1]} : vector<9x64xf32> to vector<1x64xf32>
    %218 = vector.broadcast %217 : vector<1x64xf32> to vector<4x64xf32>
    %219 = arith.mulf %216, %218 : vector<4x64xf32>
    %220 = vector.extract_strided_slice %206 {offsets = [0, 57], sizes = [4, 7], strides = [1, 1]} : vector<4x64xf32> to vector<4x7xf32>
    %221 = vector.extract_strided_slice %206 {offsets = [0, 0], sizes = [4, 57], strides = [1, 1]} : vector<4x64xf32> to vector<4x57xf32>
    %222 = tpu.concatenate %220, %221 in 1 : vector<4x7xf32>, vector<4x57xf32> -> vector<4x64xf32>
    %223 = vector.extract_strided_slice %3 {offsets = [2, 0], sizes = [1, 64], strides = [1, 1]} : vector<9x64xf32> to vector<1x64xf32>
    %224 = vector.broadcast %223 : vector<1x64xf32> to vector<4x64xf32>
    %225 = arith.mulf %222, %224 : vector<4x64xf32>
    %226 = vector.extract_strided_slice %206 {offsets = [0, 63], sizes = [4, 1], strides = [1, 1]} : vector<4x64xf32> to vector<4x1xf32>
    %227 = vector.extract_strided_slice %206 {offsets = [0, 0], sizes = [4, 63], strides = [1, 1]} : vector<4x64xf32> to vector<4x63xf32>
    %228 = tpu.concatenate %226, %227 in 1 : vector<4x1xf32>, vector<4x63xf32> -> vector<4x64xf32>
    %229 = vector.extract_strided_slice %3 {offsets = [3, 0], sizes = [1, 64], strides = [1, 1]} : vector<9x64xf32> to vector<1x64xf32>
    %230 = vector.broadcast %229 : vector<1x64xf32> to vector<4x64xf32>
    %231 = arith.mulf %228, %230 : vector<4x64xf32>
    %232 = vector.extract_strided_slice %206 {offsets = [0, 1], sizes = [4, 63], strides = [1, 1]} : vector<4x64xf32> to vector<4x63xf32>
    %233 = vector.extract_strided_slice %206 {offsets = [0, 0], sizes = [4, 1], strides = [1, 1]} : vector<4x64xf32> to vector<4x1xf32>
    %234 = tpu.concatenate %232, %233 in 1 : vector<4x63xf32>, vector<4x1xf32> -> vector<4x64xf32>
    %235 = vector.extract_strided_slice %3 {offsets = [5, 0], sizes = [1, 64], strides = [1, 1]} : vector<9x64xf32> to vector<1x64xf32>
    %236 = vector.broadcast %235 : vector<1x64xf32> to vector<4x64xf32>
    %237 = arith.mulf %234, %236 : vector<4x64xf32>
    %238 = vector.extract_strided_slice %206 {offsets = [0, 7], sizes = [4, 57], strides = [1, 1]} : vector<4x64xf32> to vector<4x57xf32>
    %239 = vector.extract_strided_slice %206 {offsets = [0, 0], sizes = [4, 7], strides = [1, 1]} : vector<4x64xf32> to vector<4x7xf32>
    %240 = tpu.concatenate %238, %239 in 1 : vector<4x57xf32>, vector<4x7xf32> -> vector<4x64xf32>
    %241 = vector.extract_strided_slice %3 {offsets = [6, 0], sizes = [1, 64], strides = [1, 1]} : vector<9x64xf32> to vector<1x64xf32>
    %242 = vector.broadcast %241 : vector<1x64xf32> to vector<4x64xf32>
    %243 = arith.mulf %240, %242 : vector<4x64xf32>
    %244 = vector.extract_strided_slice %206 {offsets = [0, 8], sizes = [4, 56], strides = [1, 1]} : vector<4x64xf32> to vector<4x56xf32>
    %245 = vector.extract_strided_slice %206 {offsets = [0, 0], sizes = [4, 8], strides = [1, 1]} : vector<4x64xf32> to vector<4x8xf32>
    %246 = tpu.concatenate %244, %245 in 1 : vector<4x56xf32>, vector<4x8xf32> -> vector<4x64xf32>
    %247 = vector.extract_strided_slice %3 {offsets = [7, 0], sizes = [1, 64], strides = [1, 1]} : vector<9x64xf32> to vector<1x64xf32>
    %248 = vector.broadcast %247 : vector<1x64xf32> to vector<4x64xf32>
    %249 = arith.mulf %246, %248 : vector<4x64xf32>
    %250 = vector.extract_strided_slice %206 {offsets = [0, 9], sizes = [4, 55], strides = [1, 1]} : vector<4x64xf32> to vector<4x55xf32>
    %251 = vector.extract_strided_slice %206 {offsets = [0, 0], sizes = [4, 9], strides = [1, 1]} : vector<4x64xf32> to vector<4x9xf32>
    %252 = tpu.concatenate %250, %251 in 1 : vector<4x55xf32>, vector<4x9xf32> -> vector<4x64xf32>
    %253 = vector.extract_strided_slice %3 {offsets = [8, 0], sizes = [1, 64], strides = [1, 1]} : vector<9x64xf32> to vector<1x64xf32>
    %254 = vector.broadcast %253 : vector<1x64xf32> to vector<4x64xf32>
    %255 = arith.mulf %252, %254 : vector<4x64xf32>
    %cst_64 = arith.constant 1.000000e+00 : f32
    %256 = vector.broadcast %cst_64 : f32 to vector<1x64xf32>
    %257 = tpu.concatenate %213, %219, %225, %231, %206, %237, %243, %249, %255, %256 in 0 : vector<4x64xf32>, vector<4x64xf32>, vector<4x64xf32>, vector<4x64xf32>, vector<4x64xf32>, vector<4x64xf32>, vector<4x64xf32>, vector<4x64xf32>, vector<4x64xf32>, vector<1x64xf32> -> vector<37x64xf32>
    %c0_65 = arith.constant 0 : index
    %c0_66 = arith.constant 0 : index
    %258 = vector.load %arg16[%c0_65, %c0_66] : memref<4x37xf32, #tpu.memory_space<vmem>>, vector<4x37xf32>
    %cst_67 = arith.constant dense<0.000000e+00> : vector<4x64xf32>
    %259 = tpu.matmul %258, %257, %cst_67 {dimension_numbers = #tpu.dot_dimension_numbers<[1], [0], [0], [1], [0, 0, 1, 1], [], []>} : vector<4x37xf32>, vector<37x64xf32>, vector<4x64xf32> -> vector<4x64xf32>
    %260 = arith.addf %259, %207 : vector<4x64xf32>
    %cst_68 = arith.constant 1.000000e-01 : f32
    %261 = vector.broadcast %cst_68 : f32 to vector<4x64xf32>
    %262 = arith.mulf %261, %260 : vector<4x64xf32>
    %263 = arith.maximumf %260, %262 : vector<4x64xf32>
    %264 = vector.extract_strided_slice %263 {offsets = [0, 55], sizes = [4, 9], strides = [1, 1]} : vector<4x64xf32> to vector<4x9xf32>
    %265 = vector.extract_strided_slice %263 {offsets = [0, 0], sizes = [4, 55], strides = [1, 1]} : vector<4x64xf32> to vector<4x55xf32>
    %266 = tpu.concatenate %264, %265 in 1 : vector<4x9xf32>, vector<4x55xf32> -> vector<4x64xf32>
    %267 = vector.extract_strided_slice %3 {offsets = [0, 0], sizes = [1, 64], strides = [1, 1]} : vector<9x64xf32> to vector<1x64xf32>
    %268 = vector.broadcast %267 : vector<1x64xf32> to vector<4x64xf32>
    %269 = arith.mulf %266, %268 : vector<4x64xf32>
    %270 = vector.extract_strided_slice %263 {offsets = [0, 56], sizes = [4, 8], strides = [1, 1]} : vector<4x64xf32> to vector<4x8xf32>
    %271 = vector.extract_strided_slice %263 {offsets = [0, 0], sizes = [4, 56], strides = [1, 1]} : vector<4x64xf32> to vector<4x56xf32>
    %272 = tpu.concatenate %270, %271 in 1 : vector<4x8xf32>, vector<4x56xf32> -> vector<4x64xf32>
    %273 = vector.extract_strided_slice %3 {offsets = [1, 0], sizes = [1, 64], strides = [1, 1]} : vector<9x64xf32> to vector<1x64xf32>
    %274 = vector.broadcast %273 : vector<1x64xf32> to vector<4x64xf32>
    %275 = arith.mulf %272, %274 : vector<4x64xf32>
    %276 = vector.extract_strided_slice %263 {offsets = [0, 57], sizes = [4, 7], strides = [1, 1]} : vector<4x64xf32> to vector<4x7xf32>
    %277 = vector.extract_strided_slice %263 {offsets = [0, 0], sizes = [4, 57], strides = [1, 1]} : vector<4x64xf32> to vector<4x57xf32>
    %278 = tpu.concatenate %276, %277 in 1 : vector<4x7xf32>, vector<4x57xf32> -> vector<4x64xf32>
    %279 = vector.extract_strided_slice %3 {offsets = [2, 0], sizes = [1, 64], strides = [1, 1]} : vector<9x64xf32> to vector<1x64xf32>
    %280 = vector.broadcast %279 : vector<1x64xf32> to vector<4x64xf32>
    %281 = arith.mulf %278, %280 : vector<4x64xf32>
    %282 = vector.extract_strided_slice %263 {offsets = [0, 63], sizes = [4, 1], strides = [1, 1]} : vector<4x64xf32> to vector<4x1xf32>
    %283 = vector.extract_strided_slice %263 {offsets = [0, 0], sizes = [4, 63], strides = [1, 1]} : vector<4x64xf32> to vector<4x63xf32>
    %284 = tpu.concatenate %282, %283 in 1 : vector<4x1xf32>, vector<4x63xf32> -> vector<4x64xf32>
    %285 = vector.extract_strided_slice %3 {offsets = [3, 0], sizes = [1, 64], strides = [1, 1]} : vector<9x64xf32> to vector<1x64xf32>
    %286 = vector.broadcast %285 : vector<1x64xf32> to vector<4x64xf32>
    %287 = arith.mulf %284, %286 : vector<4x64xf32>
    %288 = vector.extract_strided_slice %263 {offsets = [0, 1], sizes = [4, 63], strides = [1, 1]} : vector<4x64xf32> to vector<4x63xf32>
    %289 = vector.extract_strided_slice %263 {offsets = [0, 0], sizes = [4, 1], strides = [1, 1]} : vector<4x64xf32> to vector<4x1xf32>
    %290 = tpu.concatenate %288, %289 in 1 : vector<4x63xf32>, vector<4x1xf32> -> vector<4x64xf32>
    %291 = vector.extract_strided_slice %3 {offsets = [5, 0], sizes = [1, 64], strides = [1, 1]} : vector<9x64xf32> to vector<1x64xf32>
    %292 = vector.broadcast %291 : vector<1x64xf32> to vector<4x64xf32>
    %293 = arith.mulf %290, %292 : vector<4x64xf32>
    %294 = vector.extract_strided_slice %263 {offsets = [0, 7], sizes = [4, 57], strides = [1, 1]} : vector<4x64xf32> to vector<4x57xf32>
    %295 = vector.extract_strided_slice %263 {offsets = [0, 0], sizes = [4, 7], strides = [1, 1]} : vector<4x64xf32> to vector<4x7xf32>
    %296 = tpu.concatenate %294, %295 in 1 : vector<4x57xf32>, vector<4x7xf32> -> vector<4x64xf32>
    %297 = vector.extract_strided_slice %3 {offsets = [6, 0], sizes = [1, 64], strides = [1, 1]} : vector<9x64xf32> to vector<1x64xf32>
    %298 = vector.broadcast %297 : vector<1x64xf32> to vector<4x64xf32>
    %299 = arith.mulf %296, %298 : vector<4x64xf32>
    %300 = vector.extract_strided_slice %263 {offsets = [0, 8], sizes = [4, 56], strides = [1, 1]} : vector<4x64xf32> to vector<4x56xf32>
    %301 = vector.extract_strided_slice %263 {offsets = [0, 0], sizes = [4, 8], strides = [1, 1]} : vector<4x64xf32> to vector<4x8xf32>
    %302 = tpu.concatenate %300, %301 in 1 : vector<4x56xf32>, vector<4x8xf32> -> vector<4x64xf32>
    %303 = vector.extract_strided_slice %3 {offsets = [7, 0], sizes = [1, 64], strides = [1, 1]} : vector<9x64xf32> to vector<1x64xf32>
    %304 = vector.broadcast %303 : vector<1x64xf32> to vector<4x64xf32>
    %305 = arith.mulf %302, %304 : vector<4x64xf32>
    %306 = vector.extract_strided_slice %263 {offsets = [0, 9], sizes = [4, 55], strides = [1, 1]} : vector<4x64xf32> to vector<4x55xf32>
    %307 = vector.extract_strided_slice %263 {offsets = [0, 0], sizes = [4, 9], strides = [1, 1]} : vector<4x64xf32> to vector<4x9xf32>
    %308 = tpu.concatenate %306, %307 in 1 : vector<4x55xf32>, vector<4x9xf32> -> vector<4x64xf32>
    %309 = vector.extract_strided_slice %3 {offsets = [8, 0], sizes = [1, 64], strides = [1, 1]} : vector<9x64xf32> to vector<1x64xf32>
    %310 = vector.broadcast %309 : vector<1x64xf32> to vector<4x64xf32>
    %311 = arith.mulf %308, %310 : vector<4x64xf32>
    %cst_69 = arith.constant 1.000000e+00 : f32
    %312 = vector.broadcast %cst_69 : f32 to vector<1x64xf32>
    %313 = tpu.concatenate %269, %275, %281, %287, %263, %293, %299, %305, %311, %312 in 0 : vector<4x64xf32>, vector<4x64xf32>, vector<4x64xf32>, vector<4x64xf32>, vector<4x64xf32>, vector<4x64xf32>, vector<4x64xf32>, vector<4x64xf32>, vector<4x64xf32>, vector<1x64xf32> -> vector<37x64xf32>
    %c0_70 = arith.constant 0 : index
    %c0_71 = arith.constant 0 : index
    %314 = vector.load %arg17[%c0_70, %c0_71] : memref<16x37xf32, #tpu.memory_space<vmem>>, vector<16x37xf32>
    %cst_72 = arith.constant dense<0.000000e+00> : vector<16x64xf32>
    %315 = tpu.matmul %314, %313, %cst_72 {dimension_numbers = #tpu.dot_dimension_numbers<[1], [0], [0], [1], [0, 0, 1, 1], [], []>} : vector<16x37xf32>, vector<37x64xf32>, vector<16x64xf32> -> vector<16x64xf32>
    %316 = arith.truncf %315 : vector<16x64xf32> to vector<16x64xbf16>
    %c0_73 = arith.constant 0 : index
    %c0_74 = arith.constant 0 : index
    %317 = vector.load %arg10[%c0_73, %c0_74] : memref<64x16xbf16, #tpu.memory_space<vmem>>, vector<64x16xbf16>
    %cst_75 = arith.constant dense<0.000000e+00> : vector<16x16xf32>
    %318 = tpu.matmul %316, %317, %cst_75 {dimension_numbers = #tpu.dot_dimension_numbers<[1], [0], [0], [1], [0, 0, 1, 1], [], []>} : vector<16x64xbf16>, vector<64x16xbf16>, vector<16x16xf32> -> vector<16x16xf32>
    %319 = vector.extract_strided_slice %318 {offsets = [0, 0], sizes = [8, 16], strides = [1, 1]} : vector<16x16xf32> to vector<8x16xf32>
    %cst_76 = arith.constant 1.000000e-01 : f32
    %320 = vector.broadcast %cst_76 : f32 to vector<8x16xf32>
    %321 = arith.mulf %320, %319 : vector<8x16xf32>
    %322 = arith.maximumf %319, %321 : vector<8x16xf32>
    %323 = vector.extract_strided_slice %318 {offsets = [8, 0], sizes = [8, 16], strides = [1, 1]} : vector<16x16xf32> to vector<8x16xf32>
    %324 = vector.extract_strided_slice %322 {offsets = [0, 11], sizes = [8, 5], strides = [1, 1]} : vector<8x16xf32> to vector<8x5xf32>
    %325 = vector.extract_strided_slice %322 {offsets = [0, 0], sizes = [8, 11], strides = [1, 1]} : vector<8x16xf32> to vector<8x11xf32>
    %326 = tpu.concatenate %324, %325 in 1 : vector<8x5xf32>, vector<8x11xf32> -> vector<8x16xf32>
    %327 = vector.extract_strided_slice %4 {offsets = [0, 0], sizes = [1, 16], strides = [1, 1]} : vector<9x16xf32> to vector<1x16xf32>
    %328 = vector.broadcast %327 : vector<1x16xf32> to vector<8x16xf32>
    %329 = arith.mulf %326, %328 : vector<8x16xf32>
    %330 = vector.extract_strided_slice %322 {offsets = [0, 12], sizes = [8, 4], strides = [1, 1]} : vector<8x16xf32> to vector<8x4xf32>
    %331 = vector.extract_strided_slice %322 {offsets = [0, 0], sizes = [8, 12], strides = [1, 1]} : vector<8x16xf32> to vector<8x12xf32>
    %332 = tpu.concatenate %330, %331 in 1 : vector<8x4xf32>, vector<8x12xf32> -> vector<8x16xf32>
    %333 = vector.extract_strided_slice %4 {offsets = [1, 0], sizes = [1, 16], strides = [1, 1]} : vector<9x16xf32> to vector<1x16xf32>
    %334 = vector.broadcast %333 : vector<1x16xf32> to vector<8x16xf32>
    %335 = arith.mulf %332, %334 : vector<8x16xf32>
    %336 = vector.extract_strided_slice %322 {offsets = [0, 13], sizes = [8, 3], strides = [1, 1]} : vector<8x16xf32> to vector<8x3xf32>
    %337 = vector.extract_strided_slice %322 {offsets = [0, 0], sizes = [8, 13], strides = [1, 1]} : vector<8x16xf32> to vector<8x13xf32>
    %338 = tpu.concatenate %336, %337 in 1 : vector<8x3xf32>, vector<8x13xf32> -> vector<8x16xf32>
    %339 = vector.extract_strided_slice %4 {offsets = [2, 0], sizes = [1, 16], strides = [1, 1]} : vector<9x16xf32> to vector<1x16xf32>
    %340 = vector.broadcast %339 : vector<1x16xf32> to vector<8x16xf32>
    %341 = arith.mulf %338, %340 : vector<8x16xf32>
    %342 = vector.extract_strided_slice %322 {offsets = [0, 15], sizes = [8, 1], strides = [1, 1]} : vector<8x16xf32> to vector<8x1xf32>
    %343 = vector.extract_strided_slice %322 {offsets = [0, 0], sizes = [8, 15], strides = [1, 1]} : vector<8x16xf32> to vector<8x15xf32>
    %344 = tpu.concatenate %342, %343 in 1 : vector<8x1xf32>, vector<8x15xf32> -> vector<8x16xf32>
    %345 = vector.extract_strided_slice %4 {offsets = [3, 0], sizes = [1, 16], strides = [1, 1]} : vector<9x16xf32> to vector<1x16xf32>
    %346 = vector.broadcast %345 : vector<1x16xf32> to vector<8x16xf32>
    %347 = arith.mulf %344, %346 : vector<8x16xf32>
    %348 = vector.extract_strided_slice %322 {offsets = [0, 1], sizes = [8, 15], strides = [1, 1]} : vector<8x16xf32> to vector<8x15xf32>
    %349 = vector.extract_strided_slice %322 {offsets = [0, 0], sizes = [8, 1], strides = [1, 1]} : vector<8x16xf32> to vector<8x1xf32>
    %350 = tpu.concatenate %348, %349 in 1 : vector<8x15xf32>, vector<8x1xf32> -> vector<8x16xf32>
    %351 = vector.extract_strided_slice %4 {offsets = [5, 0], sizes = [1, 16], strides = [1, 1]} : vector<9x16xf32> to vector<1x16xf32>
    %352 = vector.broadcast %351 : vector<1x16xf32> to vector<8x16xf32>
    %353 = arith.mulf %350, %352 : vector<8x16xf32>
    %354 = vector.extract_strided_slice %322 {offsets = [0, 3], sizes = [8, 13], strides = [1, 1]} : vector<8x16xf32> to vector<8x13xf32>
    %355 = vector.extract_strided_slice %322 {offsets = [0, 0], sizes = [8, 3], strides = [1, 1]} : vector<8x16xf32> to vector<8x3xf32>
    %356 = tpu.concatenate %354, %355 in 1 : vector<8x13xf32>, vector<8x3xf32> -> vector<8x16xf32>
    %357 = vector.extract_strided_slice %4 {offsets = [6, 0], sizes = [1, 16], strides = [1, 1]} : vector<9x16xf32> to vector<1x16xf32>
    %358 = vector.broadcast %357 : vector<1x16xf32> to vector<8x16xf32>
    %359 = arith.mulf %356, %358 : vector<8x16xf32>
    %360 = vector.extract_strided_slice %322 {offsets = [0, 4], sizes = [8, 12], strides = [1, 1]} : vector<8x16xf32> to vector<8x12xf32>
    %361 = vector.extract_strided_slice %322 {offsets = [0, 0], sizes = [8, 4], strides = [1, 1]} : vector<8x16xf32> to vector<8x4xf32>
    %362 = tpu.concatenate %360, %361 in 1 : vector<8x12xf32>, vector<8x4xf32> -> vector<8x16xf32>
    %363 = vector.extract_strided_slice %4 {offsets = [7, 0], sizes = [1, 16], strides = [1, 1]} : vector<9x16xf32> to vector<1x16xf32>
    %364 = vector.broadcast %363 : vector<1x16xf32> to vector<8x16xf32>
    %365 = arith.mulf %362, %364 : vector<8x16xf32>
    %366 = vector.extract_strided_slice %322 {offsets = [0, 5], sizes = [8, 11], strides = [1, 1]} : vector<8x16xf32> to vector<8x11xf32>
    %367 = vector.extract_strided_slice %322 {offsets = [0, 0], sizes = [8, 5], strides = [1, 1]} : vector<8x16xf32> to vector<8x5xf32>
    %368 = tpu.concatenate %366, %367 in 1 : vector<8x11xf32>, vector<8x5xf32> -> vector<8x16xf32>
    %369 = vector.extract_strided_slice %4 {offsets = [8, 0], sizes = [1, 16], strides = [1, 1]} : vector<9x16xf32> to vector<1x16xf32>
    %370 = vector.broadcast %369 : vector<1x16xf32> to vector<8x16xf32>
    %371 = arith.mulf %368, %370 : vector<8x16xf32>
    %cst_77 = arith.constant 1.000000e+00 : f32
    %372 = vector.broadcast %cst_77 : f32 to vector<1x16xf32>
    %373 = tpu.concatenate %329, %335, %341, %347, %322, %353, %359, %365, %371, %372 in 0 : vector<8x16xf32>, vector<8x16xf32>, vector<8x16xf32>, vector<8x16xf32>, vector<8x16xf32>, vector<8x16xf32>, vector<8x16xf32>, vector<8x16xf32>, vector<8x16xf32>, vector<1x16xf32> -> vector<73x16xf32>
    %c0_78 = arith.constant 0 : index
    %c0_79 = arith.constant 0 : index
    %374 = vector.load %arg18[%c0_78, %c0_79] : memref<8x73xf32, #tpu.memory_space<vmem>>, vector<8x73xf32>
    %cst_80 = arith.constant dense<0.000000e+00> : vector<8x16xf32>
    %375 = tpu.matmul %374, %373, %cst_80 {dimension_numbers = #tpu.dot_dimension_numbers<[1], [0], [0], [1], [0, 0, 1, 1], [], []>} : vector<8x73xf32>, vector<73x16xf32>, vector<8x16xf32> -> vector<8x16xf32>
    %376 = arith.addf %375, %323 : vector<8x16xf32>
    %cst_81 = arith.constant 1.000000e-01 : f32
    %377 = vector.broadcast %cst_81 : f32 to vector<8x16xf32>
    %378 = arith.mulf %377, %376 : vector<8x16xf32>
    %379 = arith.maximumf %376, %378 : vector<8x16xf32>
    %c0_82 = arith.constant 0 : index
    %c0_83 = arith.constant 0 : index
    %c0_84 = arith.constant 0 : index
    %380 = vector.load %arg2[%c0_82, %c0_83, %c0_84] : memref<1x8x16xf32, #tpu.memory_space<vmem>>, vector<1x8x16xf32>
    %381 = vector.shape_cast %380 : vector<1x8x16xf32> to vector<8x16xf32>
    %382 = vector.extract_strided_slice %381 {offsets = [0, 11], sizes = [8, 5], strides = [1, 1]} : vector<8x16xf32> to vector<8x5xf32>
    %383 = vector.extract_strided_slice %381 {offsets = [0, 0], sizes = [8, 11], strides = [1, 1]} : vector<8x16xf32> to vector<8x11xf32>
    %384 = tpu.concatenate %382, %383 in 1 : vector<8x5xf32>, vector<8x11xf32> -> vector<8x16xf32>
    %385 = vector.extract_strided_slice %4 {offsets = [0, 0], sizes = [1, 16], strides = [1, 1]} : vector<9x16xf32> to vector<1x16xf32>
    %386 = vector.broadcast %385 : vector<1x16xf32> to vector<8x16xf32>
    %387 = arith.mulf %384, %386 : vector<8x16xf32>
    %388 = vector.extract_strided_slice %381 {offsets = [0, 12], sizes = [8, 4], strides = [1, 1]} : vector<8x16xf32> to vector<8x4xf32>
    %389 = vector.extract_strided_slice %381 {offsets = [0, 0], sizes = [8, 12], strides = [1, 1]} : vector<8x16xf32> to vector<8x12xf32>
    %390 = tpu.concatenate %388, %389 in 1 : vector<8x4xf32>, vector<8x12xf32> -> vector<8x16xf32>
    %391 = vector.extract_strided_slice %4 {offsets = [1, 0], sizes = [1, 16], strides = [1, 1]} : vector<9x16xf32> to vector<1x16xf32>
    %392 = vector.broadcast %391 : vector<1x16xf32> to vector<8x16xf32>
    %393 = arith.mulf %390, %392 : vector<8x16xf32>
    %394 = vector.extract_strided_slice %381 {offsets = [0, 13], sizes = [8, 3], strides = [1, 1]} : vector<8x16xf32> to vector<8x3xf32>
    %395 = vector.extract_strided_slice %381 {offsets = [0, 0], sizes = [8, 13], strides = [1, 1]} : vector<8x16xf32> to vector<8x13xf32>
    %396 = tpu.concatenate %394, %395 in 1 : vector<8x3xf32>, vector<8x13xf32> -> vector<8x16xf32>
    %397 = vector.extract_strided_slice %4 {offsets = [2, 0], sizes = [1, 16], strides = [1, 1]} : vector<9x16xf32> to vector<1x16xf32>
    %398 = vector.broadcast %397 : vector<1x16xf32> to vector<8x16xf32>
    %399 = arith.mulf %396, %398 : vector<8x16xf32>
    %400 = vector.extract_strided_slice %381 {offsets = [0, 15], sizes = [8, 1], strides = [1, 1]} : vector<8x16xf32> to vector<8x1xf32>
    %401 = vector.extract_strided_slice %381 {offsets = [0, 0], sizes = [8, 15], strides = [1, 1]} : vector<8x16xf32> to vector<8x15xf32>
    %402 = tpu.concatenate %400, %401 in 1 : vector<8x1xf32>, vector<8x15xf32> -> vector<8x16xf32>
    %403 = vector.extract_strided_slice %4 {offsets = [3, 0], sizes = [1, 16], strides = [1, 1]} : vector<9x16xf32> to vector<1x16xf32>
    %404 = vector.broadcast %403 : vector<1x16xf32> to vector<8x16xf32>
    %405 = arith.mulf %402, %404 : vector<8x16xf32>
    %406 = vector.extract_strided_slice %381 {offsets = [0, 1], sizes = [8, 15], strides = [1, 1]} : vector<8x16xf32> to vector<8x15xf32>
    %407 = vector.extract_strided_slice %381 {offsets = [0, 0], sizes = [8, 1], strides = [1, 1]} : vector<8x16xf32> to vector<8x1xf32>
    %408 = tpu.concatenate %406, %407 in 1 : vector<8x15xf32>, vector<8x1xf32> -> vector<8x16xf32>
    %409 = vector.extract_strided_slice %4 {offsets = [5, 0], sizes = [1, 16], strides = [1, 1]} : vector<9x16xf32> to vector<1x16xf32>
    %410 = vector.broadcast %409 : vector<1x16xf32> to vector<8x16xf32>
    %411 = arith.mulf %408, %410 : vector<8x16xf32>
    %412 = vector.extract_strided_slice %381 {offsets = [0, 3], sizes = [8, 13], strides = [1, 1]} : vector<8x16xf32> to vector<8x13xf32>
    %413 = vector.extract_strided_slice %381 {offsets = [0, 0], sizes = [8, 3], strides = [1, 1]} : vector<8x16xf32> to vector<8x3xf32>
    %414 = tpu.concatenate %412, %413 in 1 : vector<8x13xf32>, vector<8x3xf32> -> vector<8x16xf32>
    %415 = vector.extract_strided_slice %4 {offsets = [6, 0], sizes = [1, 16], strides = [1, 1]} : vector<9x16xf32> to vector<1x16xf32>
    %416 = vector.broadcast %415 : vector<1x16xf32> to vector<8x16xf32>
    %417 = arith.mulf %414, %416 : vector<8x16xf32>
    %418 = vector.extract_strided_slice %381 {offsets = [0, 4], sizes = [8, 12], strides = [1, 1]} : vector<8x16xf32> to vector<8x12xf32>
    %419 = vector.extract_strided_slice %381 {offsets = [0, 0], sizes = [8, 4], strides = [1, 1]} : vector<8x16xf32> to vector<8x4xf32>
    %420 = tpu.concatenate %418, %419 in 1 : vector<8x12xf32>, vector<8x4xf32> -> vector<8x16xf32>
    %421 = vector.extract_strided_slice %4 {offsets = [7, 0], sizes = [1, 16], strides = [1, 1]} : vector<9x16xf32> to vector<1x16xf32>
    %422 = vector.broadcast %421 : vector<1x16xf32> to vector<8x16xf32>
    %423 = arith.mulf %420, %422 : vector<8x16xf32>
    %424 = vector.extract_strided_slice %381 {offsets = [0, 5], sizes = [8, 11], strides = [1, 1]} : vector<8x16xf32> to vector<8x11xf32>
    %425 = vector.extract_strided_slice %381 {offsets = [0, 0], sizes = [8, 5], strides = [1, 1]} : vector<8x16xf32> to vector<8x5xf32>
    %426 = tpu.concatenate %424, %425 in 1 : vector<8x11xf32>, vector<8x5xf32> -> vector<8x16xf32>
    %427 = vector.extract_strided_slice %4 {offsets = [8, 0], sizes = [1, 16], strides = [1, 1]} : vector<9x16xf32> to vector<1x16xf32>
    %428 = vector.broadcast %427 : vector<1x16xf32> to vector<8x16xf32>
    %429 = arith.mulf %426, %428 : vector<8x16xf32>
    %430 = tpu.concatenate %387, %393, %399, %405, %381, %411, %417, %423, %429 in 0 : vector<8x16xf32>, vector<8x16xf32>, vector<8x16xf32>, vector<8x16xf32>, vector<8x16xf32>, vector<8x16xf32>, vector<8x16xf32>, vector<8x16xf32>, vector<8x16xf32> -> vector<72x16xf32>
    %c0_85 = arith.constant 0 : index
    %c0_86 = arith.constant 0 : index
    %431 = vector.load %arg19[%c0_85, %c0_86] : memref<8x72xf32, #tpu.memory_space<vmem>>, vector<8x72xf32>
    %cst_87 = arith.constant dense<0.000000e+00> : vector<8x16xf32>
    %432 = tpu.matmul %431, %430, %cst_87 {dimension_numbers = #tpu.dot_dimension_numbers<[1], [0], [0], [1], [0, 0, 1, 1], [], []>} : vector<8x72xf32>, vector<72x16xf32>, vector<8x16xf32> -> vector<8x16xf32>
    %433 = arith.negf %379 : vector<8x16xf32>
    %434 = math.exp %433 : vector<8x16xf32>
    %cst_88 = arith.constant 1.000000e+00 : f32
    %435 = vector.broadcast %cst_88 : f32 to vector<8x16xf32>
    %436 = arith.addf %435, %434 : vector<8x16xf32>
    %437 = arith.divf %435, %436 : vector<8x16xf32>
    %438 = arith.mulf %432, %437 : vector<8x16xf32>
    %439 = arith.addf %438, %381 : vector<8x16xf32>
    %c0_89 = arith.constant 0 : index
    %c0_90 = arith.constant 0 : index
    %c0_91 = arith.constant 0 : index
    %440 = vector.load %arg20[%c0_89, %c0_90, %c0_91] : memref<1x8x16xf32, #tpu.memory_space<vmem>>, vector<1x8x16xf32>
    %441 = vector.shape_cast %440 : vector<1x8x16xf32> to vector<8x16xf32>
    %442 = vector.shape_cast %439 : vector<8x16xf32> to vector<1x8x16xf32>
    tpu.vector_store %arg20[%c0_89, %c0_90, %c0_91], %442 {strides = array<i32>} : memref<1x8x16xf32, #tpu.memory_space<vmem>>, vector<1x8x16xf32>,
    return
  }
  func.func @transform_0(%arg0: i32) -> (i32, i32, i32) {
    %c0_i32 = arith.constant 0 : i32
    %c0_i32_0 = arith.constant 0 : i32
    %c0_i32_1 = arith.constant 0 : i32
    return %arg0, %c0_i32, %c0_i32_0 : i32, i32, i32
  }
  func.func @transform_1(%arg0: i32) -> (i32, i32, i32) {
    %c0_i32 = arith.constant 0 : i32
    %c0_i32_0 = arith.constant 0 : i32
    %c0_i32_1 = arith.constant 0 : i32
    return %arg0, %c0_i32, %c0_i32_0 : i32, i32, i32
  }
  func.func @transform_2(%arg0: i32) -> (i32, i32) {
    %c0_i32 = arith.constant 0 : i32
    %c0_i32_0 = arith.constant 0 : i32
    %c0_i32_1 = arith.constant 0 : i32
    return %c0_i32, %c0_i32_0 : i32, i32
  }
  func.func @transform_3(%arg0: i32) -> (i32, i32) {
    %c0_i32 = arith.constant 0 : i32
    %c0_i32_0 = arith.constant 0 : i32
    %c0_i32_1 = arith.constant 0 : i32
    return %c0_i32, %c0_i32_0 : i32, i32
  }
  func.func @transform_4(%arg0: i32) -> (i32, i32) {
    %c0_i32 = arith.constant 0 : i32
    %c0_i32_0 = arith.constant 0 : i32
    %c0_i32_1 = arith.constant 0 : i32
    return %c0_i32, %c0_i32_0 : i32, i32
  }
  func.func @transform_5(%arg0: i32) -> (i32, i32) {
    %c0_i32 = arith.constant 0 : i32
    %c0_i32_0 = arith.constant 0 : i32
    %c0_i32_1 = arith.constant 0 : i32
    return %c0_i32, %c0_i32_0 : i32, i32
  }
  func.func @transform_6(%arg0: i32) -> (i32, i32) {
    %c0_i32 = arith.constant 0 : i32
    %c0_i32_0 = arith.constant 0 : i32
    %c0_i32_1 = arith.constant 0 : i32
    return %c0_i32, %c0_i32_0 : i32, i32
  }
  func.func @transform_7(%arg0: i32) -> (i32, i32) {
    %c0_i32 = arith.constant 0 : i32
    %c0_i32_0 = arith.constant 0 : i32
    %c0_i32_1 = arith.constant 0 : i32
    return %c0_i32, %c0_i32_0 : i32, i32
  }
  func.func @transform_8(%arg0: i32) -> (i32, i32) {
    %c0_i32 = arith.constant 0 : i32
    %c0_i32_0 = arith.constant 0 : i32
    %c0_i32_1 = arith.constant 0 : i32
    return %c0_i32, %c0_i32_0 : i32, i32
  }
  func.func @transform_9(%arg0: i32) -> (i32, i32) {
    %c0_i32 = arith.constant 0 : i32
    %c0_i32_0 = arith.constant 0 : i32
    %c0_i32_1 = arith.constant 0 : i32
    return %c0_i32, %c0_i32_0 : i32, i32
  }
  func.func @transform_10(%arg0: i32) -> (i32, i32) {
    %c0_i32 = arith.constant 0 : i32
    %c0_i32_0 = arith.constant 0 : i32
    %c0_i32_1 = arith.constant 0 : i32
    return %c0_i32, %c0_i32_0 : i32, i32
  }
  func.func @transform_11(%arg0: i32) -> (i32, i32) {
    %c0_i32 = arith.constant 0 : i32
    %c0_i32_0 = arith.constant 0 : i32
    %c0_i32_1 = arith.constant 0 : i32
    return %c0_i32, %c0_i32_0 : i32, i32
  }
  func.func @transform_12(%arg0: i32) -> (i32, i32) {
    %c0_i32 = arith.constant 0 : i32
    %c0_i32_0 = arith.constant 0 : i32
    %c0_i32_1 = arith.constant 0 : i32
    return %c0_i32, %c0_i32_0 : i32, i32
  }
  func.func @transform_13(%arg0: i32) -> (i32, i32) {
    %c0_i32 = arith.constant 0 : i32
    %c0_i32_0 = arith.constant 0 : i32
    %c0_i32_1 = arith.constant 0 : i32
    return %c0_i32, %c0_i32_0 : i32, i32
  }
  func.func @transform_14(%arg0: i32) -> (i32, i32) {
    %c0_i32 = arith.constant 0 : i32
    %c0_i32_0 = arith.constant 0 : i32
    %c0_i32_1 = arith.constant 0 : i32
    return %c0_i32, %c0_i32_0 : i32, i32
  }
  func.func @transform_15(%arg0: i32) -> (i32, i32) {
    %c0_i32 = arith.constant 0 : i32
    %c0_i32_0 = arith.constant 0 : i32
    %c0_i32_1 = arith.constant 0 : i32
    return %c0_i32, %c0_i32_0 : i32, i32
  }
  func.func @transform_16(%arg0: i32) -> (i32, i32) {
    %c0_i32 = arith.constant 0 : i32
    %c0_i32_0 = arith.constant 0 : i32
    %c0_i32_1 = arith.constant 0 : i32
    return %c0_i32, %c0_i32_0 : i32, i32
  }
  func.func @transform_17(%arg0: i32) -> (i32, i32) {
    %c0_i32 = arith.constant 0 : i32
    %c0_i32_0 = arith.constant 0 : i32
    %c0_i32_1 = arith.constant 0 : i32
    return %c0_i32, %c0_i32_0 : i32, i32
  }
  func.func @transform_18(%arg0: i32) -> (i32, i32) {
    %c0_i32 = arith.constant 0 : i32
    %c0_i32_0 = arith.constant 0 : i32
    %c0_i32_1 = arith.constant 0 : i32
    return %c0_i32, %c0_i32_0 : i32, i32
  }
  func.func @transform_19(%arg0: i32) -> (i32, i32, i32) {
    %c0_i32 = arith.constant 0 : i32
    %c0_i32_0 = arith.constant 0 : i32
    %c0_i32_1 = arith.constant 0 : i32
    return %arg0, %c0_i32, %c0_i32_0 : i32, i32, i32
  }
}

</mosaic_0001>

<llo_original>
// kernel: igs_forward.1
$region0: #{igs_forward.1}
  #allocation0 [shape = 'u32[]', space=smem, size = 0x4, offset = 0x4, fixed_abs, tag = 'smem constant byte address 0x4 - core index']
  #allocation1 [shape = 'u32[144,128]{1,0:T(1,128)}', space=vmem, size = 0x12000, scoped, tag = 'internal scratch']
  %s0 = inlined_call_operand.vmem [shape: f32[2,4,1024], index: 0, kind: input, shape index: {}]
  %s1 = inlined_call_operand.vmem [shape: f32[2,8,16], index: 1, kind: input, shape index: {}]
  %s2 = inlined_call_operand.vmem [shape: f32[9,1024], index: 2, kind: input, shape index: {}]
  %s3 = inlined_call_operand.vmem [shape: f32[9,1024], index: 3, kind: input, shape index: {}]
  %s4 = inlined_call_operand.vmem [shape: f32[9,256], index: 4, kind: input, shape index: {}]
  %s5 = inlined_call_operand.vmem [shape: f32[9,64], index: 5, kind: input, shape index: {}]
  %s6 = inlined_call_operand.vmem [shape: f32[9,16], index: 6, kind: input, shape index: {}]
  %s7 = inlined_call_operand.vmem [shape: bf16[1024,256], index: 7, kind: input, shape index: {}]
  %s8 = inlined_call_operand.vmem [shape: bf16[256,64], index: 8, kind: input, shape index: {}]
  %s9 = inlined_call_operand.vmem [shape: bf16[64,16], index: 9, kind: input, shape index: {}]
  %s10 = inlined_call_operand.vmem [shape: f32[8,10], index: 10, kind: input, shape index: {}]
  %s11 = inlined_call_operand.vmem [shape: f32[4,37], index: 11, kind: input, shape index: {}]
  %s12 = inlined_call_operand.vmem [shape: f32[8,37], index: 12, kind: input, shape index: {}]
  %s13 = inlined_call_operand.vmem [shape: f32[4,37], index: 13, kind: input, shape index: {}]
  %s14 = inlined_call_operand.vmem [shape: f32[8,37], index: 14, kind: input, shape index: {}]
  %s15 = inlined_call_operand.vmem [shape: f32[4,37], index: 15, kind: input, shape index: {}]
  %s16 = inlined_call_operand.vmem [shape: f32[16,37], index: 16, kind: input, shape index: {}]
  %s17 = inlined_call_operand.vmem [shape: f32[8,73], index: 17, kind: input, shape index: {}]
  %s18 = inlined_call_operand.vmem [shape: f32[8,72], index: 18, kind: input, shape index: {}]
  %s19 = inlined_call_operand.vmem [shape: f32[2,8,16], index: 19, kind: output, shape index: {}]
  %s20 = sld [smem:[#allocation0]]
  $region109: #{igs_forward.1} parent=0
    _
  %s22 = ssub.s32 1, %s20
  %s23 = scalar_select 0, %s22, %s20
  loop: start=0, step=1, limit=4
  $region2: #{igs_forward.1} parent=0 // loop_pre_header
    _
  $region3: #{igs_forward.1} parent=0 // loop_header
    %s25 = sphi 0, %s29
    %p26 = scmp.ge.s32.totalorder %s25, 4
    %s35 = sphi 0, %s37
    %s38 = sphi 0, %s35
    %s39 = sphi 0, %s38
    %s55 = sphi 0, %s39
    %s61 = sphi 0, %s63
    %s64 = sphi 0, %s61
    %s65 = sphi 0, %s64
    %s81 = sphi 0, %s65
    %s85 = sphi 0, %s85
    %s87 = sphi 0, %s85
    %s88 = sphi 0, %s87
    %s102 = sphi 0, %s88
    %s106 = sphi 0, %s106
    %s108 = sphi 0, %s106
    %s109 = sphi 0, %s108
    %s123 = sphi 0, %s109
    %s127 = sphi 0, %s127
    %s129 = sphi 0, %s127
    %s130 = sphi 0, %s129
    %s144 = sphi 0, %s130
    %s148 = sphi 0, %s148
    %s150 = sphi 0, %s148
    %s151 = sphi 0, %s150
    %s165 = sphi 0, %s151
    %s169 = sphi 0, %s169
    %s171 = sphi 0, %s169
    %s172 = sphi 0, %s171
    %s186 = sphi 0, %s172
    %s190 = sphi 0, %s190
    %s192 = sphi 0, %s190
    %s193 = sphi 0, %s192
    %s207 = sphi 0, %s193
    %s211 = sphi 0, %s211
    %s213 = sphi 0, %s211
    %s214 = sphi 0, %s213
    %s228 = sphi 0, %s214
    %s232 = sphi 0, %s232
    %s234 = sphi 0, %s232
    %s235 = sphi 0, %s234
    %s249 = sphi 0, %s235
    %s253 = sphi 0, %s253
    %s255 = sphi 0, %s253
    %s256 = sphi 0, %s255
    %s270 = sphi 0, %s256
    %s274 = sphi 0, %s274
    %s276 = sphi 0, %s274
    %s277 = sphi 0, %s276
    %s291 = sphi 0, %s277
    %s295 = sphi 0, %s295
    %s297 = sphi 0, %s295
    %s298 = sphi 0, %s297
    %s312 = sphi 0, %s298
    %s316 = sphi 0, %s316
    %s318 = sphi 0, %s316
    %s319 = sphi 0, %s318
    %s333 = sphi 0, %s319
    %s337 = sphi 0, %s337
    %s339 = sphi 0, %s337
    %s340 = sphi 0, %s339
    %s354 = sphi 0, %s340
    %s358 = sphi 0, %s358
    %s360 = sphi 0, %s358
    %s361 = sphi 0, %s360
    %s375 = sphi 0, %s361
    %s379 = sphi 0, %s379
    %s381 = sphi 0, %s379
    %s382 = sphi 0, %s381
    %s396 = sphi 0, %s382
    %s400 = sphi 0, %s400
    %s402 = sphi 0, %s400
    %s403 = sphi 0, %s402
    %s417 = sphi 0, %s403
    %s421 = sphi 0, %s421
    %s423 = sphi 0, %s421
    %s424 = sphi 0, %s423
    %s438 = sphi 0, %s424
    %s444 = sphi 0, %s446
    %s447 = sphi 0, %s444
    %s448 = sphi 0, %s447
    %s464 = sphi 0, %s448
  $region4: #{igs_forward.1} parent=0 // loop_header_branch
    %28 = sbr.rel (%p26) target = $region8
  $region5: #{igs_forward.1} parent=0 // loop_body
    %s30 = ssub.s32 %s25, 1
    %s31 = ssub.s32 %s25, 2
    %s32 = sadd.s32 %s25, 1
    %s33 = ssub.s32 %s25, %s32
    %p34 = scmp.eq.s32.totalorder %s33, 0
    %s36 = sadd.s32 %s35, 1
    %s37 = scalar_select %p34, %s35, %s36
    %p40 = pneg %p34
    %p41 = scmp.eq.s32.totalorder %s25, 1
    %p42 = por %p40, %p41
    %p43 = scmp.ne.s32.totalorder %s35, %s38
    %p44 = scmp.eq.s32.totalorder %s25, 0
    %p45 = por %p43, %p44
    %p46 = scmp.ne.s32.totalorder %s35, %s38
    %p47 = scmp.eq.s32.totalorder %s30, 1
    %p48 = por %p46, %p47
    %p49 = scmp.ne.s32.totalorder %s38, %s39
    %p50 = scmp.eq.s32.totalorder %s30, 0
    %p51 = por %p49, %p50
    %p52 = scmp.ne.s32.totalorder %s38, %s39
    %p53 = scmp.eq.s32.totalorder %s31, 1
    %p54 = por %p52, %p53
    %p56 = scmp.ne.s32.totalorder %s39, %s55
    %p57 = scmp.eq.s32.totalorder %s31, 0
    %p58 = por %p56, %p57
    %s59 = ssub.s32 %s25, %s32
    %p60 = scmp.eq.s32.totalorder %s59, 0
    %s62 = sadd.s32 %s61, 1
    %s63 = scalar_select %p60, %s61, %s62
    %p66 = pneg %p60
    %p67 = scmp.eq.s32.totalorder %s25, 1
    %p68 = por %p66, %p67
    %p69 = scmp.ne.s32.totalorder %s61, %s64
    %p70 = scmp.eq.s32.totalorder %s25, 0
    %p71 = por %p69, %p70
    %p72 = scmp.ne.s32.totalorder %s61, %s64
    %p73 = scmp.eq.s32.totalorder %s30, 1
    %p74 = por %p72, %p73
    %p75 = scmp.ne.s32.totalorder %s64, %s65
    %p76 = scmp.eq.s32.totalorder %s30, 0
    %p77 = por %p75, %p76
    %p78 = scmp.ne.s32.totalorder %s64, %s65
    %p79 = scmp.eq.s32.totalorder %s31, 1
    %p80 = por %p78, %p79
    %p82 = scmp.ne.s32.totalorder %s65, %s81
    %p83 = scmp.eq.s32.totalorder %s31, 0
    %p84 = por %p82, %p83
    %s86 = sadd.s32 %s85, 1
    %p89 = scmp.eq.s32.totalorder %s25, 1
    %p90 = scmp.ne.s32.totalorder %s85, %s87
    %p91 = scmp.eq.s32.totalorder %s25, 0
    %p92 = por %p90, %p91
    %p93 = scmp.ne.s32.totalorder %s85, %s87
    %p94 = scmp.eq.s32.totalorder %s30, 1
    %p95 = por %p93, %p94
    %p96 = scmp.ne.s32.totalorder %s87, %s88
    %p97 = scmp.eq.s32.totalorder %s30, 0
    %p98 = por %p96, %p97
    %p99 = scmp.ne.s32.totalorder %s87, %s88
    %p100 = scmp.eq.s32.totalorder %s31, 1
    %p101 = por %p99, %p100
    %p103 = scmp.ne.s32.totalorder %s88, %s102
    %p104 = scmp.eq.s32.totalorder %s31, 0
    %p105 = por %p103, %p104
    %s107 = sadd.s32 %s106, 1
    %p110 = scmp.eq.s32.totalorder %s25, 1
    %p111 = scmp.ne.s32.totalorder %s106, %s108
    %p112 = scmp.eq.s32.totalorder %s25, 0
    %p113 = por %p111, %p112
    %p114 = scmp.ne.s32.totalorder %s106, %s108
    %p115 = scmp.eq.s32.totalorder %s30, 1
    %p116 = por %p114, %p115
    %p117 = scmp.ne.s32.totalorder %s108, %s109
    %p118 = scmp.eq.s32.totalorder %s30, 0
    %p119 = por %p117, %p118
    %p120 = scmp.ne.s32.totalorder %s108, %s109
    %p121 = scmp.eq.s32.totalorder %s31, 1
    %p122 = por %p120, %p121
    %p124 = scmp.ne.s32.totalorder %s109, %s123
    %p125 = scmp.eq.s32.totalorder %s31, 0
    %p126 = por %p124, %p125
    %s128 = sadd.s32 %s127, 1
    %p131 = scmp.eq.s32.totalorder %s25, 1
    %p132 = scmp.ne.s32.totalorder %s127, %s129
    %p133 = scmp.eq.s32.totalorder %s25, 0
    %p134 = por %p132, %p133
    %p135 = scmp.ne.s32.totalorder %s127, %s129
    %p136 = scmp.eq.s32.totalorder %s30, 1
    %p137 = por %p135, %p136
    %p138 = scmp.ne.s32.totalorder %s129, %s130
    %p139 = scmp.eq.s32.totalorder %s30, 0
    %p140 = por %p138, %p139
    %p141 = scmp.ne.s32.totalorder %s129, %s130
    %p142 = scmp.eq.s32.totalorder %s31, 1
    %p143 = por %p141, %p142
    %p145 = scmp.ne.s32.totalorder %s130, %s144
    %p146 = scmp.eq.s32.totalorder %s31, 0
    %p147 = por %p145, %p146
    %s149 = sadd.s32 %s148, 1
    %p152 = scmp.eq.s32.totalorder %s25, 1
    %p153 = scmp.ne.s32.totalorder %s148, %s150
    %p154 = scmp.eq.s32.totalorder %s25, 0
    %p155 = por %p153, %p154
    %p156 = scmp.ne.s32.totalorder %s148, %s150
    %p157 = scmp.eq.s32.totalorder %s30, 1
    %p158 = por %p156, %p157
    %p159 = scmp.ne.s32.totalorder %s150, %s151
    %p160 = scmp.eq.s32.totalorder %s30, 0
    %p161 = por %p159, %p160
    %p162 = scmp.ne.s32.totalorder %s150, %s151
    %p163 = scmp.eq.s32.totalorder %s31, 1
    %p164 = por %p162, %p163
    %p166 = scmp.ne.s32.totalorder %s151, %s165
    %p167 = scmp.eq.s32.totalorder %s31, 0
    %p168 = por %p166, %p167
    %s170 = sadd.s32 %s169, 1
    %p173 = scmp.eq.s32.totalorder %s25, 1
    %p174 = scmp.ne.s32.totalorder %s169, %s171
    %p175 = scmp.eq.s32.totalorder %s25, 0
    %p176 = por %p174, %p175
    %p177 = scmp.ne.s32.totalorder %s169, %s171
    %p178 = scmp.eq.s32.totalorder %s30, 1
    %p179 = por %p177, %p178
    %p180 = scmp.ne.s32.totalorder %s171, %s172
    %p181 = scmp.eq.s32.totalorder %s30, 0
    %p182 = por %p180, %p181
    %p183 = scmp.ne.s32.totalorder %s171, %s172
    %p184 = scmp.eq.s32.totalorder %s31, 1
    %p185 = por %p183, %p184
    %p187 = scmp.ne.s32.totalorder %s172, %s186
    %p188 = scmp.eq.s32.totalorder %s31, 0
    %p189 = por %p187, %p188
    %s191 = sadd.s32 %s190, 1
    %p194 = scmp.eq.s32.totalorder %s25, 1
    %p195 = scmp.ne.s32.totalorder %s190, %s192
    %p196 = scmp.eq.s32.totalorder %s25, 0
    %p197 = por %p195, %p196
    %p198 = scmp.ne.s32.totalorder %s190, %s192
    %p199 = scmp.eq.s32.totalorder %s30, 1
    %p200 = por %p198, %p199
    %p201 = scmp.ne.s32.totalorder %s192, %s193
    %p202 = scmp.eq.s32.totalorder %s30, 0
    %p203 = por %p201, %p202
    %p204 = scmp.ne.s32.totalorder %s192, %s193
    %p205 = scmp.eq.s32.totalorder %s31, 1
    %p206 = por %p204, %p205
    %p208 = scmp.ne.s32.totalorder %s193, %s207
    %p209 = scmp.eq.s32.totalorder %s31, 0
    %p210 = por %p208, %p209
    %s212 = sadd.s32 %s211, 1
    %p215 = scmp.eq.s32.totalorder %s25, 1
    %p216 = scmp.ne.s32.totalorder %s211, %s213
    %p217 = scmp.eq.s32.totalorder %s25, 0
    %p218 = por %p216, %p217
    %p219 = scmp.ne.s32.totalorder %s211, %s213
    %p220 = scmp.eq.s32.totalorder %s30, 1
    %p221 = por %p219, %p220
    %p222 = scmp.ne.s32.totalorder %s213, %s214
    %p223 = scmp.eq.s32.totalorder %s30, 0
    %p224 = por %p222, %p223
    %p225 = scmp.ne.s32.totalorder %s213, %s214
    %p226 = scmp.eq.s32.totalorder %s31, 1
    %p227 = por %p225, %p226
    %p229 = scmp.ne.s32.totalorder %s214, %s228
    %p230 = scmp.eq.s32.totalorder %s31, 0
    %p231 = por %p229, %p230
    %s233 = sadd.s32 %s232, 1
    %p236 = scmp.eq.s32.totalorder %s25, 1
    %p237 = scmp.ne.s32.totalorder %s232, %s234
    %p238 = scmp.eq.s32.totalorder %s25, 0
    %p239 = por %p237, %p238
    %p240 = scmp.ne.s32.totalorder %s232, %s234
    %p241 = scmp.eq.s32.totalorder %s30, 1
    %p242 = por %p240, %p241
    %p243 = scmp.ne.s32.totalorder %s234, %s235
    %p244 = scmp.eq.s32.totalorder %s30, 0
    %p245 = por %p243, %p244
    %p246 = scmp.ne.s32.totalorder %s234, %s235
    %p247 = scmp.eq.s32.totalorder %s31, 1
    %p248 = por %p246, %p247
    %p250 = scmp.ne.s32.totalorder %s235, %s249
    %p251 = scmp.eq.s32.totalorder %s31, 0
    %p252 = por %p250, %p251
    %s254 = sadd.s32 %s253, 1
    %p257 = scmp.eq.s32.totalorder %s25, 1
    %p258 = scmp.ne.s32.totalorder %s253, %s255
    %p259 = scmp.eq.s32.totalorder %s25, 0
    %p260 = por %p258, %p259
    %p261 = scmp.ne.s32.totalorder %s253, %s255
    %p262 = scmp.eq.s32.totalorder %s30, 1
    %p263 = por %p261, %p262
    %p264 = scmp.ne.s32.totalorder %s255, %s256
    %p265 = scmp.eq.s32.totalorder %s30, 0
    %p266 = por %p264, %p265
    %p267 = scmp.ne.s32.totalorder %s255, %s256
    %p268 = scmp.eq.s32.totalorder %s31, 1
    %p269 = por %p267, %p268
    %p271 = scmp.ne.s32.totalorder %s256, %s270
    %p272 = scmp.eq.s32.totalorder %s31, 0
    %p273 = por %p271, %p272
    %s275 = sadd.s32 %s274, 1
    %p278 = scmp.eq.s32.totalorder %s25, 1
    %p279 = scmp.ne.s32.totalorder %s274, %s276
    %p280 = scmp.eq.s32.totalorder %s25, 0
    %p281 = por %p279, %p280
    %p282 = scmp.ne.s32.totalorder %s274, %s276
    %p283 = scmp.eq.s32.totalorder %s30, 1
    %p284 = por %p282, %p283
    %p285 = scmp.ne.s32.totalorder %s276, %s277
    %p286 = scmp.eq.s32.totalorder %s30, 0
    %p287 = por %p285, %p286
    %p288 = scmp.ne.s32.totalorder %s276, %s277
    %p289 = scmp.eq.s32.totalorder %s31, 1
    %p290 = por %p288, %p289
    %p292 = scmp.ne.s32.totalorder %s277, %s291
    %p293 = scmp.eq.s32.totalorder %s31, 0
    %p294 = por %p292, %p293
    %s296 = sadd.s32 %s295, 1
    %p299 = scmp.eq.s32.totalorder %s25, 1
    %p300 = scmp.ne.s32.totalorder %s295, %s297
    %p301 = scmp.eq.s32.totalorder %s25, 0
    %p302 = por %p300, %p301
    %p303 = scmp.ne.s32.totalorder %s295, %s297
    %p304 = scmp.eq.s32.totalorder %s30, 1
    %p305 = por %p303, %p304
    %p306 = scmp.ne.s32.totalorder %s297, %s298
    %p307 = scmp.eq.s32.totalorder %s30, 0
    %p308 = por %p306, %p307
    %p309 = scmp.ne.s32.totalorder %s297, %s298
    %p310 = scmp.eq.s32.totalorder %s31, 1
    %p311 = por %p309, %p310
    %p313 = scmp.ne.s32.totalorder %s298, %s312
    %p314 = scmp.eq.s32.totalorder %s31, 0
    %p315 = por %p313, %p314
    %s317 = sadd.s32 %s316, 1
    %p320 = scmp.eq.s32.totalorder %s25, 1
    %p321 = scmp.ne.s32.totalorder %s316, %s318
    %p322 = scmp.eq.s32.totalorder %s25, 0
    %p323 = por %p321, %p322
    %p324 = scmp.ne.s32.totalorder %s316, %s318
    %p325 = scmp.eq.s32.totalorder %s30, 1
    %p326 = por %p324, %p325
    %p327 = scmp.ne.s32.totalorder %s318, %s319
    %p328 = scmp.eq.s32.totalorder %s30, 0
    %p329 = por %p327, %p328
    %p330 = scmp.ne.s32.totalorder %s318, %s319
    %p331 = scmp.eq.s32.totalorder %s31, 1
    %p332 = por %p330, %p331
    %p334 = scmp.ne.s32.totalorder %s319, %s333
    %p335 = scmp.eq.s32.totalorder %s31, 0
    %p336 = por %p334, %p335
    %s338 = sadd.s32 %s337, 1
    %p341 = scmp.eq.s32.totalorder %s25, 1
    %p342 = scmp.ne.s32.totalorder %s337, %s339
    %p343 = scmp.eq.s32.totalorder %s25, 0
    %p344 = por %p342, %p343
    %p345 = scmp.ne.s32.totalorder %s337, %s339
    %p346 = scmp.eq.s32.totalorder %s30, 1
    %p347 = por %p345, %p346
    %p348 = scmp.ne.s32.totalorder %s339, %s340
    %p349 = scmp.eq.s32.totalorder %s30, 0
    %p350 = por %p348, %p349
    %p351 = scmp.ne.s32.totalorder %s339, %s340
    %p352 = scmp.eq.s32.totalorder %s31, 1
    %p353 = por %p351, %p352
    %p355 = scmp.ne.s32.totalorder %s340, %s354
    %p356 = scmp.eq.s32.totalorder %s31, 0
    %p357 = por %p355, %p356
    %s359 = sadd.s32 %s358, 1
    %p362 = scmp.eq.s32.totalorder %s25, 1
    %p363 = scmp.ne.s32.totalorder %s358, %s360
    %p364 = scmp.eq.s32.totalorder %s25, 0
    %p365 = por %p363, %p364
    %p366 = scmp.ne.s32.totalorder %s358, %s360
    %p367 = scmp.eq.s32.totalorder %s30, 1
    %p368 = por %p366, %p367
    %p369 = scmp.ne.s32.totalorder %s360, %s361
    %p370 = scmp.eq.s32.totalorder %s30, 0
    %p371 = por %p369, %p370
    %p372 = scmp.ne.s32.totalorder %s360, %s361
    %p373 = scmp.eq.s32.totalorder %s31, 1
    %p374 = por %p372, %p373
    %p376 = scmp.ne.s32.totalorder %s361, %s375
    %p377 = scmp.eq.s32.totalorder %s31, 0
    %p378 = por %p376, %p377
    %s380 = sadd.s32 %s379, 1
    %p383 = scmp.eq.s32.totalorder %s25, 1
    %p384 = scmp.ne.s32.totalorder %s379, %s381
    %p385 = scmp.eq.s32.totalorder %s25, 0
    %p386 = por %p384, %p385
    %p387 = scmp.ne.s32.totalorder %s379, %s381
    %p388 = scmp.eq.s32.totalorder %s30, 1
    %p389 = por %p387, %p388
    %p390 = scmp.ne.s32.totalorder %s381, %s382
    %p391 = scmp.eq.s32.totalorder %s30, 0
    %p392 = por %p390, %p391
    %p393 = scmp.ne.s32.totalorder %s381, %s382
    %p394 = scmp.eq.s32.totalorder %s31, 1
    %p395 = por %p393, %p394
    %p397 = scmp.ne.s32.totalorder %s382, %s396
    %p398 = scmp.eq.s32.totalorder %s31, 0
    %p399 = por %p397, %p398
    %s401 = sadd.s32 %s400, 1
    %p404 = scmp.eq.s32.totalorder %s25, 1
    %p405 = scmp.ne.s32.totalorder %s400, %s402
    %p406 = scmp.eq.s32.totalorder %s25, 0
    %p407 = por %p405, %p406
    %p408 = scmp.ne.s32.totalorder %s400, %s402
    %p409 = scmp.eq.s32.totalorder %s30, 1
    %p410 = por %p408, %p409
    %p411 = scmp.ne.s32.totalorder %s402, %s403
    %p412 = scmp.eq.s32.totalorder %s30, 0
    %p413 = por %p411, %p412
    %p414 = scmp.ne.s32.totalorder %s402, %s403
    %p415 = scmp.eq.s32.totalorder %s31, 1
    %p416 = por %p414, %p415
    %p418 = scmp.ne.s32.totalorder %s403, %s417
    %p419 = scmp.eq.s32.totalorder %s31, 0
    %p420 = por %p418, %p419
    %s422 = sadd.s32 %s421, 1
    %p425 = scmp.eq.s32.totalorder %s25, 1
    %p426 = scmp.ne.s32.totalorder %s421, %s423
    %p427 = scmp.eq.s32.totalorder %s25, 0
    %p428 = por %p426, %p427
    %p429 = scmp.ne.s32.totalorder %s421, %s423
    %p430 = scmp.eq.s32.totalorder %s30, 1
    %p431 = por %p429, %p430
    %p432 = scmp.ne.s32.totalorder %s423, %s424
    %p433 = scmp.eq.s32.totalorder %s30, 0
    %p434 = por %p432, %p433
    %p435 = scmp.ne.s32.totalorder %s423, %s424
    %p436 = scmp.eq.s32.totalorder %s31, 1
    %p437 = por %p435, %p436
    %p439 = scmp.ne.s32.totalorder %s424, %s438
    %p440 = scmp.eq.s32.totalorder %s31, 0
    %p441 = por %p439, %p440
    %s442 = ssub.s32 %s25, %s32
    %p443 = scmp.eq.s32.totalorder %s442, 0
    %s445 = sadd.s32 %s444, 1
    %s446 = scalar_select %p443, %s444, %s445
    %p449 = pneg %p443
    %p450 = scmp.eq.s32.totalorder %s25, 1
    %p451 = por %p449, %p450
    %p452 = scmp.ne.s32.totalorder %s444, %s447
    %p453 = scmp.eq.s32.totalorder %s25, 0
    %p454 = por %p452, %p453
    %p455 = scmp.ne.s32.totalorder %s444, %s447
    %p456 = scmp.eq.s32.totalorder %s30, 1
    %p457 = por %p455, %p456
    %p458 = scmp.ne.s32.totalorder %s447, %s448
    %p459 = scmp.eq.s32.totalorder %s30, 0
    %p460 = por %p458, %p459
    %p461 = scmp.ne.s32.totalorder %s447, %s448
    %p462 = scmp.eq.s32.totalorder %s31, 1
    %p463 = por %p461, %p462
    %p465 = scmp.ne.s32.totalorder %s448, %s464
    %p466 = scmp.eq.s32.totalorder %s31, 0
    %p467 = por %p465, %p466
    %p468 = scmp.le.s32.totalorder 1, %s25
    %p469 = scmp.lt.s32.totalorder %s25, 3
    %p470 = pnand %p468, %p469
    %p471 = pneg %p470
    // Predicated region
    $region9: #{igs_forward.1} parent=5 // pred_check
      _
    $region10: #{igs_forward.1} parent=5 // pred_check_branch
      %473 = sbr.rel (%p470) target = $region12
    $region11: #{igs_forward.1} parent=5 // pred_region
      %s474 = ssub.s32 %s25, 1
      // Predicated region
      $region13: #{igs_forward.1} parent=11 // pred_check
        %p475 = pneg %p98
      $region14: #{igs_forward.1} parent=11 // pred_check_branch
        %477 = sbr.rel (%p475) target = $region16
      $region15: #{igs_forward.1} parent=11 // pred_region
        _
      $region16: #{igs_forward.1} parent=11 // pred_fallthru
        _
      // Predicated region
      $region17: #{igs_forward.1} parent=11 // pred_check
        %p478 = pneg %p119
      $region18: #{igs_forward.1} parent=11 // pred_check_branch
        %480 = sbr.rel (%p478) target = $region20
      $region19: #{igs_forward.1} parent=11 // pred_region
        _
      $region20: #{igs_forward.1} parent=11 // pred_fallthru
        _
      // Predicated region
      $region21: #{igs_forward.1} parent=11 // pred_check
        %p481 = pneg %p140
      $region22: #{igs_forward.1} parent=11 // pred_check_branch
        %483 = sbr.rel (%p481) target = $region24
      $region23: #{igs_forward.1} parent=11 // pred_region
        _
      $region24: #{igs_forward.1} parent=11 // pred_fallthru
        _
      // Predicated region
      $region25: #{igs_forward.1} parent=11 // pred_check
        %p484 = pneg %p161
      $region26: #{igs_forward.1} parent=11 // pred_check_branch
        %486 = sbr.rel (%p484) target = $region28
      $region27: #{igs_forward.1} parent=11 // pred_region
        _
      $region28: #{igs_forward.1} parent=11 // pred_fallthru
        _
      // Predicated region
      $region29: #{igs_forward.1} parent=11 // pred_check
        %p487 = pneg %p182
      $region30: #{igs_forward.1} parent=11 // pred_check_branch
        %489 = sbr.rel (%p487) target = $region32
      $region31: #{igs_forward.1} parent=11 // pred_region
        _
      $region32: #{igs_forward.1} parent=11 // pred_fallthru
        _
      // Predicated region
      $region33: #{igs_forward.1} parent=11 // pred_check
        %p490 = pneg %p203
      $region34: #{igs_forward.1} parent=11 // pred_check_branch
        %492 = sbr.rel (%p490) target = $region36
      $region35: #{igs_forward.1} parent=11 // pred_region
        _
      $region36: #{igs_forward.1} parent=11 // pred_fallthru
        _
      // Predicated region
      $region37: #{igs_forward.1} parent=11 // pred_check
        %p493 = pneg %p224
      $region38: #{igs_forward.1} parent=11 // pred_check_branch
        %495 = sbr.rel (%p493) target = $region40
      $region39: #{igs_forward.1} parent=11 // pred_region
        _
      $region40: #{igs_forward.1} parent=11 // pred_fallthru
        _
      // Predicated region
      $region41: #{igs_forward.1} parent=11 // pred_check
        %p496 = pneg %p245
      $region42: #{igs_forward.1} parent=11 // pred_check_branch
        %498 = sbr.rel (%p496) target = $region44
      $region43: #{igs_forward.1} parent=11 // pred_region
        _
      $region44: #{igs_forward.1} parent=11 // pred_fallthru
        _
      // Predicated region
      $region45: #{igs_forward.1} parent=11 // pred_check
        %p499 = pneg %p266
      $region46: #{igs_forward.1} parent=11 // pred_check_branch
        %501 = sbr.rel (%p499) target = $region48
      $region47: #{igs_forward.1} parent=11 // pred_region
        _
      $region48: #{igs_forward.1} parent=11 // pred_fallthru
        _
      // Predicated region
      $region49: #{igs_forward.1} parent=11 // pred_check
        %p502 = pneg %p287
      $region50: #{igs_forward.1} parent=11 // pred_check_branch
        %504 = sbr.rel (%p502) target = $region52
      $region51: #{igs_forward.1} parent=11 // pred_region
        _
      $region52: #{igs_forward.1} parent=11 // pred_fallthru
        _
      // Predicated region
      $region53: #{igs_forward.1} parent=11 // pred_check
        %p505 = pneg %p308
      $region54: #{igs_forward.1} parent=11 // pred_check_branch
        %507 = sbr.rel (%p505) target = $region56
      $region55: #{igs_forward.1} parent=11 // pred_region
        _
      $region56: #{igs_forward.1} parent=11 // pred_fallthru
        _
      // Predicated region
      $region57: #{igs_forward.1} parent=11 // pred_check
        %p508 = pneg %p329
      $region58: #{igs_forward.1} parent=11 // pred_check_branch
        %510 = sbr.rel (%p508) target = $region60
      $region59: #{igs_forward.1} parent=11 // pred_region
        _
      $region60: #{igs_forward.1} parent=11 // pred_fallthru
        _
      // Predicated region
      $region61: #{igs_forward.1} parent=11 // pred_check
        %p511 = pneg %p350
      $region62: #{igs_forward.1} parent=11 // pred_check_branch
        %513 = sbr.rel (%p511) target = $region64
      $region63: #{igs_forward.1} parent=11 // pred_region
        _
      $region64: #{igs_forward.1} parent=11 // pred_fallthru
        _
      // Predicated region
      $region65: #{igs_forward.1} parent=11 // pred_check
        %p514 = pneg %p371
      $region66: #{igs_forward.1} parent=11 // pred_check_branch
        %516 = sbr.rel (%p514) target = $region68
      $region67: #{igs_forward.1} parent=11 // pred_region
        _
      $region68: #{igs_forward.1} parent=11 // pred_fallthru
        _
      // Predicated region
      $region69: #{igs_forward.1} parent=11 // pred_check
        %p517 = pneg %p392
      $region70: #{igs_forward.1} parent=11 // pred_check_branch
        %519 = sbr.rel (%p517) target = $region72
      $region71: #{igs_forward.1} parent=11 // pred_region
        _
      $region72: #{igs_forward.1} parent=11 // pred_fallthru
        _
      // Predicated region
      $region73: #{igs_forward.1} parent=11 // pred_check
        %p520 = pneg %p413
      $region74: #{igs_forward.1} parent=11 // pred_check_branch
        %522 = sbr.rel (%p520) target = $region76
      $region75: #{igs_forward.1} parent=11 // pred_region
        _
      $region76: #{igs_forward.1} parent=11 // pred_fallthru
        _
      // Predicated region
      $region77: #{igs_forward.1} parent=11 // pred_check
        %p523 = pneg %p434
      $region78: #{igs_forward.1} parent=11 // pred_check_branch
        %525 = sbr.rel (%p523) target = $region80
      $region79: #{igs_forward.1} parent=11 // pred_region
        _
      $region80: #{igs_forward.1} parent=11 // pred_fallthru
        _
    $region12: #{igs_forward.1} parent=5 // pred_fallthru
      _
    %p526 = scmp.lt.s32.totalorder %s25, 2
    // Predicated region
    $region81: #{igs_forward.1} parent=5 // pred_check
      %p527 = pneg %p526
    $region82: #{igs_forward.1} parent=5 // pred_check_branch
      %529 = sbr.rel (%p527) target = $region84
    $region83: #{igs_forward.1} parent=5 // pred_region
      // Predicated region
      $region85: #{igs_forward.1} parent=83 // pred_check
        %p530 = pneg %p45
      $region86: #{igs_forward.1} parent=83 // pred_check_branch
        %532 = sbr.rel (%p530) target = $region88
      $region87: #{igs_forward.1} parent=83 // pred_region
        %p533 = scmp.lt.s32.totalorder %s25, 1
        %s534 = scalar_select %p533, %s25, 1
        %s535 = smul.addr %s534, 8
        %s536 = smul.addr %s535, 4
        %s537 = scalar_lea.vmem %s0, %s536
      $region88: #{igs_forward.1} parent=83 // pred_fallthru
        _
      // Predicated region
      $region89: #{igs_forward.1} parent=83 // pred_check
        %p538 = pneg %p71
      $region90: #{igs_forward.1} parent=83 // pred_check_branch
        %540 = sbr.rel (%p538) target = $region92
      $region91: #{igs_forward.1} parent=83 // pred_region
        %p541 = scmp.lt.s32.totalorder %s25, 1
        %s542 = scalar_select %p541, %s25, 1
        %s543 = smul.addr %s542, 8
        %s544 = scalar_lea.vmem %s1, %s543
      $region92: #{igs_forward.1} parent=83 // pred_fallthru
        _
    $region84: #{igs_forward.1} parent=5 // pred_fallthru
      _
    %p545 = scmp.le.s32.totalorder 1, %s25
    %p546 = scmp.lt.s32.totalorder %s25, 3
    %p547 = pnand %p545, %p546
    %p548 = pneg %p547
    // Predicated region
    $region93: #{igs_forward.1} parent=5 // pred_check
      _
    $region94: #{igs_forward.1} parent=5 // pred_check_branch
      %550 = sbr.rel (%p547) target = $region96
    $region95: #{igs_forward.1} parent=5 // pred_region
      %s551 = ssub.s32 %s25, 1
      %p552 = scmp.lt.s32.totalorder %s30, 1
      %s553 = scalar_select %p552, %s30, 1
      %s554 = smul.addr %s553, 8
      %s555 = smul.addr %s554, 4
      %s556 = scalar_lea.vmem %s0, %s555
      %p557 = pneg %p51
      %p558 = pneg %p48
      %p559 = scmp.lt.s32.totalorder %s30, 1
      %s560 = scalar_select %p559, %s30, 1
      %s561 = smul.addr %s560, 8
      %s562 = scalar_lea.vmem %s1, %s561
      %p563 = pneg %p77
      %p564 = pneg %p74
      %p565 = pneg %p98
      %p566 = pneg %p95
      %p567 = pneg %p119
      %p568 = pneg %p116
      %p569 = pneg %p140
      %p570 = pneg %p137
      %p571 = pneg %p161
      %p572 = pneg %p158
      %p573 = pneg %p182
      %p574 = pneg %p179
      %p575 = pneg %p203
      %p576 = pneg %p200
      %p577 = pneg %p224
      %p578 = pneg %p221
      %p579 = pneg %p245
      %p580 = pneg %p242
      %p581 = pneg %p266
      %p582 = pneg %p263
      %p583 = pneg %p287
      %p584 = pneg %p284
      %p585 = pneg %p308
      %p586 = pneg %p305
      %p587 = pneg %p329
      %p588 = pneg %p326
      %p589 = pneg %p350
      %p590 = pneg %p347
      %p591 = pneg %p371
      %p592 = pneg %p368
      %p593 = pneg %p392
      %p594 = pneg %p389
      %p595 = pneg %p413
      %p596 = pneg %p410
      %p597 = pneg %p434
      %p598 = pneg %p431
      %p599 = pneg %p460
      %p600 = pneg %p457
      %p601 = scmp.lt.s32.totalorder %s30, 1
      %s602 = scalar_select %p601, %s30, 1
      %s603 = smul.addr %s602, 8
      %s604 = scalar_lea.vmem %s19, %s603
      %p605 = scmp.lt.s32.totalorder %s30, 1
      %s606 = scalar_select %p605, %s30, 1
      %s607 = smul.addr %s606, 8
      %s608 = smul.addr %s607, 4
      %s609 = scalar_lea.vmem %s0, %s608
      %p610 = scmp.lt.s32.totalorder %s30, 1
      %s611 = scalar_select %p610, %s30, 1
      %s612 = smul.addr %s611, 8
      %s613 = scalar_lea.vmem %s1, %s612
      %p614 = scmp.lt.s32.totalorder %s30, 1
      %s615 = scalar_select %p614, %s30, 1
      %s616 = smul.addr %s615, 8
      %s617 = scalar_lea.vmem %s19, %s616
      %v619 = vld [vmem:[%s2] sm:$0xff]
      %v620 = vld [vmem:[%s2 + $0x8] sm:$0xff]
      %v621 = vld [vmem:[%s2 + $0x10] sm:$0xff]
      %v622 = vld [vmem:[%s2 + $0x18] sm:$0xff]
      %v623 = vld [vmem:[%s2 + $0x20] sm:$0xff]
      %v624 = vld [vmem:[%s2 + $0x28] sm:$0xff]
      %v625 = vld [vmem:[%s2 + $0x30] sm:$0xff]
      %v626 = vld [vmem:[%s2 + $0x38] sm:$0xff]
      %v627 = vld [vmem:[%s3] sm:$0xff]
      %v628 = vld [vmem:[%s3 + $0x8] sm:$0xff]
      %v629 = vld [vmem:[%s3 + $0x10] sm:$0xff]
      %v630 = vld [vmem:[%s3 + $0x18] sm:$0xff]
      %v631 = vld [vmem:[%s3 + $0x20] sm:$0xff]
      %v632 = vld [vmem:[%s3 + $0x28] sm:$0xff]
      %v633 = vld [vmem:[%s3 + $0x30] sm:$0xff]
      %v634 = vld [vmem:[%s3 + $0x38] sm:$0xff]
      %v635 = vld [vmem:[%s3 + $0x40] sm:$0x1]
      %v636 = vld [vmem:[%s3 + $0x48] sm:$0x1]
      %v637 = vld [vmem:[%s3 + $0x50] sm:$0x1]
      %v638 = vld [vmem:[%s3 + $0x58] sm:$0x1]
      %v639 = vld [vmem:[%s3 + $0x60] sm:$0x1]
      %v640 = vld [vmem:[%s3 + $0x68] sm:$0x1]
      %v641 = vld [vmem:[%s3 + $0x70] sm:$0x1]
      %v642 = vld [vmem:[%s3 + $0x78] sm:$0x1]
      %v643 = vld [vmem:[%s4] sm:$0xff]
      %v644 = vld [vmem:[%s4 + $0x8] sm:$0xff]
      %v645 = vld [vmem:[%s4 + $0x10] sm:$0x1]
      %v646 = vld [vmem:[%s4 + $0x18] sm:$0x1]
      %v647 = vld [vmem:[%s5] sm:$0xff]
      %v648 = vld [vmem:[%s5 + $0x8] sm:$0x1]
      %v649 = vld [vmem:[%s6] sm:$0xff]
      %v650 = vld [vmem:[%s6 + $0x8] sm:$0x1]
      %v651 = vld [vmem:[%s609] sm:$0xff]
      %v652 = vld [vmem:[%s609 + $0x8] sm:$0xff]
      %v653 = vld [vmem:[%s609 + $0x10] sm:$0xff]
      %v654 = vld [vmem:[%s609 + $0x18] sm:$0xff]
      %v659 = vlaneseq
      %v660 = vshrl.u32 %v659, 7
      %v661 = vsub.s32 3, %v660
      %v662 = vrot.slane %v651, %v661
      %v663 = vlaneseq
      %v664 = vshrl.u32 %v663, 7
      %v665 = vsub.s32 7, %v664
      %v666 = vrot.slane %v651, %v665
      %v667 = vlaneseq
      %v668 = vshrl.u32 %v667, 7
      %v669 = vsub.s32 3, %v668
      %v670 = vrot.slane %v652, %v669
      %v671 = vlaneseq
      %v672 = vshrl.u32 %v671, 7
      %v673 = vsub.s32 7, %v672
      %v674 = vrot.slane %v652, %v673
      %v675 = vlaneseq
      %v676 = vshrl.u32 %v675, 7
      %v677 = vsub.s32 3, %v676
      %v678 = vrot.slane %v653, %v677
      %v679 = vlaneseq
      %v680 = vshrl.u32 %v679, 7
      %v681 = vsub.s32 7, %v680
      %v682 = vrot.slane %v653, %v681
      %v683 = vlaneseq
      %v684 = vshrl.u32 %v683, 7
      %v685 = vsub.s32 3, %v684
      %v686 = vrot.slane %v654, %v685
      %v687 = vlaneseq
      %v688 = vshrl.u32 %v687, 7
      %v689 = vsub.s32 7, %v688
      %v690 = vrot.slane %v654, %v689
      %699 = vrot.lane.b32.xlu0 %v662, 33
      %v700 = vpop.permute.xlu0 %699
      %701 = vrot.lane.b32.xlu0 %v666, 33
      %v702 = vpop.permute.xlu0 %701
      %703 = vrot.lane.b32.xlu0 %v670, 33
      %v704 = vpop.permute.xlu0 %703
      %705 = vrot.lane.b32.xlu0 %v674, 33
      %v706 = vpop.permute.xlu0 %705
      %707 = vrot.lane.b32.xlu0 %v678, 33
      %v708 = vpop.permute.xlu0 %707
      %709 = vrot.lane.b32.xlu0 %v682, 33
      %v710 = vpop.permute.xlu0 %709
      %711 = vrot.lane.b32.xlu0 %v686, 33
      %v712 = vpop.permute.xlu0 %711
      %713 = vrot.lane.b32.xlu0 %v690, 33
      %v714 = vpop.permute.xlu0 %713
      %v715 = vlaneseq
      %v716 = vand.u32 %v715, 127
      %vm717 = vcmp.lt.s32.totalorder %v716, 33
      %v718 = vsel %vm717, %v712, %v714
      %v719 = vsel %vm717, %v710, %v712
      %v720 = vsel %vm717, %v708, %v710
      %v721 = vsel %vm717, %v706, %v708
      %v722 = vsel %vm717, %v704, %v706
      %v723 = vsel %vm717, %v702, %v704
      %v724 = vsel %vm717, %v700, %v702
      %v725 = vsel %vm717, %v714, %v700
      %v726 = vmul.f32 %v725, %v619
      %v727 = vmul.f32 %v724, %v620
      %v728 = vmul.f32 %v723, %v621
      %v729 = vmul.f32 %v722, %v622
      %v730 = vmul.f32 %v721, %v623
      %v731 = vmul.f32 %v720, %v624
      %v732 = vmul.f32 %v719, %v625
      %v733 = vmul.f32 %v718, %v626
      %v734 = vlaneseq
      %v735 = vshrl.u32 %v734, 7
      %v736 = vsub.s32 2, %v735
      %v737 = vrot.slane %v651, %v736
      %v738 = vlaneseq
      %v739 = vshrl.u32 %v738, 7
      %v740 = vsub.s32 6, %v739
      %v741 = vrot.slane %v651, %v740
      %v742 = vlaneseq
      %v743 = vshrl.u32 %v742, 7
      %v744 = vsub.s32 2, %v743
      %v745 = vrot.slane %v652, %v744
      %v746 = vlaneseq
      %v747 = vshrl.u32 %v746, 7
      %v748 = vsub.s32 6, %v747
      %v749 = vrot.slane %v652, %v748
      %v750 = vlaneseq
      %v751 = vshrl.u32 %v750, 7
      %v752 = vsub.s32 2, %v751
      %v753 = vrot.slane %v653, %v752
      %v754 = vlaneseq
      %v755 = vshrl.u32 %v754, 7
      %v756 = vsub.s32 6, %v755
      %v757 = vrot.slane %v653, %v756
      %v758 = vlaneseq
      %v759 = vshrl.u32 %v758, 7
      %v760 = vsub.s32 2, %v759
      %v761 = vrot.slane %v654, %v760
      %v762 = vlaneseq
      %v763 = vshrl.u32 %v762, 7
      %v764 = vsub.s32 6, %v763
      %v765 = vrot.slane %v654, %v764
      %774 = vrot.lane.b32.xlu0 %v737, 32
      %v775 = vpop.permute.xlu0 %774
      %776 = vrot.lane.b32.xlu0 %v741, 32
      %v777 = vpop.permute.xlu0 %776
      %778 = vrot.lane.b32.xlu0 %v745, 32
      %v779 = vpop.permute.xlu0 %778
      %780 = vrot.lane.b32.xlu0 %v749, 32
      %v781 = vpop.permute.xlu0 %780
      %782 = vrot.lane.b32.xlu0 %v753, 32
      %v783 = vpop.permute.xlu0 %782
      %784 = vrot.lane.b32.xlu0 %v757, 32
      %v785 = vpop.permute.xlu0 %784
      %786 = vrot.lane.b32.xlu0 %v761, 32
      %v787 = vpop.permute.xlu0 %786
      %788 = vrot.lane.b32.xlu0 %v765, 32
      %v789 = vpop.permute.xlu0 %788
      %vm790 = vcmp.lt.s32.totalorder %v716, 32
      %v791 = vsel %vm790, %v787, %v789
      %v792 = vsel %vm790, %v785, %v787
      %v793 = vsel %vm790, %v783, %v785
      %v794 = vsel %vm790, %v781, %v783
      %v795 = vsel %vm790, %v779, %v781
      %v796 = vsel %vm790, %v777, %v779
      %v797 = vsel %vm790, %v775, %v777
      %v798 = vsel %vm790, %v789, %v775
      %v807 = vrot.slane %v619, 1
      %v808 = vrot.slane %v620, 1
      %v809 = vrot.slane %v621, 1
      %v810 = vrot.slane %v622, 1
      %v811 = vrot.slane %v623, 1
      %v812 = vrot.slane %v624, 1
      %v813 = vrot.slane %v625, 1
      %v814 = vrot.slane %v626, 1
      %v823 = vmul.f32 %v798, %v807
      %v824 = vmul.f32 %v797, %v808
      %v825 = vmul.f32 %v796, %v809
      %v826 = vmul.f32 %v795, %v810
      %v827 = vmul.f32 %v794, %v811
      %v828 = vmul.f32 %v793, %v812
      %v829 = vmul.f32 %v792, %v813
      %v830 = vmul.f32 %v791, %v814
      %831 = vrot.lane.b32.xlu0 %v662, 32
      %v832 = vpop.permute.xlu0 %831
      %833 = vrot.lane.b32.xlu0 %v666, 32
      %v834 = vpop.permute.xlu0 %833
      %835 = vrot.lane.b32.xlu0 %v670, 32
      %v836 = vpop.permute.xlu0 %835
      %837 = vrot.lane.b32.xlu0 %v674, 32
      %v838 = vpop.permute.xlu0 %837
      %839 = vrot.lane.b32.xlu0 %v678, 32
      %v840 = vpop.permute.xlu0 %839
      %841 = vrot.lane.b32.xlu0 %v682, 32
      %v842 = vpop.permute.xlu0 %841
      %843 = vrot.lane.b32.xlu0 %v686, 32
      %v844 = vpop.permute.xlu0 %843
      %845 = vrot.lane.b32.xlu0 %v690, 32
      %v846 = vpop.permute.xlu0 %845
      %v847 = vsel %vm790, %v844, %v846
      %v848 = vsel %vm790, %v842, %v844
      %v849 = vsel %vm790, %v840, %v842
      %v850 = vsel %vm790, %v838, %v840
      %v851 = vsel %vm790, %v836, %v838
      %v852 = vsel %vm790, %v834, %v836
      %v853 = vsel %vm790, %v832, %v834
      %v854 = vsel %vm790, %v846, %v832
      %v855 = vrot.slane %v619, 2
      %v856 = vrot.slane %v620, 2
      %v857 = vrot.slane %v621, 2
      %v858 = vrot.slane %v622, 2
      %v859 = vrot.slane %v623, 2
      %v860 = vrot.slane %v624, 2
      %v861 = vrot.slane %v625, 2
      %v862 = vrot.slane %v626, 2
      %v871 = vmul.f32 %v854, %v855
      %v872 = vmul.f32 %v853, %v856
      %v873 = vmul.f32 %v852, %v857
      %v874 = vmul.f32 %v851, %v858
      %v875 = vmul.f32 %v850, %v859
      %v876 = vmul.f32 %v849, %v860
      %v877 = vmul.f32 %v848, %v861
      %v878 = vmul.f32 %v847, %v862
      %v879 = vlaneseq
      %v880 = vshrl.u32 %v879, 7
      %v881 = vsub.s32 1, %v880
      %v882 = vrot.slane %v651, %v881
      %v883 = vlaneseq
      %v884 = vshrl.u32 %v883, 7
      %v885 = vsub.s32 5, %v884
      %v886 = vrot.slane %v651, %v885
      %v887 = vlaneseq
      %v888 = vshrl.u32 %v887, 7
      %v889 = vsub.s32 1, %v888
      %v890 = vrot.slane %v652, %v889
      %v891 = vlaneseq
      %v892 = vshrl.u32 %v891, 7
      %v893 = vsub.s32 5, %v892
      %v894 = vrot.slane %v652, %v893
      %v895 = vlaneseq
      %v896 = vshrl.u32 %v895, 7
      %v897 = vsub.s32 1, %v896
      %v898 = vrot.slane %v653, %v897
      %v899 = vlaneseq
      %v900 = vshrl.u32 %v899, 7
      %v901 = vsub.s32 5, %v900
      %v902 = vrot.slane %v653, %v901
      %v903 = vlaneseq
      %v904 = vshrl.u32 %v903, 7
      %v905 = vsub.s32 1, %v904
      %v906 = vrot.slane %v654, %v905
      %v907 = vlaneseq
      %v908 = vshrl.u32 %v907, 7
      %v909 = vsub.s32 5, %v908
      %v910 = vrot.slane %v654, %v909
      %919 = vrot.lane.b32.xlu0 %v882, 1
      %v920 = vpop.permute.xlu0 %919
      %921 = vrot.lane.b32.xlu0 %v886, 1
      %v922 = vpop.permute.xlu0 %921
      %923 = vrot.lane.b32.xlu0 %v890, 1
      %v924 = vpop.permute.xlu0 %923
      %925 = vrot.lane.b32.xlu0 %v894, 1
      %v926 = vpop.permute.xlu0 %925
      %927 = vrot.lane.b32.xlu0 %v898, 1
      %v928 = vpop.permute.xlu0 %927
      %929 = vrot.lane.b32.xlu0 %v902, 1
      %v930 = vpop.permute.xlu0 %929
      %931 = vrot.lane.b32.xlu0 %v906, 1
      %v932 = vpop.permute.xlu0 %931
      %933 = vrot.lane.b32.xlu0 %v910, 1
      %v934 = vpop.permute.xlu0 %933
      %vm935 = vcmp.lt.s32.totalorder %v716, 1
      %v936 = vsel %vm935, %v932, %v934
      %v937 = vsel %vm935, %v930, %v932
      %v938 = vsel %vm935, %v928, %v930
      %v939 = vsel %vm935, %v926, %v928
      %v940 = vsel %vm935, %v924, %v926
      %v941 = vsel %vm935, %v922, %v924
      %v942 = vsel %vm935, %v920, %v922
      %v943 = vsel %vm935, %v934, %v920
      %v944 = vrot.slane %v619, 3
      %v945 = vrot.slane %v620, 3
      %v946 = vrot.slane %v621, 3
      %v947 = vrot.slane %v622, 3
      %v948 = vrot.slane %v623, 3
      %v949 = vrot.slane %v624, 3
      %v950 = vrot.slane %v625, 3
      %v951 = vrot.slane %v626, 3
      %v960 = vmul.f32 %v943, %v944
      %v961 = vmul.f32 %v942, %v945
      %v962 = vmul.f32 %v941, %v946
      %v963 = vmul.f32 %v940, %v947
      %v964 = vmul.f32 %v939, %v948
      %v965 = vmul.f32 %v938, %v949
      %v966 = vmul.f32 %v937, %v950
      %v967 = vmul.f32 %v936, %v951
      %968 = vrot.lane.b32.xlu0 %v662, 1
      %v969 = vpop.permute.xlu0 %968
      %970 = vrot.lane.b32.xlu0 %v666, 1
      %v971 = vpop.permute.xlu0 %970
      %972 = vrot.lane.b32.xlu0 %v670, 1
      %v973 = vpop.permute.xlu0 %972
      %974 = vrot.lane.b32.xlu0 %v674, 1
      %v975 = vpop.permute.xlu0 %974
      %976 = vrot.lane.b32.xlu0 %v678, 1
      %v977 = vpop.permute.xlu0 %976
      %978 = vrot.lane.b32.xlu0 %v682, 1
      %v979 = vpop.permute.xlu0 %978
      %980 = vrot.lane.b32.xlu0 %v686, 1
      %v981 = vpop.permute.xlu0 %980
      %982 = vrot.lane.b32.xlu0 %v690, 1
      %v983 = vpop.permute.xlu0 %982
      %v984 = vsel %vm935, %v981, %v983
      %v985 = vsel %vm935, %v979, %v981
      %v986 = vsel %vm935, %v977, %v979
      %v987 = vsel %vm935, %v975, %v977
      %v988 = vsel %vm935, %v973, %v975
      %v989 = vsel %vm935, %v971, %v973
      %v990 = vsel %vm935, %v969, %v971
      %v991 = vsel %vm935, %v983, %v969
      %v992 = vrot.slane %v619, 6
      %v993 = vrot.slane %v620, 6
      %v994 = vrot.slane %v621, 6
      %v995 = vrot.slane %v622, 6
      %v996 = vrot.slane %v623, 6
      %v997 = vrot.slane %v624, 6
      %v998 = vrot.slane %v625, 6
      %v999 = vrot.slane %v626, 6
      %v1008 = vmul.f32 %v991, %v992
      %v1009 = vmul.f32 %v990, %v993
      %v1010 = vmul.f32 %v989, %v994
      %v1011 = vmul.f32 %v988, %v995
      %v1012 = vmul.f32 %v987, %v996
      %v1013 = vmul.f32 %v986, %v997
      %v1014 = vmul.f32 %v985, %v998
      %v1015 = vmul.f32 %v984, %v999
      %v1024 = vrot.slane %v823, 7
      %v1025 = vrot.slane %v824, 7
      %v1026 = vrot.slane %v825, 7
      %v1027 = vrot.slane %v826, 7
      %v1028 = vrot.slane %v827, 7
      %v1029 = vrot.slane %v828, 7
      %v1030 = vrot.slane %v829, 7
      %v1031 = vrot.slane %v830, 7
      %v1048 = vrot.slane %v871, 6
      %v1049 = vrot.slane %v872, 6
      %v1050 = vrot.slane %v873, 6
      %v1051 = vrot.slane %v874, 6
      %v1052 = vrot.slane %v875, 6
      %v1053 = vrot.slane %v876, 6
      %v1054 = vrot.slane %v877, 6
      %v1055 = vrot.slane %v878, 6
      %v1072 = vrot.slane %v960, 5
      %v1073 = vrot.slane %v961, 5
      %v1074 = vrot.slane %v962, 5
      %v1075 = vrot.slane %v963, 5
      %v1076 = vrot.slane %v964, 5
      %v1077 = vrot.slane %v965, 5
      %v1078 = vrot.slane %v966, 5
      %v1079 = vrot.slane %v967, 5
      %v1088 = vlaneseq
      %v1089 = vshrl.u32 %v1088, 7
      %v1090 = vsub.s32 0, %v1089
      %v1091 = vrot.slane %v651, %v1090
      %v1092 = vlaneseq
      %v1093 = vshrl.u32 %v1092, 7
      %v1094 = vsub.s32 4, %v1093
      %v1095 = vrot.slane %v651, %v1094
      %v1096 = vlaneseq
      %v1097 = vshrl.u32 %v1096, 7
      %v1098 = vsub.s32 0, %v1097
      %v1099 = vrot.slane %v652, %v1098
      %v1100 = vlaneseq
      %v1101 = vshrl.u32 %v1100, 7
      %v1102 = vsub.s32 4, %v1101
      %v1103 = vrot.slane %v652, %v1102
      %v1104 = vlaneseq
      %v1105 = vshrl.u32 %v1104, 7
      %v1106 = vsub.s32 0, %v1105
      %v1107 = vrot.slane %v653, %v1106
      %v1108 = vlaneseq
      %v1109 = vshrl.u32 %v1108, 7
      %v1110 = vsub.s32 4, %v1109
      %v1111 = vrot.slane %v653, %v1110
      %v1112 = vlaneseq
      %v1113 = vshrl.u32 %v1112, 7
      %v1114 = vsub.s32 0, %v1113
      %v1115 = vrot.slane %v654, %v1114
      %v1116 = vlaneseq
      %v1117 = vshrl.u32 %v1116, 7
      %v1118 = vsub.s32 4, %v1117
      %v1119 = vrot.slane %v654, %v1118
      %v1136 = vrot.slane %v1008, 2
      %v1137 = vrot.slane %v1009, 2
      %v1138 = vrot.slane %v1010, 2
      %v1139 = vrot.slane %v1011, 2
      %v1140 = vrot.slane %v1012, 2
      %v1141 = vrot.slane %v1013, 2
      %v1142 = vrot.slane %v1014, 2
      %v1143 = vrot.slane %v1015, 2
      %vm1152 = vcmask 1040384
      %v1153 = vsel %vm1152, %v726, %v1024
      %v1154 = vsel %vm1152, %v727, %v1025
      %v1155 = vsel %vm1152, %v728, %v1026
      %v1156 = vsel %vm1152, %v729, %v1027
      %v1157 = vsel %vm1152, %v730, %v1028
      %v1158 = vsel %vm1152, %v731, %v1029
      %v1159 = vsel %vm1152, %v732, %v1030
      %v1160 = vsel %vm1152, %v733, %v1031
      %vm1161 = vcmask 1041408
      %v1162 = vsel %vm1161, %v1153, %v1048
      %v1163 = vsel %vm1161, %v1154, %v1049
      %v1164 = vsel %vm1161, %v1155, %v1050
      %v1165 = vsel %vm1161, %v1156, %v1051
      %v1166 = vsel %vm1161, %v1157, %v1052
      %v1167 = vsel %vm1161, %v1158, %v1053
      %v1168 = vsel %vm1161, %v1159, %v1054
      %v1169 = vsel %vm1161, %v1160, %v1055
      %vm1170 = vcmask 1042432
      %v1171 = vsel %vm1170, %v1162, %v1072
      %v1172 = vsel %vm1170, %v1163, %v1073
      %v1173 = vsel %vm1170, %v1164, %v1074
      %v1174 = vsel %vm1170, %v1165, %v1075
      %v1175 = vsel %vm1170, %v1166, %v1076
      %v1176 = vsel %vm1170, %v1167, %v1077
      %v1177 = vsel %vm1170, %v1168, %v1078
      %v1178 = vsel %vm1170, %v1169, %v1079
      %vm1179 = vcmask 1043456
      %v1180 = vsel %vm1179, %v1171, %v1091
      %v1181 = vsel %vm1179, %v1172, %v1095
      %v1182 = vsel %vm1179, %v1173, %v1099
      %v1183 = vsel %vm1179, %v1174, %v1103
      %v1184 = vsel %vm1179, %v1175, %v1107
      %v1185 = vsel %vm1179, %v1176, %v1111
      %v1186 = vsel %vm1179, %v1177, %v1115
      %v1187 = vsel %vm1179, %v1178, %v1119
      %vm1188 = vcmask 1044480
      %v1189 = vsel %vm1188, %v1180, %v882
      %v1190 = vsel %vm1188, %v1181, %v886
      %v1191 = vsel %vm1188, %v1182, %v890
      %v1192 = vsel %vm1188, %v1183, %v894
      %v1193 = vsel %vm1188, %v1184, %v898
      %v1194 = vsel %vm1188, %v1185, %v902
      %v1195 = vsel %vm1188, %v1186, %v906
      %v1196 = vsel %vm1188, %v1187, %v910
      %vm1197 = vcmask 1045504
      %v1198 = vsel %vm1197, %v1189, %v1136
      %v1199 = vsel %vm1197, %v1190, %v1137
      %v1200 = vsel %vm1197, %v1191, %v1138
      %v1201 = vsel %vm1197, %v1192, %v1139
      %v1202 = vsel %vm1197, %v1193, %v1140
      %v1203 = vsel %vm1197, %v1194, %v1141
      %v1204 = vsel %vm1197, %v1195, %v1142
      %v1205 = vsel %vm1197, %v1196, %v1143
      %vm1206 = vcmask 1046528
      %v1207 = vsel %vm1206, %v1198, %v737
      %v1208 = vsel %vm1206, %v1199, %v741
      %v1209 = vsel %vm1206, %v1200, %v745
      %v1210 = vsel %vm1206, %v1201, %v749
      %v1211 = vsel %vm1206, %v1202, %v753
      %v1212 = vsel %vm1206, %v1203, %v757
      %v1213 = vsel %vm1206, %v1204, %v761
      %v1214 = vsel %vm1206, %v1205, %v765
      %v1215 = vsel %vm1152, %v662, 1.0
      %v1216 = vsel %vm1152, %v666, 1.0
      %v1217 = vsel %vm1152, %v670, 1.0
      %v1218 = vsel %vm1152, %v674, 1.0
      %v1219 = vsel %vm1152, %v678, 1.0
      %v1220 = vsel %vm1152, %v682, 1.0
      %v1221 = vsel %vm1152, %v686, 1.0
      %v1222 = vsel %vm1152, %v690, 1.0
      %v1223 = vld [vmem:[%s10] sm:$0xff]
      %vm1224 = vcmask 80896
      %v1226 = vsel %vm1224, %v1223, 0
      %v1229 = vsel %vm1161, %v1215, 0
      %v1232 = vsel %vm1161, %v1216, 0
      %v1235 = vsel %vm1161, %v1217, 0
      %v1238 = vsel %vm1161, %v1218, 0
      %v1241 = vsel %vm1161, %v1219, 0
      %v1244 = vsel %vm1161, %v1220, 0
      %v1247 = vsel %vm1161, %v1221, 0
      %v1250 = vsel %vm1161, %v1222, 0
      %1252 = vmatprep.subr.mxu0 %v1208
      %1253 = vmatpush1.msra.mxu0 %v1207
      %1254 = vmatprep.subr.mxu0 %v1232
      %1255 = vmatpush1.msra.mxu0 %v1229
      %1256 = vmatprep.subr.mxu0 0.0
      %1257 = vmatpush1.msra.mxu0 0.0
      %1258 = vmatprep.subr.mxu0 0.0
      %1259 = vmatpush1.msra.mxu0 0.0
      %1260 = vmatprep.subr.mxu0 0.0
      %1261 = vmatpush1.msra.mxu0 0.0
      %1262 = vmatprep.subr.mxu0 0.0
      %1263 = vmatpush1.msra.mxu0 0.0
      %1264 = vmatprep.subr.mxu0 0.0
      %1265 = vmatpush1.msra.mxu0 0.0
      %1266 = vmatprep.subr.mxu0 0.0
      %1267 = vmatpush1.msra.mxu0 0.0
      %1268 = vmatprep.subr.mxu0 0.0
      %1269 = vmatpush1.msra.mxu0 0.0
      %1270 = vmatprep.subr.mxu0 0.0
      %1271 = vmatpush1.msra.mxu0 0.0
      %1272 = vmatprep.subr.mxu0 0.0
      %1273 = vmatpush1.msra.mxu0 0.0
      %1274 = vmatprep.subr.mxu0 0.0
      %1275 = vmatpush1.msra.mxu0 0.0
      %1276 = vmatprep.subr.mxu0 0.0
      %1277 = vmatpush1.msra.mxu0 0.0
      %1278 = vmatprep.subr.mxu0 0.0
      %1279 = vmatpush1.msra.mxu0 0.0
      %1280 = vmatprep.subr.mxu0 0.0
      %1281 = vmatpush1.msra.mxu0 0.0
      %1282 = vmatprep.subr.mxu0 0.0
      %1283 = vmatpush1.msra.mxu0 0.0
      %1284 = vmatprep.subr.mxu0 0.0
      %1285 = vmatpush1.msra.mxu0 0.0
      %1286 = vmatprep.subr.mxu0 0.0
      %1287 = vmatpush1.msra.mxu0 0.0
      %1288 = vmatprep.subr.mxu0 0.0
      %1289 = vmatpush1.msra.mxu0 0.0
      %1290 = vmatprep.subr.mxu0 0.0
      %1291 = vmatpush1.msra.mxu0 0.0
      %1292 = vmatprep.subr.mxu0 0.0
      %1293 = vmatpush1.msra.mxu0 0.0
      %1294 = vmatprep.subr.mxu0 0.0
      %1295 = vmatpush1.msra.mxu0 0.0
      %1296 = vmatprep.subr.mxu0 0.0
      %1297 = vmatpush1.msra.mxu0 0.0
      %1298 = vmatprep.subr.mxu0 0.0
      %1299 = vmatpush1.msra.mxu0 0.0
      %1300 = vmatprep.subr.mxu0 0.0
      %1301 = vmatpush1.msra.mxu0 0.0
      %1302 = vmatprep.subr.mxu0 0.0
      %1303 = vmatpush1.msra.mxu0 0.0
      %1304 = vmatprep.subr.mxu0 0.0
      %1305 = vmatpush1.msra.mxu0 0.0
      %1306 = vmatprep.subr.mxu0 0.0
      %1307 = vmatpush1.msra.mxu0 0.0
      %1308 = vmatprep.subr.mxu0 0.0
      %1309 = vmatpush1.msra.mxu0 0.0
      %1310 = vmatprep.subr.mxu0 0.0
      %1311 = vmatpush1.msra.mxu0 0.0
      %1312 = vmatprep.subr.mxu0 0.0
      %1313 = vmatpush1.msra.mxu0 0.0
      %1314 = vmatprep.subr.mxu0 0.0
      %1315 = vmatpush1.msra.mxu0 0.0
      %1316 = vmatprep.mubr.f32.mxu0 0.0
      %1317 = vmatmul.mubr.f32.gmra.mrb[0].mxu0 %v1226
      %v1318 = vpop.f32.mrb[0].mxu0
      %v1319 = vadd.f32 0.0, %v1318
      %v1320 = vpop.f32.mrb[0].mxu0
      %v1321 = vadd.f32 0.0, %v1320
      %1322 = vdwg.mxu0
      %1323 = vmatprep.subr.mxu0 %v1210
      %1324 = vmatpush1.msra.mxu0 %v1209
      %1325 = vmatprep.subr.mxu0 %v1238
      %1326 = vmatpush1.msra.mxu0 %v1235
      %1327 = vmatprep.subr.mxu0 0.0
      %1328 = vmatpush1.msra.mxu0 0.0
      %1329 = vmatprep.subr.mxu0 0.0
      %1330 = vmatpush1.msra.mxu0 0.0
      %1331 = vmatprep.subr.mxu0 0.0
      %1332 = vmatpush1.msra.mxu0 0.0
      %1333 = vmatprep.subr.mxu0 0.0
      %1334 = vmatpush1.msra.mxu0 0.0
      %1335 = vmatprep.subr.mxu0 0.0
      %1336 = vmatpush1.msra.mxu0 0.0
      %1337 = vmatprep.subr.mxu0 0.0
      %1338 = vmatpush1.msra.mxu0 0.0
      %1339 = vmatprep.subr.mxu0 0.0
      %1340 = vmatpush1.msra.mxu0 0.0
      %1341 = vmatprep.subr.mxu0 0.0
      %1342 = vmatpush1.msra.mxu0 0.0
      %1343 = vmatprep.subr.mxu0 0.0
      %1344 = vmatpush1.msra.mxu0 0.0
      %1345 = vmatprep.subr.mxu0 0.0
      %1346 = vmatpush1.msra.mxu0 0.0
      %1347 = vmatprep.subr.mxu0 0.0
      %1348 = vmatpush1.msra.mxu0 0.0
      %1349 = vmatprep.subr.mxu0 0.0
      %1350 = vmatpush1.msra.mxu0 0.0
      %1351 = vmatprep.subr.mxu0 0.0
      %1352 = vmatpush1.msra.mxu0 0.0
      %1353 = vmatprep.subr.mxu0 0.0
      %1354 = vmatpush1.msra.mxu0 0.0
      %1355 = vmatprep.subr.mxu0 0.0
      %1356 = vmatpush1.msra.mxu0 0.0
      %1357 = vmatprep.subr.mxu0 0.0
      %1358 = vmatpush1.msra.mxu0 0.0
      %1359 = vmatprep.subr.mxu0 0.0
      %1360 = vmatpush1.msra.mxu0 0.0
      %1361 = vmatprep.subr.mxu0 0.0
      %1362 = vmatpush1.msra.mxu0 0.0
      %1363 = vmatprep.subr.mxu0 0.0
      %1364 = vmatpush1.msra.mxu0 0.0
      %1365 = vmatprep.subr.mxu0 0.0
      %1366 = vmatpush1.msra.mxu0 0.0
      %1367 = vmatprep.subr.mxu0 0.0
      %1368 = vmatpush1.msra.mxu0 0.0
      %1369 = vmatprep.subr.mxu0 0.0
      %1370 = vmatpush1.msra.mxu0 0.0
      %1371 = vmatprep.subr.mxu0 0.0
      %1372 = vmatpush1.msra.mxu0 0.0
      %1373 = vmatprep.subr.mxu0 0.0
      %1374 = vmatpush1.msra.mxu0 0.0
      %1375 = vmatprep.subr.mxu0 0.0
      %1376 = vmatpush1.msra.mxu0 0.0
      %1377 = vmatprep.subr.mxu0 0.0
      %1378 = vmatpush1.msra.mxu0 0.0
      %1379 = vmatprep.subr.mxu0 0.0
      %1380 = vmatpush1.msra.mxu0 0.0
      %1381 = vmatprep.subr.mxu0 0.0
      %1382 = vmatpush1.msra.mxu0 0.0
      %1383 = vmatprep.subr.mxu0 0.0
      %1384 = vmatpush1.msra.mxu0 0.0
      %1385 = vmatprep.subr.mxu0 0.0
      %1386 = vmatpush1.msra.mxu0 0.0
      %1387 = vmatprep.mubr.f32.mxu0 0.0
      %1388 = vmatmul.mubr.f32.gmra.mrb[0].mxu0 %v1226
      %v1389 = vpop.f32.mrb[0].mxu0
      %v1390 = vadd.f32 0.0, %v1389
      %v1391 = vpop.f32.mrb[0].mxu0
      %v1392 = vadd.f32 0.0, %v1391
      %1393 = vdwg.mxu0
      %1394 = vmatprep.subr.mxu0 %v1212
      %1395 = vmatpush1.msra.mxu0 %v1211
      %1396 = vmatprep.subr.mxu0 %v1244
      %1397 = vmatpush1.msra.mxu0 %v1241
      %1398 = vmatprep.subr.mxu0 0.0
      %1399 = vmatpush1.msra.mxu0 0.0
      %1400 = vmatprep.subr.mxu0 0.0
      %1401 = vmatpush1.msra.mxu0 0.0
      %1402 = vmatprep.subr.mxu0 0.0
      %1403 = vmatpush1.msra.mxu0 0.0
      %1404 = vmatprep.subr.mxu0 0.0
      %1405 = vmatpush1.msra.mxu0 0.0
      %1406 = vmatprep.subr.mxu0 0.0
      %1407 = vmatpush1.msra.mxu0 0.0
      %1408 = vmatprep.subr.mxu0 0.0
      %1409 = vmatpush1.msra.mxu0 0.0
      %1410 = vmatprep.subr.mxu0 0.0
      %1411 = vmatpush1.msra.mxu0 0.0
      %1412 = vmatprep.subr.mxu0 0.0
      %1413 = vmatpush1.msra.mxu0 0.0
      %1414 = vmatprep.subr.mxu0 0.0
      %1415 = vmatpush1.msra.mxu0 0.0
      %1416 = vmatprep.subr.mxu0 0.0
      %1417 = vmatpush1.msra.mxu0 0.0
      %1418 = vmatprep.subr.mxu0 0.0
      %1419 = vmatpush1.msra.mxu0 0.0
      %1420 = vmatprep.subr.mxu0 0.0
      %1421 = vmatpush1.msra.mxu0 0.0
      %1422 = vmatprep.subr.mxu0 0.0
      %1423 = vmatpush1.msra.mxu0 0.0
      %1424 = vmatprep.subr.mxu0 0.0
      %1425 = vmatpush1.msra.mxu0 0.0
      %1426 = vmatprep.subr.mxu0 0.0
      %1427 = vmatpush1.msra.mxu0 0.0
      %1428 = vmatprep.subr.mxu0 0.0
      %1429 = vmatpush1.msra.mxu0 0.0
      %1430 = vmatprep.subr.mxu0 0.0
      %1431 = vmatpush1.msra.mxu0 0.0
      %1432 = vmatprep.subr.mxu0 0.0
      %1433 = vmatpush1.msra.mxu0 0.0
      %1434 = vmatprep.subr.mxu0 0.0
      %1435 = vmatpush1.msra.mxu0 0.0
      %1436 = vmatprep.subr.mxu0 0.0
      %1437 = vmatpush1.msra.mxu0 0.0
      %1438 = vmatprep.subr.mxu0 0.0
      %1439 = vmatpush1.msra.mxu0 0.0
      %1440 = vmatprep.subr.mxu0 0.0
      %1441 = vmatpush1.msra.mxu0 0.0
      %1442 = vmatprep.subr.mxu0 0.0
      %1443 = vmatpush1.msra.mxu0 0.0
      %1444 = vmatprep.subr.mxu0 0.0
      %1445 = vmatpush1.msra.mxu0 0.0
      %1446 = vmatprep.subr.mxu0 0.0
      %1447 = vmatpush1.msra.mxu0 0.0
      %1448 = vmatprep.subr.mxu0 0.0
      %1449 = vmatpush1.msra.mxu0 0.0
      %1450 = vmatprep.subr.mxu0 0.0
      %1451 = vmatpush1.msra.mxu0 0.0
      %1452 = vmatprep.subr.mxu0 0.0
      %1453 = vmatpush1.msra.mxu0 0.0
      %1454 = vmatprep.subr.mxu0 0.0
      %1455 = vmatpush1.msra.mxu0 0.0
      %1456 = vmatprep.subr.mxu0 0.0
      %1457 = vmatpush1.msra.mxu0 0.0
      %1458 = vmatprep.mubr.f32.mxu0 0.0
      %1459 = vmatmul.mubr.f32.gmra.mrb[0].mxu0 %v1226
      %v1460 = vpop.f32.mrb[0].mxu0
      %v1461 = vadd.f32 0.0, %v1460
      %v1462 = vpop.f32.mrb[0].mxu0
      %v1463 = vadd.f32 0.0, %v1462
      %1464 = vdwg.mxu0
      %1465 = vmatprep.subr.mxu0 %v1214
      %1466 = vmatpush1.msra.mxu0 %v1213
      %1467 = vmatprep.subr.mxu0 %v1250
      %1468 = vmatpush1.msra.mxu0 %v1247
      %1469 = vmatprep.subr.mxu0 0.0
      %1470 = vmatpush1.msra.mxu0 0.0
      %1471 = vmatprep.subr.mxu0 0.0
      %1472 = vmatpush1.msra.mxu0 0.0
      %1473 = vmatprep.subr.mxu0 0.0
      %1474 = vmatpush1.msra.mxu0 0.0
      %1475 = vmatprep.subr.mxu0 0.0
      %1476 = vmatpush1.msra.mxu0 0.0
      %1477 = vmatprep.subr.mxu0 0.0
      %1478 = vmatpush1.msra.mxu0 0.0
      %1479 = vmatprep.subr.mxu0 0.0
      %1480 = vmatpush1.msra.mxu0 0.0
      %1481 = vmatprep.subr.mxu0 0.0
      %1482 = vmatpush1.msra.mxu0 0.0
      %1483 = vmatprep.subr.mxu0 0.0
      %1484 = vmatpush1.msra.mxu0 0.0
      %1485 = vmatprep.subr.mxu0 0.0
      %1486 = vmatpush1.msra.mxu0 0.0
      %1487 = vmatprep.subr.mxu0 0.0
      %1488 = vmatpush1.msra.mxu0 0.0
      %1489 = vmatprep.subr.mxu0 0.0
      %1490 = vmatpush1.msra.mxu0 0.0
      %1491 = vmatprep.subr.mxu0 0.0
      %1492 = vmatpush1.msra.mxu0 0.0
      %1493 = vmatprep.subr.mxu0 0.0
      %1494 = vmatpush1.msra.mxu0 0.0
      %1495 = vmatprep.subr.mxu0 0.0
      %1496 = vmatpush1.msra.mxu0 0.0
      %1497 = vmatprep.subr.mxu0 0.0
      %1498 = vmatpush1.msra.mxu0 0.0
      %1499 = vmatprep.subr.mxu0 0.0
      %1500 = vmatpush1.msra.mxu0 0.0
      %1501 = vmatprep.subr.mxu0 0.0
      %1502 = vmatpush1.msra.mxu0 0.0
      %1503 = vmatprep.subr.mxu0 0.0
      %1504 = vmatpush1.msra.mxu0 0.0
      %1505 = vmatprep.subr.mxu0 0.0
      %1506 = vmatpush1.msra.mxu0 0.0
      %1507 = vmatprep.subr.mxu0 0.0
      %1508 = vmatpush1.msra.mxu0 0.0
      %1509 = vmatprep.subr.mxu0 0.0
      %1510 = vmatpush1.msra.mxu0 0.0
      %1511 = vmatprep.subr.mxu0 0.0
      %1512 = vmatpush1.msra.mxu0 0.0
      %1513 = vmatprep.subr.mxu0 0.0
      %1514 = vmatpush1.msra.mxu0 0.0
      %1515 = vmatprep.subr.mxu0 0.0
      %1516 = vmatpush1.msra.mxu0 0.0
      %1517 = vmatprep.subr.mxu0 0.0
      %1518 = vmatpush1.msra.mxu0 0.0
      %1519 = vmatprep.subr.mxu0 0.0
      %1520 = vmatpush1.msra.mxu0 0.0
      %1521 = vmatprep.subr.mxu0 0.0
      %1522 = vmatpush1.msra.mxu0 0.0
      %1523 = vmatprep.subr.mxu0 0.0
      %1524 = vmatpush1.msra.mxu0 0.0
      %1525 = vmatprep.subr.mxu0 0.0
      %1526 = vmatpush1.msra.mxu0 0.0
      %1527 = vmatprep.subr.mxu0 0.0
      %1528 = vmatpush1.msra.mxu0 0.0
      %1529 = vmatprep.mubr.f32.mxu0 0.0
      %1530 = vmatmul.mubr.f32.gmra.mrb[0].mxu0 %v1226
      %v1531 = vpop.f32.mrb[0].mxu0
      %v1532 = vadd.f32 0.0, %v1531
      %v1533 = vpop.f32.mrb[0].mxu0
      %v1534 = vadd.f32 0.0, %v1533
      %1535 = vdwg.mxu0
      %v1536 = vmul.f32 %v1319, 0.1
      %v1537 = vmul.f32 %v1321, 0.1
      %v1538 = vmul.f32 %v1390, 0.1
      %v1539 = vmul.f32 %v1392, 0.1
      %v1540 = vmul.f32 %v1461, 0.1
      %v1541 = vmul.f32 %v1463, 0.1
      %v1542 = vmul.f32 %v1532, 0.1
      %v1543 = vmul.f32 %v1534, 0.1
      %v1544 = vmax.f32 %v1319, %v1536
      %v1545 = vmax.f32 %v1321, %v1537
      %v1546 = vmax.f32 %v1390, %v1538
      %v1547 = vmax.f32 %v1392, %v1539
      %v1548 = vmax.f32 %v1461, %v1540
      %v1549 = vmax.f32 %v1463, %v1541
      %v1550 = vmax.f32 %v1532, %v1542
      %v1551 = vmax.f32 %v1534, %v1543
      %1552 = vrot.lane.b32.xlu0 %v1544, 33
      %v1553 = vpop.permute.xlu0 %1552
      %1554 = vrot.lane.b32.xlu0 %v1545, 33
      %v1555 = vpop.permute.xlu0 %1554
      %1556 = vrot.lane.b32.xlu0 %v1546, 33
      %v1557 = vpop.permute.xlu0 %1556
      %1558 = vrot.lane.b32.xlu0 %v1547, 33
      %v1559 = vpop.permute.xlu0 %1558
      %1560 = vrot.lane.b32.xlu0 %v1548, 33
      %v1561 = vpop.permute.xlu0 %1560
      %1562 = vrot.lane.b32.xlu0 %v1549, 33
      %v1563 = vpop.permute.xlu0 %1562
      %1564 = vrot.lane.b32.xlu0 %v1550, 33
      %v1565 = vpop.permute.xlu0 %1564
      %1566 = vrot.lane.b32.xlu0 %v1551, 33
      %v1567 = vpop.permute.xlu0 %1566
      %v1568 = vsel %vm717, %v1565, %v1567
      %v1569 = vsel %vm717, %v1563, %v1565
      %v1570 = vsel %vm717, %v1561, %v1563
      %v1571 = vsel %vm717, %v1559, %v1561
      %v1572 = vsel %vm717, %v1557, %v1559
      %v1573 = vsel %vm717, %v1555, %v1557
      %v1574 = vsel %vm717, %v1553, %v1555
      %v1575 = vsel %vm717, %v1567, %v1553
      %v1576 = vlaneseq
      %v1577 = vshrl.u32 %v1576, 7
      %v1578 = vsub.s32 0, %v1577
      %v1579 = vrot.slane %v627, %v1578
      %v1580 = vlaneseq
      %v1581 = vshrl.u32 %v1580, 7
      %v1582 = vsub.s32 0, %v1581
      %v1583 = vrot.slane %v628, %v1582
      %v1584 = vlaneseq
      %v1585 = vshrl.u32 %v1584, 7
      %v1586 = vsub.s32 0, %v1585
      %v1587 = vrot.slane %v629, %v1586
      %v1588 = vlaneseq
      %v1589 = vshrl.u32 %v1588, 7
      %v1590 = vsub.s32 0, %v1589
      %v1591 = vrot.slane %v630, %v1590
      %v1592 = vlaneseq
      %v1593 = vshrl.u32 %v1592, 7
      %v1594 = vsub.s32 0, %v1593
      %v1595 = vrot.slane %v631, %v1594
      %v1596 = vlaneseq
      %v1597 = vshrl.u32 %v1596, 7
      %v1598 = vsub.s32 0, %v1597
      %v1599 = vrot.slane %v632, %v1598
      %v1600 = vlaneseq
      %v1601 = vshrl.u32 %v1600, 7
      %v1602 = vsub.s32 0, %v1601
      %v1603 = vrot.slane %v633, %v1602
      %v1604 = vlaneseq
      %v1605 = vshrl.u32 %v1604, 7
      %v1606 = vsub.s32 0, %v1605
      %v1607 = vrot.slane %v634, %v1606
      %v1608 = vmul.f32 %v1575, %v1579
      %v1609 = vmul.f32 %v1574, %v1583
      %v1610 = vmul.f32 %v1573, %v1587
      %v1611 = vmul.f32 %v1572, %v1591
      %v1612 = vmul.f32 %v1571, %v1595
      %v1613 = vmul.f32 %v1570, %v1599
      %v1614 = vmul.f32 %v1569, %v1603
      %v1615 = vmul.f32 %v1568, %v1607
      %1616 = vrot.lane.b32.xlu0 %v1544, 32
      %v1617 = vpop.permute.xlu0 %1616
      %1618 = vrot.lane.b32.xlu0 %v1545, 32
      %v1619 = vpop.permute.xlu0 %1618
      %1620 = vrot.lane.b32.xlu0 %v1546, 32
      %v1621 = vpop.permute.xlu0 %1620
      %1622 = vrot.lane.b32.xlu0 %v1547, 32
      %v1623 = vpop.permute.xlu0 %1622
      %1624 = vrot.lane.b32.xlu0 %v1548, 32
      %v1625 = vpop.permute.xlu0 %1624
      %1626 = vrot.lane.b32.xlu0 %v1549, 32
      %v1627 = vpop.permute.xlu0 %1626
      %1628 = vrot.lane.b32.xlu0 %v1550, 32
      %v1629 = vpop.permute.xlu0 %1628
      %1630 = vrot.lane.b32.xlu0 %v1551, 32
      %v1631 = vpop.permute.xlu0 %1630
      %v1632 = vsel %vm790, %v1629, %v1631
      %v1633 = vsel %vm790, %v1627, %v1629
      %v1634 = vsel %vm790, %v1625, %v1627
      %v1635 = vsel %vm790, %v1623, %v1625
      %v1636 = vsel %vm790, %v1621, %v1623
      %v1637 = vsel %vm790, %v1619, %v1621
      %v1638 = vsel %vm790, %v1617, %v1619
      %v1639 = vsel %vm790, %v1631, %v1617
      %v1640 = vlaneseq
      %v1641 = vshrl.u32 %v1640, 7
      %v1642 = vsub.s32 1, %v1641
      %v1643 = vrot.slane %v627, %v1642
      %v1644 = vlaneseq
      %v1645 = vshrl.u32 %v1644, 7
      %v1646 = vsub.s32 1, %v1645
      %v1647 = vrot.slane %v628, %v1646
      %v1648 = vlaneseq
      %v1649 = vshrl.u32 %v1648, 7
      %v1650 = vsub.s32 1, %v1649
      %v1651 = vrot.slane %v629, %v1650
      %v1652 = vlaneseq
      %v1653 = vshrl.u32 %v1652, 7
      %v1654 = vsub.s32 1, %v1653
      %v1655 = vrot.slane %v630, %v1654
      %v1656 = vlaneseq
      %v1657 = vshrl.u32 %v1656, 7
      %v1658 = vsub.s32 1, %v1657
      %v1659 = vrot.slane %v631, %v1658
      %v1660 = vlaneseq
      %v1661 = vshrl.u32 %v1660, 7
      %v1662 = vsub.s32 1, %v1661
      %v1663 = vrot.slane %v632, %v1662
      %v1664 = vlaneseq
      %v1665 = vshrl.u32 %v1664, 7
      %v1666 = vsub.s32 1, %v1665
      %v1667 = vrot.slane %v633, %v1666
      %v1668 = vlaneseq
      %v1669 = vshrl.u32 %v1668, 7
      %v1670 = vsub.s32 1, %v1669
      %v1671 = vrot.slane %v634, %v1670
      %v1672 = vmul.f32 %v1639, %v1643
      %v1673 = vmul.f32 %v1638, %v1647
      %v1674 = vmul.f32 %v1637, %v1651
      %v1675 = vmul.f32 %v1636, %v1655
      %v1676 = vmul.f32 %v1635, %v1659
      %v1677 = vmul.f32 %v1634, %v1663
      %v1678 = vmul.f32 %v1633, %v1667
      %v1679 = vmul.f32 %v1632, %v1671
      %1680 = vrot.lane.b32.xlu0 %v1544, 31
      %v1681 = vpop.permute.xlu0 %1680
      %1682 = vrot.lane.b32.xlu0 %v1545, 31
      %v1683 = vpop.permute.xlu0 %1682
      %1684 = vrot.lane.b32.xlu0 %v1546, 31
      %v1685 = vpop.permute.xlu0 %1684
      %1686 = vrot.lane.b32.xlu0 %v1547, 31
      %v1687 = vpop.permute.xlu0 %1686
      %1688 = vrot.lane.b32.xlu0 %v1548, 31
      %v1689 = vpop.permute.xlu0 %1688
      %1690 = vrot.lane.b32.xlu0 %v1549, 31
      %v1691 = vpop.permute.xlu0 %1690
      %1692 = vrot.lane.b32.xlu0 %v1550, 31
      %v1693 = vpop.permute.xlu0 %1692
      %1694 = vrot.lane.b32.xlu0 %v1551, 31
      %v1695 = vpop.permute.xlu0 %1694
      %vm1696 = vcmp.lt.s32.totalorder %v716, 31
      %v1697 = vsel %vm1696, %v1693, %v1695
      %v1698 = vsel %vm1696, %v1691, %v1693
      %v1699 = vsel %vm1696, %v1689, %v1691
      %v1700 = vsel %vm1696, %v1687, %v1689
      %v1701 = vsel %vm1696, %v1685, %v1687
      %v1702 = vsel %vm1696, %v1683, %v1685
      %v1703 = vsel %vm1696, %v1681, %v1683
      %v1704 = vsel %vm1696, %v1695, %v1681
      %v1705 = vlaneseq
      %v1706 = vshrl.u32 %v1705, 7
      %v1707 = vsub.s32 2, %v1706
      %v1708 = vrot.slane %v627, %v1707
      %v1709 = vlaneseq
      %v1710 = vshrl.u32 %v1709, 7
      %v1711 = vsub.s32 2, %v1710
      %v1712 = vrot.slane %v628, %v1711
      %v1713 = vlaneseq
      %v1714 = vshrl.u32 %v1713, 7
      %v1715 = vsub.s32 2, %v1714
      %v1716 = vrot.slane %v629, %v1715
      %v1717 = vlaneseq
      %v1718 = vshrl.u32 %v1717, 7
      %v1719 = vsub.s32 2, %v1718
      %v1720 = vrot.slane %v630, %v1719
      %v1721 = vlaneseq
      %v1722 = vshrl.u32 %v1721, 7
      %v1723 = vsub.s32 2, %v1722
      %v1724 = vrot.slane %v631, %v1723
      %v1725 = vlaneseq
      %v1726 = vshrl.u32 %v1725, 7
      %v1727 = vsub.s32 2, %v1726
      %v1728 = vrot.slane %v632, %v1727
      %v1729 = vlaneseq
      %v1730 = vshrl.u32 %v1729, 7
      %v1731 = vsub.s32 2, %v1730
      %v1732 = vrot.slane %v633, %v1731
      %v1733 = vlaneseq
      %v1734 = vshrl.u32 %v1733, 7
      %v1735 = vsub.s32 2, %v1734
      %v1736 = vrot.slane %v634, %v1735
      %v1737 = vmul.f32 %v1704, %v1708
      %v1738 = vmul.f32 %v1703, %v1712
      %v1739 = vmul.f32 %v1702, %v1716
      %v1740 = vmul.f32 %v1701, %v1720
      %v1741 = vmul.f32 %v1700, %v1724
      %v1742 = vmul.f32 %v1699, %v1728
      %v1743 = vmul.f32 %v1698, %v1732
      %v1744 = vmul.f32 %v1697, %v1736
      %1745 = vrot.lane.b32.xlu0 %v1544, 1
      %v1746 = vpop.permute.xlu0 %1745
      %1747 = vrot.lane.b32.xlu0 %v1545, 1
      %v1748 = vpop.permute.xlu0 %1747
      %1749 = vrot.lane.b32.xlu0 %v1546, 1
      %v1750 = vpop.permute.xlu0 %1749
      %1751 = vrot.lane.b32.xlu0 %v1547, 1
      %v1752 = vpop.permute.xlu0 %1751
      %1753 = vrot.lane.b32.xlu0 %v1548, 1
      %v1754 = vpop.permute.xlu0 %1753
      %1755 = vrot.lane.b32.xlu0 %v1549, 1
      %v1756 = vpop.permute.xlu0 %1755
      %1757 = vrot.lane.b32.xlu0 %v1550, 1
      %v1758 = vpop.permute.xlu0 %1757
      %1759 = vrot.lane.b32.xlu0 %v1551, 1
      %v1760 = vpop.permute.xlu0 %1759
      %v1761 = vsel %vm935, %v1758, %v1760
      %v1762 = vsel %vm935, %v1756, %v1758
      %v1763 = vsel %vm935, %v1754, %v1756
      %v1764 = vsel %vm935, %v1752, %v1754
      %v1765 = vsel %vm935, %v1750, %v1752
      %v1766 = vsel %vm935, %v1748, %v1750
      %v1767 = vsel %vm935, %v1746, %v1748
      %v1768 = vsel %vm935, %v1760, %v1746
      %v1769 = vlaneseq
      %v1770 = vshrl.u32 %v1769, 7
      %v1771 = vsub.s32 3, %v1770
      %v1772 = vrot.slane %v627, %v1771
      %v1773 = vlaneseq
      %v1774 = vshrl.u32 %v1773, 7
      %v1775 = vsub.s32 3, %v1774
      %v1776 = vrot.slane %v628, %v1775
      %v1777 = vlaneseq
      %v1778 = vshrl.u32 %v1777, 7
      %v1779 = vsub.s32 3, %v1778
      %v1780 = vrot.slane %v629, %v1779
      %v1781 = vlaneseq
      %v1782 = vshrl.u32 %v1781, 7
      %v1783 = vsub.s32 3, %v1782
      %v1784 = vrot.slane %v630, %v1783
      %v1785 = vlaneseq
      %v1786 = vshrl.u32 %v1785, 7
      %v1787 = vsub.s32 3, %v1786
      %v1788 = vrot.slane %v631, %v1787
      %v1789 = vlaneseq
      %v1790 = vshrl.u32 %v1789, 7
      %v1791 = vsub.s32 3, %v1790
      %v1792 = vrot.slane %v632, %v1791
      %v1793 = vlaneseq
      %v1794 = vshrl.u32 %v1793, 7
      %v1795 = vsub.s32 3, %v1794
      %v1796 = vrot.slane %v633, %v1795
      %v1797 = vlaneseq
      %v1798 = vshrl.u32 %v1797, 7
      %v1799 = vsub.s32 3, %v1798
      %v1800 = vrot.slane %v634, %v1799
      %v1801 = vmul.f32 %v1768, %v1772
      %v1802 = vmul.f32 %v1767, %v1776
      %v1803 = vmul.f32 %v1766, %v1780
      %v1804 = vmul.f32 %v1765, %v1784
      %v1805 = vmul.f32 %v1764, %v1788
      %v1806 = vmul.f32 %v1763, %v1792
      %v1807 = vmul.f32 %v1762, %v1796
      %v1808 = vmul.f32 %v1761, %v1800
      %1809 = vrot.lane.b32.xlu0 %v1544, 127
      %v1810 = vpop.permute.xlu0 %1809
      %1811 = vrot.lane.b32.xlu0 %v1545, 127
      %v1812 = vpop.permute.xlu0 %1811
      %1813 = vrot.lane.b32.xlu0 %v1546, 127
      %v1814 = vpop.permute.xlu0 %1813
      %1815 = vrot.lane.b32.xlu0 %v1547, 127
      %v1816 = vpop.permute.xlu0 %1815
      %1817 = vrot.lane.b32.xlu0 %v1548, 127
      %v1818 = vpop.permute.xlu0 %1817
      %1819 = vrot.lane.b32.xlu0 %v1549, 127
      %v1820 = vpop.permute.xlu0 %1819
      %1821 = vrot.lane.b32.xlu0 %v1550, 127
      %v1822 = vpop.permute.xlu0 %1821
      %1823 = vrot.lane.b32.xlu0 %v1551, 127
      %v1824 = vpop.permute.xlu0 %1823
      %vm1825 = vcmp.lt.s32.totalorder %v716, 127
      %v1826 = vsel %vm1825, %v1822, %v1824
      %v1827 = vsel %vm1825, %v1820, %v1822
      %v1828 = vsel %vm1825, %v1818, %v1820
      %v1829 = vsel %vm1825, %v1816, %v1818
      %v1830 = vsel %vm1825, %v1814, %v1816
      %v1831 = vsel %vm1825, %v1812, %v1814
      %v1832 = vsel %vm1825, %v1810, %v1812
      %v1833 = vsel %vm1825, %v1824, %v1810
      %v1834 = vlaneseq
      %v1835 = vshrl.u32 %v1834, 7
      %v1836 = vsub.s32 5, %v1835
      %v1837 = vrot.slane %v627, %v1836
      %v1838 = vlaneseq
      %v1839 = vshrl.u32 %v1838, 7
      %v1840 = vsub.s32 5, %v1839
      %v1841 = vrot.slane %v628, %v1840
      %v1842 = vlaneseq
      %v1843 = vshrl.u32 %v1842, 7
      %v1844 = vsub.s32 5, %v1843
      %v1845 = vrot.slane %v629, %v1844
      %v1846 = vlaneseq
      %v1847 = vshrl.u32 %v1846, 7
      %v1848 = vsub.s32 5, %v1847
      %v1849 = vrot.slane %v630, %v1848
      %v1850 = vlaneseq
      %v1851 = vshrl.u32 %v1850, 7
      %v1852 = vsub.s32 5, %v1851
      %v1853 = vrot.slane %v631, %v1852
      %v1854 = vlaneseq
      %v1855 = vshrl.u32 %v1854, 7
      %v1856 = vsub.s32 5, %v1855
      %v1857 = vrot.slane %v632, %v1856
      %v1858 = vlaneseq
      %v1859 = vshrl.u32 %v1858, 7
      %v1860 = vsub.s32 5, %v1859
      %v1861 = vrot.slane %v633, %v1860
      %v1862 = vlaneseq
      %v1863 = vshrl.u32 %v1862, 7
      %v1864 = vsub.s32 5, %v1863
      %v1865 = vrot.slane %v634, %v1864
      %v1866 = vmul.f32 %v1832, %v1837
      %v1867 = vmul.f32 %v1831, %v1841
      %v1868 = vmul.f32 %v1830, %v1845
      %v1869 = vmul.f32 %v1829, %v1849
      %v1870 = vmul.f32 %v1828, %v1853
      %v1871 = vmul.f32 %v1827, %v1857
      %v1872 = vmul.f32 %v1826, %v1861
      %v1873 = vmul.f32 %v1833, %v1865
      %1874 = vrot.lane.b32.xlu0 %v1544, 97
      %v1875 = vpop.permute.xlu0 %1874
      %1876 = vrot.lane.b32.xlu0 %v1545, 97
      %v1877 = vpop.permute.xlu0 %1876
      %1878 = vrot.lane.b32.xlu0 %v1546, 97
      %v1879 = vpop.permute.xlu0 %1878
      %1880 = vrot.lane.b32.xlu0 %v1547, 97
      %v1881 = vpop.permute.xlu0 %1880
      %1882 = vrot.lane.b32.xlu0 %v1548, 97
      %v1883 = vpop.permute.xlu0 %1882
      %1884 = vrot.lane.b32.xlu0 %v1549, 97
      %v1885 = vpop.permute.xlu0 %1884
      %1886 = vrot.lane.b32.xlu0 %v1550, 97
      %v1887 = vpop.permute.xlu0 %1886
      %1888 = vrot.lane.b32.xlu0 %v1551, 97
      %v1889 = vpop.permute.xlu0 %1888
      %vm1890 = vcmp.lt.s32.totalorder %v716, 97
      %v1891 = vsel %vm1890, %v1887, %v1889
      %v1892 = vsel %vm1890, %v1885, %v1887
      %v1893 = vsel %vm1890, %v1883, %v1885
      %v1894 = vsel %vm1890, %v1881, %v1883
      %v1895 = vsel %vm1890, %v1879, %v1881
      %v1896 = vsel %vm1890, %v1877, %v1879
      %v1897 = vsel %vm1890, %v1875, %v1877
      %v1898 = vsel %vm1890, %v1889, %v1875
      %v1899 = vlaneseq
      %v1900 = vshrl.u32 %v1899, 7
      %v1901 = vsub.s32 6, %v1900
      %v1902 = vrot.slane %v627, %v1901
      %v1903 = vlaneseq
      %v1904 = vshrl.u32 %v1903, 7
      %v1905 = vsub.s32 6, %v1904
      %v1906 = vrot.slane %v628, %v1905
      %v1907 = vlaneseq
      %v1908 = vshrl.u32 %v1907, 7
      %v1909 = vsub.s32 6, %v1908
      %v1910 = vrot.slane %v629, %v1909
      %v1911 = vlaneseq
      %v1912 = vshrl.u32 %v1911, 7
      %v1913 = vsub.s32 6, %v1912
      %v1914 = vrot.slane %v630, %v1913
      %v1915 = vlaneseq
      %v1916 = vshrl.u32 %v1915, 7
      %v1917 = vsub.s32 6, %v1916
      %v1918 = vrot.slane %v631, %v1917
      %v1919 = vlaneseq
      %v1920 = vshrl.u32 %v1919, 7
      %v1921 = vsub.s32 6, %v1920
      %v1922 = vrot.slane %v632, %v1921
      %v1923 = vlaneseq
      %v1924 = vshrl.u32 %v1923, 7
      %v1925 = vsub.s32 6, %v1924
      %v1926 = vrot.slane %v633, %v1925
      %v1927 = vlaneseq
      %v1928 = vshrl.u32 %v1927, 7
      %v1929 = vsub.s32 6, %v1928
      %v1930 = vrot.slane %v634, %v1929
      %v1931 = vmul.f32 %v1897, %v1902
      %v1932 = vmul.f32 %v1896, %v1906
      %v1933 = vmul.f32 %v1895, %v1910
      %v1934 = vmul.f32 %v1894, %v1914
      %v1935 = vmul.f32 %v1893, %v1918
      %v1936 = vmul.f32 %v1892, %v1922
      %v1937 = vmul.f32 %v1891, %v1926
      %v1938 = vmul.f32 %v1898, %v1930
      %1939 = vrot.lane.b32.xlu0 %v1544, 96
      %v1940 = vpop.permute.xlu0 %1939
      %1941 = vrot.lane.b32.xlu0 %v1545, 96
      %v1942 = vpop.permute.xlu0 %1941
      %1943 = vrot.lane.b32.xlu0 %v1546, 96
      %v1944 = vpop.permute.xlu0 %1943
      %1945 = vrot.lane.b32.xlu0 %v1547, 96
      %v1946 = vpop.permute.xlu0 %1945
      %1947 = vrot.lane.b32.xlu0 %v1548, 96
      %v1948 = vpop.permute.xlu0 %1947
      %1949 = vrot.lane.b32.xlu0 %v1549, 96
      %v1950 = vpop.permute.xlu0 %1949
      %1951 = vrot.lane.b32.xlu0 %v1550, 96
      %v1952 = vpop.permute.xlu0 %1951
      %1953 = vrot.lane.b32.xlu0 %v1551, 96
      %v1954 = vpop.permute.xlu0 %1953
      %vm1955 = vcmp.lt.s32.totalorder %v716, 96
      %v1956 = vsel %vm1955, %v1952, %v1954
      %v1957 = vsel %vm1955, %v1950, %v1952
      %v1958 = vsel %vm1955, %v1948, %v1950
      %v1959 = vsel %vm1955, %v1946, %v1948
      %v1960 = vsel %vm1955, %v1944, %v1946
      %v1961 = vsel %vm1955, %v1942, %v1944
      %v1962 = vsel %vm1955, %v1940, %v1942
      %v1963 = vsel %vm1955, %v1954, %v1940
      %v1964 = vlaneseq
      %v1965 = vshrl.u32 %v1964, 7
      %v1966 = vsub.s32 7, %v1965
      %v1967 = vrot.slane %v627, %v1966
      %v1968 = vlaneseq
      %v1969 = vshrl.u32 %v1968, 7
      %v1970 = vsub.s32 7, %v1969
      %v1971 = vrot.slane %v628, %v1970
      %v1972 = vlaneseq
      %v1973 = vshrl.u32 %v1972, 7
      %v1974 = vsub.s32 7, %v1973
      %v1975 = vrot.slane %v629, %v1974
      %v1976 = vlaneseq
      %v1977 = vshrl.u32 %v1976, 7
      %v1978 = vsub.s32 7, %v1977
      %v1979 = vrot.slane %v630, %v1978
      %v1980 = vlaneseq
      %v1981 = vshrl.u32 %v1980, 7
      %v1982 = vsub.s32 7, %v1981
      %v1983 = vrot.slane %v631, %v1982
      %v1984 = vlaneseq
      %v1985 = vshrl.u32 %v1984, 7
      %v1986 = vsub.s32 7, %v1985
      %v1987 = vrot.slane %v632, %v1986
      %v1988 = vlaneseq
      %v1989 = vshrl.u32 %v1988, 7
      %v1990 = vsub.s32 7, %v1989
      %v1991 = vrot.slane %v633, %v1990
      %v1992 = vlaneseq
      %v1993 = vshrl.u32 %v1992, 7
      %v1994 = vsub.s32 7, %v1993
      %v1995 = vrot.slane %v634, %v1994
      %v1996 = vmul.f32 %v1962, %v1967
      %v1997 = vmul.f32 %v1961, %v1971
      %v1998 = vmul.f32 %v1960, %v1975
      %v1999 = vmul.f32 %v1959, %v1979
      %v2000 = vmul.f32 %v1958, %v1983
      %v2001 = vmul.f32 %v1957, %v1987
      %v2002 = vmul.f32 %v1956, %v1991
      %v2003 = vmul.f32 %v1963, %v1995
      %2004 = vrot.lane.b32.xlu0 %v1544, 95
      %v2005 = vpop.permute.xlu0 %2004
      %2006 = vrot.lane.b32.xlu0 %v1545, 95
      %v2007 = vpop.permute.xlu0 %2006
      %2008 = vrot.lane.b32.xlu0 %v1546, 95
      %v2009 = vpop.permute.xlu0 %2008
      %2010 = vrot.lane.b32.xlu0 %v1547, 95
      %v2011 = vpop.permute.xlu0 %2010
      %2012 = vrot.lane.b32.xlu0 %v1548, 95
      %v2013 = vpop.permute.xlu0 %2012
      %2014 = vrot.lane.b32.xlu0 %v1549, 95
      %v2015 = vpop.permute.xlu0 %2014
      %2016 = vrot.lane.b32.xlu0 %v1550, 95
      %v2017 = vpop.permute.xlu0 %2016
      %2018 = vrot.lane.b32.xlu0 %v1551, 95
      %v2019 = vpop.permute.xlu0 %2018
      %vm2020 = vcmp.lt.s32.totalorder %v716, 95
      %v2021 = vsel %vm2020, %v2017, %v2019
      %v2022 = vsel %vm2020, %v2015, %v2017
      %v2023 = vsel %vm2020, %v2013, %v2015
      %v2024 = vsel %vm2020, %v2011, %v2013
      %v2025 = vsel %vm2020, %v2009, %v2011
      %v2026 = vsel %vm2020, %v2007, %v2009
      %v2027 = vsel %vm2020, %v2005, %v2007
      %v2028 = vsel %vm2020, %v2019, %v2005
      %v2029 = vlaneseq
      %v2030 = vshrl.u32 %v2029, 7
      %v2031 = vsub.s32 0, %v2030
      %v2032 = vrot.slane %v635, %v2031
      %v2033 = vlaneseq
      %v2034 = vshrl.u32 %v2033, 7
      %v2035 = vsub.s32 0, %v2034
      %v2036 = vrot.slane %v636, %v2035
      %v2037 = vlaneseq
      %v2038 = vshrl.u32 %v2037, 7
      %v2039 = vsub.s32 0, %v2038
      %v2040 = vrot.slane %v637, %v2039
      %v2041 = vlaneseq
      %v2042 = vshrl.u32 %v2041, 7
      %v2043 = vsub.s32 0, %v2042
      %v2044 = vrot.slane %v638, %v2043
      %v2045 = vlaneseq
      %v2046 = vshrl.u32 %v2045, 7
      %v2047 = vsub.s32 0, %v2046
      %v2048 = vrot.slane %v639, %v2047
      %v2049 = vlaneseq
      %v2050 = vshrl.u32 %v2049, 7
      %v2051 = vsub.s32 0, %v2050
      %v2052 = vrot.slane %v640, %v2051
      %v2053 = vlaneseq
      %v2054 = vshrl.u32 %v2053, 7
      %v2055 = vsub.s32 0, %v2054
      %v2056 = vrot.slane %v641, %v2055
      %v2057 = vlaneseq
      %v2058 = vshrl.u32 %v2057, 7
      %v2059 = vsub.s32 0, %v2058
      %v2060 = vrot.slane %v642, %v2059
      %v2061 = vmul.f32 %v2027, %v2032
      %v2062 = vmul.f32 %v2026, %v2036
      %v2063 = vmul.f32 %v2025, %v2040
      %v2064 = vmul.f32 %v2024, %v2044
      %v2065 = vmul.f32 %v2023, %v2048
      %v2066 = vmul.f32 %v2022, %v2052
      %v2067 = vmul.f32 %v2021, %v2056
      %v2068 = vmul.f32 %v2028, %v2060
      %v2077 = vrot.slane %v1672, 4
      %v2078 = vrot.slane %v1673, 4
      %v2079 = vrot.slane %v1674, 4
      %v2080 = vrot.slane %v1675, 4
      %v2081 = vrot.slane %v1676, 4
      %v2082 = vrot.slane %v1677, 4
      %v2083 = vrot.slane %v1678, 4
      %v2084 = vrot.slane %v1679, 4
      %v2101 = vrot.slane %v1801, 4
      %v2102 = vrot.slane %v1802, 4
      %v2103 = vrot.slane %v1803, 4
      %v2104 = vrot.slane %v1804, 4
      %v2105 = vrot.slane %v1805, 4
      %v2106 = vrot.slane %v1806, 4
      %v2107 = vrot.slane %v1807, 4
      %v2108 = vrot.slane %v1808, 4
      %v2125 = vrot.slane %v1866, 4
      %v2126 = vrot.slane %v1867, 4
      %v2127 = vrot.slane %v1868, 4
      %v2128 = vrot.slane %v1869, 4
      %v2129 = vrot.slane %v1870, 4
      %v2130 = vrot.slane %v1871, 4
      %v2131 = vrot.slane %v1872, 4
      %v2132 = vrot.slane %v1873, 4
      %v2149 = vrot.slane %v1996, 4
      %v2150 = vrot.slane %v1997, 4
      %v2151 = vrot.slane %v1998, 4
      %v2152 = vrot.slane %v1999, 4
      %v2153 = vrot.slane %v2000, 4
      %v2154 = vrot.slane %v2001, 4
      %v2155 = vrot.slane %v2002, 4
      %v2156 = vrot.slane %v2003, 4
      %v2165 = vsel %vm1179, %v1608, %v2077
      %v2166 = vsel %vm1179, %v1609, %v2078
      %v2167 = vsel %vm1179, %v1610, %v2079
      %v2168 = vsel %vm1179, %v1611, %v2080
      %v2169 = vsel %vm1179, %v1612, %v2081
      %v2170 = vsel %vm1179, %v1613, %v2082
      %v2171 = vsel %vm1179, %v1614, %v2083
      %v2172 = vsel %vm1179, %v1615, %v2084
      %v2173 = vsel %vm1179, %v1737, %v2101
      %v2174 = vsel %vm1179, %v1738, %v2102
      %v2175 = vsel %vm1179, %v1739, %v2103
      %v2176 = vsel %vm1179, %v1740, %v2104
      %v2177 = vsel %vm1179, %v1741, %v2105
      %v2178 = vsel %vm1179, %v1742, %v2106
      %v2179 = vsel %vm1179, %v1743, %v2107
      %v2180 = vsel %vm1179, %v1744, %v2108
      %v2181 = vsel %vm1179, %v1544, %v2125
      %v2182 = vsel %vm1179, %v1545, %v2126
      %v2183 = vsel %vm1179, %v1546, %v2127
      %v2184 = vsel %vm1179, %v1547, %v2128
      %v2185 = vsel %vm1179, %v1548, %v2129
      %v2186 = vsel %vm1179, %v1549, %v2130
      %v2187 = vsel %vm1179, %v1550, %v2131
      %v2188 = vsel %vm1179, %v1551, %v2132
      %v2189 = vsel %vm1179, %v1931, %v2149
      %v2190 = vsel %vm1179, %v1932, %v2150
      %v2191 = vsel %vm1179, %v1933, %v2151
      %v2192 = vsel %vm1179, %v1934, %v2152
      %v2193 = vsel %vm1179, %v1935, %v2153
      %v2194 = vsel %vm1179, %v1936, %v2154
      %v2195 = vsel %vm1179, %v1937, %v2155
      %v2196 = vsel %vm1179, %v1938, %v2156
      %v2197 = vsel %vm1179, %v2061, 1.0
      %v2198 = vsel %vm1179, %v2062, 1.0
      %v2199 = vsel %vm1179, %v2063, 1.0
      %v2200 = vsel %vm1179, %v2064, 1.0
      %v2201 = vsel %vm1179, %v2065, 1.0
      %v2202 = vsel %vm1179, %v2066, 1.0
      %v2203 = vsel %vm1179, %v2067, 1.0
      %v2204 = vsel %vm1179, %v2068, 1.0
      %v2205 = vld [vmem:[%s11] sm:$0xf]
      %v2214 = vrot.slane %v1319, 4
      %v2215 = vrot.slane %v1321, 4
      %v2216 = vrot.slane %v1390, 4
      %v2217 = vrot.slane %v1392, 4
      %v2218 = vrot.slane %v1461, 4
      %v2219 = vrot.slane %v1463, 4
      %v2220 = vrot.slane %v1532, 4
      %v2221 = vrot.slane %v1534, 4
      %vm2230 = vcmask 302080
      %v2232 = vsel %vm2230, %v2205, 0
      %v2235 = vsel %vm1188, %v2197, 0
      %v2238 = vsel %vm1188, %v2198, 0
      %v2241 = vsel %vm1188, %v2199, 0
      %v2244 = vsel %vm1188, %v2200, 0
      %v2247 = vsel %vm1188, %v2201, 0
      %v2250 = vsel %vm1188, %v2202, 0
      %v2253 = vsel %vm1188, %v2203, 0
      %v2256 = vsel %vm1188, %v2204, 0
      %2258 = vmatprep.subr.mxu0 %v2166
      %2259 = vmatpush1.msra.mxu0 %v2165
      %2260 = vmatprep.subr.mxu0 %v2174
      %2261 = vmatpush1.msra.mxu0 %v2173
      %2262 = vmatprep.subr.mxu0 %v2182
      %2263 = vmatpush1.msra.mxu0 %v2181
      %2264 = vmatprep.subr.mxu0 %v2190
      %2265 = vmatpush1.msra.mxu0 %v2189
      %2266 = vmatprep.subr.mxu0 %v2238
      %2267 = vmatpush1.msra.mxu0 %v2235
      %2268 = vmatprep.subr.mxu0 0.0
      %2269 = vmatpush1.msra.mxu0 0.0
      %2270 = vmatprep.subr.mxu0 0.0
      %2271 = vmatpush1.msra.mxu0 0.0
      %2272 = vmatprep.subr.mxu0 0.0
      %2273 = vmatpush1.msra.mxu0 0.0
      %2274 = vmatprep.subr.mxu0 0.0
      %2275 = vmatpush1.msra.mxu0 0.0
      %2276 = vmatprep.subr.mxu0 0.0
      %2277 = vmatpush1.msra.mxu0 0.0
      %2278 = vmatprep.subr.mxu0 0.0
      %2279 = vmatpush1.msra.mxu0 0.0
      %2280 = vmatprep.subr.mxu0 0.0
      %2281 = vmatpush1.msra.mxu0 0.0
      %2282 = vmatprep.subr.mxu0 0.0
      %2283 = vmatpush1.msra.mxu0 0.0
      %2284 = vmatprep.subr.mxu0 0.0
      %2285 = vmatpush1.msra.mxu0 0.0
      %2286 = vmatprep.subr.mxu0 0.0
      %2287 = vmatpush1.msra.mxu0 0.0
      %2288 = vmatprep.subr.mxu0 0.0
      %2289 = vmatpush1.msra.mxu0 0.0
      %2290 = vmatprep.subr.mxu0 0.0
      %2291 = vmatpush1.msra.mxu0 0.0
      %2292 = vmatprep.subr.mxu0 0.0
      %2293 = vmatpush1.msra.mxu0 0.0
      %2294 = vmatprep.subr.mxu0 0.0
      %2295 = vmatpush1.msra.mxu0 0.0
      %2296 = vmatprep.subr.mxu0 0.0
      %2297 = vmatpush1.msra.mxu0 0.0
      %2298 = vmatprep.subr.mxu0 0.0
      %2299 = vmatpush1.msra.mxu0 0.0
      %2300 = vmatprep.subr.mxu0 0.0
      %2301 = vmatpush1.msra.mxu0 0.0
      %2302 = vmatprep.subr.mxu0 0.0
      %2303 = vmatpush1.msra.mxu0 0.0
      %2304 = vmatprep.subr.mxu0 0.0
      %2305 = vmatpush1.msra.mxu0 0.0
      %2306 = vmatprep.subr.mxu0 0.0
      %2307 = vmatpush1.msra.mxu0 0.0
      %2308 = vmatprep.subr.mxu0 0.0
      %2309 = vmatpush1.msra.mxu0 0.0
      %2310 = vmatprep.subr.mxu0 0.0
      %2311 = vmatpush1.msra.mxu0 0.0
      %2312 = vmatprep.subr.mxu0 0.0
      %2313 = vmatpush1.msra.mxu0 0.0
      %2314 = vmatprep.subr.mxu0 0.0
      %2315 = vmatpush1.msra.mxu0 0.0
      %2316 = vmatprep.subr.mxu0 0.0
      %2317 = vmatpush1.msra.mxu0 0.0
      %2318 = vmatprep.subr.mxu0 0.0
      %2319 = vmatpush1.msra.mxu0 0.0
      %2320 = vmatprep.subr.mxu0 0.0
      %2321 = vmatpush1.msra.mxu0 0.0
      %2322 = vmatprep.mubr.f32.mxu0 0.0
      %2323 = vmatmul.mubr.f32.gmra.mrb[0].mxu0 %v2232
      %v2324 = vpop.f32.mrb[0].mxu0
      %v2325 = vadd.f32 %v2214, %v2324
      %v2326 = vpop.f32.mrb[0].mxu0
      %v2327 = vadd.f32 %v2215, %v2326
      %2328 = vdwg.mxu0
      %2329 = vmatprep.subr.mxu0 %v2168
      %2330 = vmatpush1.msra.mxu0 %v2167
      %2331 = vmatprep.subr.mxu0 %v2176
      %2332 = vmatpush1.msra.mxu0 %v2175
      %2333 = vmatprep.subr.mxu0 %v2184
      %2334 = vmatpush1.msra.mxu0 %v2183
      %2335 = vmatprep.subr.mxu0 %v2192
      %2336 = vmatpush1.msra.mxu0 %v2191
      %2337 = vmatprep.subr.mxu0 %v2244
      %2338 = vmatpush1.msra.mxu0 %v2241
      %2339 = vmatprep.subr.mxu0 0.0
      %2340 = vmatpush1.msra.mxu0 0.0
      %2341 = vmatprep.subr.mxu0 0.0
      %2342 = vmatpush1.msra.mxu0 0.0
      %2343 = vmatprep.subr.mxu0 0.0
      %2344 = vmatpush1.msra.mxu0 0.0
      %2345 = vmatprep.subr.mxu0 0.0
      %2346 = vmatpush1.msra.mxu0 0.0
      %2347 = vmatprep.subr.mxu0 0.0
      %2348 = vmatpush1.msra.mxu0 0.0
      %2349 = vmatprep.subr.mxu0 0.0
      %2350 = vmatpush1.msra.mxu0 0.0
      %2351 = vmatprep.subr.mxu0 0.0
      %2352 = vmatpush1.msra.mxu0 0.0
      %2353 = vmatprep.subr.mxu0 0.0
      %2354 = vmatpush1.msra.mxu0 0.0
      %2355 = vmatprep.subr.mxu0 0.0
      %2356 = vmatpush1.msra.mxu0 0.0
      %2357 = vmatprep.subr.mxu0 0.0
      %2358 = vmatpush1.msra.mxu0 0.0
      %2359 = vmatprep.subr.mxu0 0.0
      %2360 = vmatpush1.msra.mxu0 0.0
      %2361 = vmatprep.subr.mxu0 0.0
      %2362 = vmatpush1.msra.mxu0 0.0
      %2363 = vmatprep.subr.mxu0 0.0
      %2364 = vmatpush1.msra.mxu0 0.0
      %2365 = vmatprep.subr.mxu0 0.0
      %2366 = vmatpush1.msra.mxu0 0.0
      %2367 = vmatprep.subr.mxu0 0.0
      %2368 = vmatpush1.msra.mxu0 0.0
      %2369 = vmatprep.subr.mxu0 0.0
      %2370 = vmatpush1.msra.mxu0 0.0
      %2371 = vmatprep.subr.mxu0 0.0
      %2372 = vmatpush1.msra.mxu0 0.0
      %2373 = vmatprep.subr.mxu0 0.0
      %2374 = vmatpush1.msra.mxu0 0.0
      %2375 = vmatprep.subr.mxu0 0.0
      %2376 = vmatpush1.msra.mxu0 0.0
      %2377 = vmatprep.subr.mxu0 0.0
      %2378 = vmatpush1.msra.mxu0 0.0
      %2379 = vmatprep.subr.mxu0 0.0
      %2380 = vmatpush1.msra.mxu0 0.0
      %2381 = vmatprep.subr.mxu0 0.0
      %2382 = vmatpush1.msra.mxu0 0.0
      %2383 = vmatprep.subr.mxu0 0.0
      %2384 = vmatpush1.msra.mxu0 0.0
      %2385 = vmatprep.subr.mxu0 0.0
      %2386 = vmatpush1.msra.mxu0 0.0
      %2387 = vmatprep.subr.mxu0 0.0
      %2388 = vmatpush1.msra.mxu0 0.0
      %2389 = vmatprep.subr.mxu0 0.0
      %2390 = vmatpush1.msra.mxu0 0.0
      %2391 = vmatprep.subr.mxu0 0.0
      %2392 = vmatpush1.msra.mxu0 0.0
      %2393 = vmatprep.mubr.f32.mxu0 0.0
      %2394 = vmatmul.mubr.f32.gmra.mrb[0].mxu0 %v2232
      %v2395 = vpop.f32.mrb[0].mxu0
      %v2396 = vadd.f32 %v2216, %v2395
      %v2397 = vpop.f32.mrb[0].mxu0
      %v2398 = vadd.f32 %v2217, %v2397
      %2399 = vdwg.mxu0
      %2400 = vmatprep.subr.mxu0 %v2170
      %2401 = vmatpush1.msra.mxu0 %v2169
      %2402 = vmatprep.subr.mxu0 %v2178
      %2403 = vmatpush1.msra.mxu0 %v2177
      %2404 = vmatprep.subr.mxu0 %v2186
      %2405 = vmatpush1.msra.mxu0 %v2185
      %2406 = vmatprep.subr.mxu0 %v2194
      %2407 = vmatpush1.msra.mxu0 %v2193
      %2408 = vmatprep.subr.mxu0 %v2250
      %2409 = vmatpush1.msra.mxu0 %v2247
      %2410 = vmatprep.subr.mxu0 0.0
      %2411 = vmatpush1.msra.mxu0 0.0
      %2412 = vmatprep.subr.mxu0 0.0
      %2413 = vmatpush1.msra.mxu0 0.0
      %2414 = vmatprep.subr.mxu0 0.0
      %2415 = vmatpush1.msra.mxu0 0.0
      %2416 = vmatprep.subr.mxu0 0.0
      %2417 = vmatpush1.msra.mxu0 0.0
      %2418 = vmatprep.subr.mxu0 0.0
      %2419 = vmatpush1.msra.mxu0 0.0
      %2420 = vmatprep.subr.mxu0 0.0
      %2421 = vmatpush1.msra.mxu0 0.0
      %2422 = vmatprep.subr.mxu0 0.0
      %2423 = vmatpush1.msra.mxu0 0.0
      %2424 = vmatprep.subr.mxu0 0.0
      %2425 = vmatpush1.msra.mxu0 0.0
      %2426 = vmatprep.subr.mxu0 0.0
      %2427 = vmatpush1.msra.mxu0 0.0
      %2428 = vmatprep.subr.mxu0 0.0
      %2429 = vmatpush1.msra.mxu0 0.0
      %2430 = vmatprep.subr.mxu0 0.0
      %2431 = vmatpush1.msra.mxu0 0.0
      %2432 = vmatprep.subr.mxu0 0.0
      %2433 = vmatpush1.msra.mxu0 0.0
      %2434 = vmatprep.subr.mxu0 0.0
      %2435 = vmatpush1.msra.mxu0 0.0
      %2436 = vmatprep.subr.mxu0 0.0
      %2437 = vmatpush1.msra.mxu0 0.0
      %2438 = vmatprep.subr.mxu0 0.0
      %2439 = vmatpush1.msra.mxu0 0.0
      %2440 = vmatprep.subr.mxu0 0.0
      %2441 = vmatpush1.msra.mxu0 0.0
      %2442 = vmatprep.subr.mxu0 0.0
      %2443 = vmatpush1.msra.mxu0 0.0
      %2444 = vmatprep.subr.mxu0 0.0
      %2445 = vmatpush1.msra.mxu0 0.0
      %2446 = vmatprep.subr.mxu0 0.0
      %2447 = vmatpush1.msra.mxu0 0.0
      %2448 = vmatprep.subr.mxu0 0.0
      %2449 = vmatpush1.msra.mxu0 0.0
      %2450 = vmatprep.subr.mxu0 0.0
      %2451 = vmatpush1.msra.mxu0 0.0
      %2452 = vmatprep.subr.mxu0 0.0
      %2453 = vmatpush1.msra.mxu0 0.0
      %2454 = vmatprep.subr.mxu0 0.0
      %2455 = vmatpush1.msra.mxu0 0.0
      %2456 = vmatprep.subr.mxu0 0.0
      %2457 = vmatpush1.msra.mxu0 0.0
      %2458 = vmatprep.subr.mxu0 0.0
      %2459 = vmatpush1.msra.mxu0 0.0
      %2460 = vmatprep.subr.mxu0 0.0
      %2461 = vmatpush1.msra.mxu0 0.0
      %2462 = vmatprep.subr.mxu0 0.0
      %2463 = vmatpush1.msra.mxu0 0.0
      %2464 = vmatprep.mubr.f32.mxu0 0.0
      %2465 = vmatmul.mubr.f32.gmra.mrb[0].mxu0 %v2232
      %v2466 = vpop.f32.mrb[0].mxu0
      %v2467 = vadd.f32 %v2218, %v2466
      %v2468 = vpop.f32.mrb[0].mxu0
      %v2469 = vadd.f32 %v2219, %v2468
      %2470 = vdwg.mxu0
      %2471 = vmatprep.subr.mxu0 %v2172
      %2472 = vmatpush1.msra.mxu0 %v2171
      %2473 = vmatprep.subr.mxu0 %v2180
      %2474 = vmatpush1.msra.mxu0 %v2179
      %2475 = vmatprep.subr.mxu0 %v2188
      %2476 = vmatpush1.msra.mxu0 %v2187
      %2477 = vmatprep.subr.mxu0 %v2196
      %2478 = vmatpush1.msra.mxu0 %v2195
      %2479 = vmatprep.subr.mxu0 %v2256
      %2480 = vmatpush1.msra.mxu0 %v2253
      %2481 = vmatprep.subr.mxu0 0.0
      %2482 = vmatpush1.msra.mxu0 0.0
      %2483 = vmatprep.subr.mxu0 0.0
      %2484 = vmatpush1.msra.mxu0 0.0
      %2485 = vmatprep.subr.mxu0 0.0
      %2486 = vmatpush1.msra.mxu0 0.0
      %2487 = vmatprep.subr.mxu0 0.0
      %2488 = vmatpush1.msra.mxu0 0.0
      %2489 = vmatprep.subr.mxu0 0.0
      %2490 = vmatpush1.msra.mxu0 0.0
      %2491 = vmatprep.subr.mxu0 0.0
      %2492 = vmatpush1.msra.mxu0 0.0
      %2493 = vmatprep.subr.mxu0 0.0
      %2494 = vmatpush1.msra.mxu0 0.0
      %2495 = vmatprep.subr.mxu0 0.0
      %2496 = vmatpush1.msra.mxu0 0.0
      %2497 = vmatprep.subr.mxu0 0.0
      %2498 = vmatpush1.msra.mxu0 0.0
      %2499 = vmatprep.subr.mxu0 0.0
      %2500 = vmatpush1.msra.mxu0 0.0
      %2501 = vmatprep.subr.mxu0 0.0
      %2502 = vmatpush1.msra.mxu0 0.0
      %2503 = vmatprep.subr.mxu0 0.0
      %2504 = vmatpush1.msra.mxu0 0.0
      %2505 = vmatprep.subr.mxu0 0.0
      %2506 = vmatpush1.msra.mxu0 0.0
      %2507 = vmatprep.subr.mxu0 0.0
      %2508 = vmatpush1.msra.mxu0 0.0
      %2509 = vmatprep.subr.mxu0 0.0
      %2510 = vmatpush1.msra.mxu0 0.0
      %2511 = vmatprep.subr.mxu0 0.0
      %2512 = vmatpush1.msra.mxu0 0.0
      %2513 = vmatprep.subr.mxu0 0.0
      %2514 = vmatpush1.msra.mxu0 0.0
      %2515 = vmatprep.subr.mxu0 0.0
      %2516 = vmatpush1.msra.mxu0 0.0
      %2517 = vmatprep.subr.mxu0 0.0
      %2518 = vmatpush1.msra.mxu0 0.0
      %2519 = vmatprep.subr.mxu0 0.0
      %2520 = vmatpush1.msra.mxu0 0.0
      %2521 = vmatprep.subr.mxu0 0.0
      %2522 = vmatpush1.msra.mxu0 0.0
      %2523 = vmatprep.subr.mxu0 0.0
      %2524 = vmatpush1.msra.mxu0 0.0
      %2525 = vmatprep.subr.mxu0 0.0
      %2526 = vmatpush1.msra.mxu0 0.0
      %2527 = vmatprep.subr.mxu0 0.0
      %2528 = vmatpush1.msra.mxu0 0.0
      %2529 = vmatprep.subr.mxu0 0.0
      %2530 = vmatpush1.msra.mxu0 0.0
      %2531 = vmatprep.subr.mxu0 0.0
      %2532 = vmatpush1.msra.mxu0 0.0
      %2533 = vmatprep.subr.mxu0 0.0
      %2534 = vmatpush1.msra.mxu0 0.0
      %2535 = vmatprep.mubr.f32.mxu0 0.0
      %2536 = vmatmul.mubr.f32.gmra.mrb[0].mxu0 %v2232
      %v2537 = vpop.f32.mrb[0].mxu0
      %v2538 = vadd.f32 %v2220, %v2537
      %v2539 = vpop.f32.mrb[0].mxu0
      %v2540 = vadd.f32 %v2221, %v2539
      %2541 = vdwg.mxu0
      %v2542 = vmul.f32 %v2325, 0.1
      %v2543 = vmul.f32 %v2327, 0.1
      %v2544 = vmul.f32 %v2396, 0.1
      %v2545 = vmul.f32 %v2398, 0.1
      %v2546 = vmul.f32 %v2467, 0.1
      %v2547 = vmul.f32 %v2469, 0.1
      %v2548 = vmul.f32 %v2538, 0.1
      %v2549 = vmul.f32 %v2540, 0.1
      %v2550 = vmax.f32 %v2325, %v2542
      %v2551 = vmax.f32 %v2327, %v2543
      %v2552 = vmax.f32 %v2396, %v2544
      %v2553 = vmax.f32 %v2398, %v2545
      %v2554 = vmax.f32 %v2467, %v2546
      %v2555 = vmax.f32 %v2469, %v2547
      %v2556 = vmax.f32 %v2538, %v2548
      %v2557 = vmax.f32 %v2540, %v2549
      %2558 = vrot.lane.b32.xlu0 %v2550, 33
      %v2559 = vpop.permute.xlu0 %2558
      %2560 = vrot.lane.b32.xlu0 %v2551, 33
      %v2561 = vpop.permute.xlu0 %2560
      %2562 = vrot.lane.b32.xlu0 %v2552, 33
      %v2563 = vpop.permute.xlu0 %2562
      %2564 = vrot.lane.b32.xlu0 %v2553, 33
      %v2565 = vpop.permute.xlu0 %2564
      %2566 = vrot.lane.b32.xlu0 %v2554, 33
      %v2567 = vpop.permute.xlu0 %2566
      %2568 = vrot.lane.b32.xlu0 %v2555, 33
      %v2569 = vpop.permute.xlu0 %2568
      %2570 = vrot.lane.b32.xlu0 %v2556, 33
      %v2571 = vpop.permute.xlu0 %2570
      %2572 = vrot.lane.b32.xlu0 %v2557, 33
      %v2573 = vpop.permute.xlu0 %2572
      %v2574 = vsel %vm717, %v2571, %v2573
      %v2575 = vsel %vm717, %v2569, %v2571
      %v2576 = vsel %vm717, %v2567, %v2569
      %v2577 = vsel %vm717, %v2565, %v2567
      %v2578 = vsel %vm717, %v2563, %v2565
      %v2579 = vsel %vm717, %v2561, %v2563
      %v2580 = vsel %vm717, %v2559, %v2561
      %v2581 = vsel %vm717, %v2573, %v2559
      %v2582 = vmul.f32 %v2581, %v1579
      %v2583 = vmul.f32 %v2580, %v1583
      %v2584 = vmul.f32 %v2579, %v1587
      %v2585 = vmul.f32 %v2578, %v1591
      %v2586 = vmul.f32 %v2577, %v1595
      %v2587 = vmul.f32 %v2576, %v1599
      %v2588 = vmul.f32 %v2575, %v1603
      %v2589 = vmul.f32 %v2574, %v1607
      %2590 = vrot.lane.b32.xlu0 %v2550, 32
      %v2591 = vpop.permute.xlu0 %2590
      %2592 = vrot.lane.b32.xlu0 %v2551, 32
      %v2593 = vpop.permute.xlu0 %2592
      %2594 = vrot.lane.b32.xlu0 %v2552, 32
      %v2595 = vpop.permute.xlu0 %2594
      %2596 = vrot.lane.b32.xlu0 %v2553, 32
      %v2597 = vpop.permute.xlu0 %2596
      %2598 = vrot.lane.b32.xlu0 %v2554, 32
      %v2599 = vpop.permute.xlu0 %2598
      %2600 = vrot.lane.b32.xlu0 %v2555, 32
      %v2601 = vpop.permute.xlu0 %2600
      %2602 = vrot.lane.b32.xlu0 %v2556, 32
      %v2603 = vpop.permute.xlu0 %2602
      %2604 = vrot.lane.b32.xlu0 %v2557, 32
      %v2605 = vpop.permute.xlu0 %2604
      %v2606 = vsel %vm790, %v2603, %v2605
      %v2607 = vsel %vm790, %v2601, %v2603
      %v2608 = vsel %vm790, %v2599, %v2601
      %v2609 = vsel %vm790, %v2597, %v2599
      %v2610 = vsel %vm790, %v2595, %v2597
      %v2611 = vsel %vm790, %v2593, %v2595
      %v2612 = vsel %vm790, %v2591, %v2593
      %v2613 = vsel %vm790, %v2605, %v2591
      %v2614 = vmul.f32 %v2613, %v1643
      %v2615 = vmul.f32 %v2612, %v1647
      %v2616 = vmul.f32 %v2611, %v1651
      %v2617 = vmul.f32 %v2610, %v1655
      %v2618 = vmul.f32 %v2609, %v1659
      %v2619 = vmul.f32 %v2608, %v1663
      %v2620 = vmul.f32 %v2607, %v1667
      %v2621 = vmul.f32 %v2606, %v1671
      %2622 = vrot.lane.b32.xlu0 %v2550, 31
      %v2623 = vpop.permute.xlu0 %2622
      %2624 = vrot.lane.b32.xlu0 %v2551, 31
      %v2625 = vpop.permute.xlu0 %2624
      %2626 = vrot.lane.b32.xlu0 %v2552, 31
      %v2627 = vpop.permute.xlu0 %2626
      %2628 = vrot.lane.b32.xlu0 %v2553, 31
      %v2629 = vpop.permute.xlu0 %2628
      %2630 = vrot.lane.b32.xlu0 %v2554, 31
      %v2631 = vpop.permute.xlu0 %2630
      %2632 = vrot.lane.b32.xlu0 %v2555, 31
      %v2633 = vpop.permute.xlu0 %2632
      %2634 = vrot.lane.b32.xlu0 %v2556, 31
      %v2635 = vpop.permute.xlu0 %2634
      %2636 = vrot.lane.b32.xlu0 %v2557, 31
      %v2637 = vpop.permute.xlu0 %2636
      %v2638 = vsel %vm1696, %v2635, %v2637
      %v2639 = vsel %vm1696, %v2633, %v2635
      %v2640 = vsel %vm1696, %v2631, %v2633
      %v2641 = vsel %vm1696, %v2629, %v2631
      %v2642 = vsel %vm1696, %v2627, %v2629
      %v2643 = vsel %vm1696, %v2625, %v2627
      %v2644 = vsel %vm1696, %v2623, %v2625
      %v2645 = vsel %vm1696, %v2637, %v2623
      %v2646 = vmul.f32 %v2645, %v1708
      %v2647 = vmul.f32 %v2644, %v1712
      %v2648 = vmul.f32 %v2643, %v1716
      %v2649 = vmul.f32 %v2642, %v1720
      %v2650 = vmul.f32 %v2641, %v1724
      %v2651 = vmul.f32 %v2640, %v1728
      %v2652 = vmul.f32 %v2639, %v1732
      %v2653 = vmul.f32 %v2638, %v1736
      %2654 = vrot.lane.b32.xlu0 %v2550, 1
      %v2655 = vpop.permute.xlu0 %2654
      %2656 = vrot.lane.b32.xlu0 %v2551, 1
      %v2657 = vpop.permute.xlu0 %2656
      %2658 = vrot.lane.b32.xlu0 %v2552, 1
      %v2659 = vpop.permute.xlu0 %2658
      %2660 = vrot.lane.b32.xlu0 %v2553, 1
      %v2661 = vpop.permute.xlu0 %2660
      %2662 = vrot.lane.b32.xlu0 %v2554, 1
      %v2663 = vpop.permute.xlu0 %2662
      %2664 = vrot.lane.b32.xlu0 %v2555, 1
      %v2665 = vpop.permute.xlu0 %2664
      %2666 = vrot.lane.b32.xlu0 %v2556, 1
      %v2667 = vpop.permute.xlu0 %2666
      %2668 = vrot.lane.b32.xlu0 %v2557, 1
      %v2669 = vpop.permute.xlu0 %2668
      %v2670 = vsel %vm935, %v2667, %v2669
      %v2671 = vsel %vm935, %v2665, %v2667
      %v2672 = vsel %vm935, %v2663, %v2665
      %v2673 = vsel %vm935, %v2661, %v2663
      %v2674 = vsel %vm935, %v2659, %v2661
      %v2675 = vsel %vm935, %v2657, %v2659
      %v2676 = vsel %vm935, %v2655, %v2657
      %v2677 = vsel %vm935, %v2669, %v2655
      %v2678 = vmul.f32 %v2677, %v1772
      %v2679 = vmul.f32 %v2676, %v1776
      %v2680 = vmul.f32 %v2675, %v1780
      %v2681 = vmul.f32 %v2674, %v1784
      %v2682 = vmul.f32 %v2673, %v1788
      %v2683 = vmul.f32 %v2672, %v1792
      %v2684 = vmul.f32 %v2671, %v1796
      %v2685 = vmul.f32 %v2670, %v1800
      %2686 = vrot.lane.b32.xlu0 %v2550, 127
      %v2687 = vpop.permute.xlu0 %2686
      %2688 = vrot.lane.b32.xlu0 %v2551, 127
      %v2689 = vpop.permute.xlu0 %2688
      %2690 = vrot.lane.b32.xlu0 %v2552, 127
      %v2691 = vpop.permute.xlu0 %2690
      %2692 = vrot.lane.b32.xlu0 %v2553, 127
      %v2693 = vpop.permute.xlu0 %2692
      %2694 = vrot.lane.b32.xlu0 %v2554, 127
      %v2695 = vpop.permute.xlu0 %2694
      %2696 = vrot.lane.b32.xlu0 %v2555, 127
      %v2697 = vpop.permute.xlu0 %2696
      %2698 = vrot.lane.b32.xlu0 %v2556, 127
      %v2699 = vpop.permute.xlu0 %2698
      %2700 = vrot.lane.b32.xlu0 %v2557, 127
      %v2701 = vpop.permute.xlu0 %2700
      %v2702 = vsel %vm1825, %v2699, %v2701
      %v2703 = vsel %vm1825, %v2697, %v2699
      %v2704 = vsel %vm1825, %v2695, %v2697
      %v2705 = vsel %vm1825, %v2693, %v2695
      %v2706 = vsel %vm1825, %v2691, %v2693
      %v2707 = vsel %vm1825, %v2689, %v2691
      %v2708 = vsel %vm1825, %v2687, %v2689
      %v2709 = vsel %vm1825, %v2701, %v2687
      %v2710 = vmul.f32 %v2708, %v1837
      %v2711 = vmul.f32 %v2707, %v1841
      %v2712 = vmul.f32 %v2706, %v1845
      %v2713 = vmul.f32 %v2705, %v1849
      %v2714 = vmul.f32 %v2704, %v1853
      %v2715 = vmul.f32 %v2703, %v1857
      %v2716 = vmul.f32 %v2702, %v1861
      %v2717 = vmul.f32 %v2709, %v1865
      %2718 = vrot.lane.b32.xlu0 %v2550, 97
      %v2719 = vpop.permute.xlu0 %2718
      %2720 = vrot.lane.b32.xlu0 %v2551, 97
      %v2721 = vpop.permute.xlu0 %2720
      %2722 = vrot.lane.b32.xlu0 %v2552, 97
      %v2723 = vpop.permute.xlu0 %2722
      %2724 = vrot.lane.b32.xlu0 %v2553, 97
      %v2725 = vpop.permute.xlu0 %2724
      %2726 = vrot.lane.b32.xlu0 %v2554, 97
      %v2727 = vpop.permute.xlu0 %2726
      %2728 = vrot.lane.b32.xlu0 %v2555, 97
      %v2729 = vpop.permute.xlu0 %2728
      %2730 = vrot.lane.b32.xlu0 %v2556, 97
      %v2731 = vpop.permute.xlu0 %2730
      %2732 = vrot.lane.b32.xlu0 %v2557, 97
      %v2733 = vpop.permute.xlu0 %2732
      %v2734 = vsel %vm1890, %v2731, %v2733
      %v2735 = vsel %vm1890, %v2729, %v2731
      %v2736 = vsel %vm1890, %v2727, %v2729
      %v2737 = vsel %vm1890, %v2725, %v2727
      %v2738 = vsel %vm1890, %v2723, %v2725
      %v2739 = vsel %vm1890, %v2721, %v2723
      %v2740 = vsel %vm1890, %v2719, %v2721
      %v2741 = vsel %vm1890, %v2733, %v2719
      %v2742 = vmul.f32 %v2740, %v1902
      %v2743 = vmul.f32 %v2739, %v1906
      %v2744 = vmul.f32 %v2738, %v1910
      %v2745 = vmul.f32 %v2737, %v1914
      %v2746 = vmul.f32 %v2736, %v1918
      %v2747 = vmul.f32 %v2735, %v1922
      %v2748 = vmul.f32 %v2734, %v1926
      %v2749 = vmul.f32 %v2741, %v1930
      %2750 = vrot.lane.b32.xlu0 %v2550, 96
      %v2751 = vpop.permute.xlu0 %2750
      %2752 = vrot.lane.b32.xlu0 %v2551, 96
      %v2753 = vpop.permute.xlu0 %2752
      %2754 = vrot.lane.b32.xlu0 %v2552, 96
      %v2755 = vpop.permute.xlu0 %2754
      %2756 = vrot.lane.b32.xlu0 %v2553, 96
      %v2757 = vpop.permute.xlu0 %2756
      %2758 = vrot.lane.b32.xlu0 %v2554, 96
      %v2759 = vpop.permute.xlu0 %2758
      %2760 = vrot.lane.b32.xlu0 %v2555, 96
      %v2761 = vpop.permute.xlu0 %2760
      %2762 = vrot.lane.b32.xlu0 %v2556, 96
      %v2763 = vpop.permute.xlu0 %2762
      %2764 = vrot.lane.b32.xlu0 %v2557, 96
      %v2765 = vpop.permute.xlu0 %2764
      %v2766 = vsel %vm1955, %v2763, %v2765
      %v2767 = vsel %vm1955, %v2761, %v2763
      %v2768 = vsel %vm1955, %v2759, %v2761
      %v2769 = vsel %vm1955, %v2757, %v2759
      %v2770 = vsel %vm1955, %v2755, %v2757
      %v2771 = vsel %vm1955, %v2753, %v2755
      %v2772 = vsel %vm1955, %v2751, %v2753
      %v2773 = vsel %vm1955, %v2765, %v2751
      %v2774 = vmul.f32 %v2772, %v1967
      %v2775 = vmul.f32 %v2771, %v1971
      %v2776 = vmul.f32 %v2770, %v1975
      %v2777 = vmul.f32 %v2769, %v1979
      %v2778 = vmul.f32 %v2768, %v1983
      %v2779 = vmul.f32 %v2767, %v1987
      %v2780 = vmul.f32 %v2766, %v1991
      %v2781 = vmul.f32 %v2773, %v1995
      %2782 = vrot.lane.b32.xlu0 %v2550, 95
      %v2783 = vpop.permute.xlu0 %2782
      %2784 = vrot.lane.b32.xlu0 %v2551, 95
      %v2785 = vpop.permute.xlu0 %2784
      %2786 = vrot.lane.b32.xlu0 %v2552, 95
      %v2787 = vpop.permute.xlu0 %2786
      %2788 = vrot.lane.b32.xlu0 %v2553, 95
      %v2789 = vpop.permute.xlu0 %2788
      %2790 = vrot.lane.b32.xlu0 %v2554, 95
      %v2791 = vpop.permute.xlu0 %2790
      %2792 = vrot.lane.b32.xlu0 %v2555, 95
      %v2793 = vpop.permute.xlu0 %2792
      %2794 = vrot.lane.b32.xlu0 %v2556, 95
      %v2795 = vpop.permute.xlu0 %2794
      %2796 = vrot.lane.b32.xlu0 %v2557, 95
      %v2797 = vpop.permute.xlu0 %2796
      %v2798 = vsel %vm2020, %v2795, %v2797
      %v2799 = vsel %vm2020, %v2793, %v2795
      %v2800 = vsel %vm2020, %v2791, %v2793
      %v2801 = vsel %vm2020, %v2789, %v2791
      %v2802 = vsel %vm2020, %v2787, %v2789
      %v2803 = vsel %vm2020, %v2785, %v2787
      %v2804 = vsel %vm2020, %v2783, %v2785
      %v2805 = vsel %vm2020, %v2797, %v2783
      %v2806 = vmul.f32 %v2804, %v2032
      %v2807 = vmul.f32 %v2803, %v2036
      %v2808 = vmul.f32 %v2802, %v2040
      %v2809 = vmul.f32 %v2801, %v2044
      %v2810 = vmul.f32 %v2800, %v2048
      %v2811 = vmul.f32 %v2799, %v2052
      %v2812 = vmul.f32 %v2798, %v2056
      %v2813 = vmul.f32 %v2805, %v2060
      %v2822 = vrot.slane %v2614, 4
      %v2823 = vrot.slane %v2615, 4
      %v2824 = vrot.slane %v2616, 4
      %v2825 = vrot.slane %v2617, 4
      %v2826 = vrot.slane %v2618, 4
      %v2827 = vrot.slane %v2619, 4
      %v2828 = vrot.slane %v2620, 4
      %v2829 = vrot.slane %v2621, 4
      %v2846 = vrot.slane %v2678, 4
      %v2847 = vrot.slane %v2679, 4
      %v2848 = vrot.slane %v2680, 4
      %v2849 = vrot.slane %v2681, 4
      %v2850 = vrot.slane %v2682, 4
      %v2851 = vrot.slane %v2683, 4
      %v2852 = vrot.slane %v2684, 4
      %v2853 = vrot.slane %v2685, 4
      %v2870 = vrot.slane %v2710, 4
      %v2871 = vrot.slane %v2711, 4
      %v2872 = vrot.slane %v2712, 4
      %v2873 = vrot.slane %v2713, 4
      %v2874 = vrot.slane %v2714, 4
      %v2875 = vrot.slane %v2715, 4
      %v2876 = vrot.slane %v2716, 4
      %v2877 = vrot.slane %v2717, 4
      %v2894 = vrot.slane %v2774, 4
      %v2895 = vrot.slane %v2775, 4
      %v2896 = vrot.slane %v2776, 4
      %v2897 = vrot.slane %v2777, 4
      %v2898 = vrot.slane %v2778, 4
      %v2899 = vrot.slane %v2779, 4
      %v2900 = vrot.slane %v2780, 4
      %v2901 = vrot.slane %v2781, 4
      %v2910 = vsel %vm1179, %v2582, %v2822
      %v2911 = vsel %vm1179, %v2583, %v2823
      %v2912 = vsel %vm1179, %v2584, %v2824
      %v2913 = vsel %vm1179, %v2585, %v2825
      %v2914 = vsel %vm1179, %v2586, %v2826
      %v2915 = vsel %vm1179, %v2587, %v2827
      %v2916 = vsel %vm1179, %v2588, %v2828
      %v2917 = vsel %vm1179, %v2589, %v2829
      %v2918 = vsel %vm1179, %v2646, %v2846
      %v2919 = vsel %vm1179, %v2647, %v2847
      %v2920 = vsel %vm1179, %v2648, %v2848
      %v2921 = vsel %vm1179, %v2649, %v2849
      %v2922 = vsel %vm1179, %v2650, %v2850
      %v2923 = vsel %vm1179, %v2651, %v2851
      %v2924 = vsel %vm1179, %v2652, %v2852
      %v2925 = vsel %vm1179, %v2653, %v2853
      %v2926 = vsel %vm1179, %v2550, %v2870
      %v2927 = vsel %vm1179, %v2551, %v2871
      %v2928 = vsel %vm1179, %v2552, %v2872
      %v2929 = vsel %vm1179, %v2553, %v2873
      %v2930 = vsel %vm1179, %v2554, %v2874
      %v2931 = vsel %vm1179, %v2555, %v2875
      %v2932 = vsel %vm1179, %v2556, %v2876
      %v2933 = vsel %vm1179, %v2557, %v2877
      %v2934 = vsel %vm1179, %v2742, %v2894
      %v2935 = vsel %vm1179, %v2743, %v2895
      %v2936 = vsel %vm1179, %v2744, %v2896
      %v2937 = vsel %vm1179, %v2745, %v2897
      %v2938 = vsel %vm1179, %v2746, %v2898
      %v2939 = vsel %vm1179, %v2747, %v2899
      %v2940 = vsel %vm1179, %v2748, %v2900
      %v2941 = vsel %vm1179, %v2749, %v2901
      %v2942 = vsel %vm1179, %v2806, 1.0
      %v2943 = vsel %vm1179, %v2807, 1.0
      %v2944 = vsel %vm1179, %v2808, 1.0
      %v2945 = vsel %vm1179, %v2809, 1.0
      %v2946 = vsel %vm1179, %v2810, 1.0
      %v2947 = vsel %vm1179, %v2811, 1.0
      %v2948 = vsel %vm1179, %v2812, 1.0
      %v2949 = vsel %vm1179, %v2813, 1.0
      %v2950 = vld [vmem:[%s12] sm:$0xff]
      %v2952 = vsel %vm2230, %v2950, 0
      %v2955 = vsel %vm1188, %v2942, 0
      %v2958 = vsel %vm1188, %v2943, 0
      %v2961 = vsel %vm1188, %v2944, 0
      %v2964 = vsel %vm1188, %v2945, 0
      %v2967 = vsel %vm1188, %v2946, 0
      %v2970 = vsel %vm1188, %v2947, 0
      %v2973 = vsel %vm1188, %v2948, 0
      %v2976 = vsel %vm1188, %v2949, 0
      %2978 = vmatprep.subr.mxu0 %v2911
      %2979 = vmatpush1.msra.mxu0 %v2910
      %2980 = vmatprep.subr.mxu0 %v2919
      %2981 = vmatpush1.msra.mxu0 %v2918
      %2982 = vmatprep.subr.mxu0 %v2927
      %2983 = vmatpush1.msra.mxu0 %v2926
      %2984 = vmatprep.subr.mxu0 %v2935
      %2985 = vmatpush1.msra.mxu0 %v2934
      %2986 = vmatprep.subr.mxu0 %v2958
      %2987 = vmatpush1.msra.mxu0 %v2955
      %2988 = vmatprep.subr.mxu0 0.0
      %2989 = vmatpush1.msra.mxu0 0.0
      %2990 = vmatprep.subr.mxu0 0.0
      %2991 = vmatpush1.msra.mxu0 0.0
      %2992 = vmatprep.subr.mxu0 0.0
      %2993 = vmatpush1.msra.mxu0 0.0
      %2994 = vmatprep.subr.mxu0 0.0
      %2995 = vmatpush1.msra.mxu0 0.0
      %2996 = vmatprep.subr.mxu0 0.0
      %2997 = vmatpush1.msra.mxu0 0.0
      %2998 = vmatprep.subr.mxu0 0.0
      %2999 = vmatpush1.msra.mxu0 0.0
      %3000 = vmatprep.subr.mxu0 0.0
      %3001 = vmatpush1.msra.mxu0 0.0
      %3002 = vmatprep.subr.mxu0 0.0
      %3003 = vmatpush1.msra.mxu0 0.0
      %3004 = vmatprep.subr.mxu0 0.0
      %3005 = vmatpush1.msra.mxu0 0.0
      %3006 = vmatprep.subr.mxu0 0.0
      %3007 = vmatpush1.msra.mxu0 0.0
      %3008 = vmatprep.subr.mxu0 0.0
      %3009 = vmatpush1.msra.mxu0 0.0
      %3010 = vmatprep.subr.mxu0 0.0
      %3011 = vmatpush1.msra.mxu0 0.0
      %3012 = vmatprep.subr.mxu0 0.0
      %3013 = vmatpush1.msra.mxu0 0.0
      %3014 = vmatprep.subr.mxu0 0.0
      %3015 = vmatpush1.msra.mxu0 0.0
      %3016 = vmatprep.subr.mxu0 0.0
      %3017 = vmatpush1.msra.mxu0 0.0
      %3018 = vmatprep.subr.mxu0 0.0
      %3019 = vmatpush1.msra.mxu0 0.0
      %3020 = vmatprep.subr.mxu0 0.0
      %3021 = vmatpush1.msra.mxu0 0.0
      %3022 = vmatprep.subr.mxu0 0.0
      %3023 = vmatpush1.msra.mxu0 0.0
      %3024 = vmatprep.subr.mxu0 0.0
      %3025 = vmatpush1.msra.mxu0 0.0
      %3026 = vmatprep.subr.mxu0 0.0
      %3027 = vmatpush1.msra.mxu0 0.0
      %3028 = vmatprep.subr.mxu0 0.0
      %3029 = vmatpush1.msra.mxu0 0.0
      %3030 = vmatprep.subr.mxu0 0.0
      %3031 = vmatpush1.msra.mxu0 0.0
      %3032 = vmatprep.subr.mxu0 0.0
      %3033 = vmatpush1.msra.mxu0 0.0
      %3034 = vmatprep.subr.mxu0 0.0
      %3035 = vmatpush1.msra.mxu0 0.0
      %3036 = vmatprep.subr.mxu0 0.0
      %3037 = vmatpush1.msra.mxu0 0.0
      %3038 = vmatprep.subr.mxu0 0.0
      %3039 = vmatpush1.msra.mxu0 0.0
      %3040 = vmatprep.subr.mxu0 0.0
      %3041 = vmatpush1.msra.mxu0 0.0
      %3042 = vmatprep.mubr.f32.mxu0 0.0
      %3043 = vmatmul.mubr.f32.gmra.mrb[0].mxu0 %v2952
      %v3044 = vpop.f32.mrb[0].mxu0
      %v3045 = vadd.f32 0.0, %v3044
      %v3046 = vpop.f32.mrb[0].mxu0
      %v3047 = vadd.f32 0.0, %v3046
      %3048 = vdwg.mxu0
      %3049 = vmatprep.subr.mxu0 %v2913
      %3050 = vmatpush1.msra.mxu0 %v2912
      %3051 = vmatprep.subr.mxu0 %v2921
      %3052 = vmatpush1.msra.mxu0 %v2920
      %3053 = vmatprep.subr.mxu0 %v2929
      %3054 = vmatpush1.msra.mxu0 %v2928
      %3055 = vmatprep.subr.mxu0 %v2937
      %3056 = vmatpush1.msra.mxu0 %v2936
      %3057 = vmatprep.subr.mxu0 %v2964
      %3058 = vmatpush1.msra.mxu0 %v2961
      %3059 = vmatprep.subr.mxu0 0.0
      %3060 = vmatpush1.msra.mxu0 0.0
      %3061 = vmatprep.subr.mxu0 0.0
      %3062 = vmatpush1.msra.mxu0 0.0
      %3063 = vmatprep.subr.mxu0 0.0
      %3064 = vmatpush1.msra.mxu0 0.0
      %3065 = vmatprep.subr.mxu0 0.0
      %3066 = vmatpush1.msra.mxu0 0.0
      %3067 = vmatprep.subr.mxu0 0.0
      %3068 = vmatpush1.msra.mxu0 0.0
      %3069 = vmatprep.subr.mxu0 0.0
      %3070 = vmatpush1.msra.mxu0 0.0
      %3071 = vmatprep.subr.mxu0 0.0
      %3072 = vmatpush1.msra.mxu0 0.0
      %3073 = vmatprep.subr.mxu0 0.0
      %3074 = vmatpush1.msra.mxu0 0.0
      %3075 = vmatprep.subr.mxu0 0.0
      %3076 = vmatpush1.msra.mxu0 0.0
      %3077 = vmatprep.subr.mxu0 0.0
      %3078 = vmatpush1.msra.mxu0 0.0
      %3079 = vmatprep.subr.mxu0 0.0
      %3080 = vmatpush1.msra.mxu0 0.0
      %3081 = vmatprep.subr.mxu0 0.0
      %3082 = vmatpush1.msra.mxu0 0.0
      %3083 = vmatprep.subr.mxu0 0.0
      %3084 = vmatpush1.msra.mxu0 0.0
      %3085 = vmatprep.subr.mxu0 0.0
      %3086 = vmatpush1.msra.mxu0 0.0
      %3087 = vmatprep.subr.mxu0 0.0
      %3088 = vmatpush1.msra.mxu0 0.0
      %3089 = vmatprep.subr.mxu0 0.0
      %3090 = vmatpush1.msra.mxu0 0.0
      %3091 = vmatprep.subr.mxu0 0.0
      %3092 = vmatpush1.msra.mxu0 0.0
      %3093 = vmatprep.subr.mxu0 0.0
      %3094 = vmatpush1.msra.mxu0 0.0
      %3095 = vmatprep.subr.mxu0 0.0
      %3096 = vmatpush1.msra.mxu0 0.0
      %3097 = vmatprep.subr.mxu0 0.0
      %3098 = vmatpush1.msra.mxu0 0.0
      %3099 = vmatprep.subr.mxu0 0.0
      %3100 = vmatpush1.msra.mxu0 0.0
      %3101 = vmatprep.subr.mxu0 0.0
      %3102 = vmatpush1.msra.mxu0 0.0
      %3103 = vmatprep.subr.mxu0 0.0
      %3104 = vmatpush1.msra.mxu0 0.0
      %3105 = vmatprep.subr.mxu0 0.0
      %3106 = vmatpush1.msra.mxu0 0.0
      %3107 = vmatprep.subr.mxu0 0.0
      %3108 = vmatpush1.msra.mxu0 0.0
      %3109 = vmatprep.subr.mxu0 0.0
      %3110 = vmatpush1.msra.mxu0 0.0
      %3111 = vmatprep.subr.mxu0 0.0
      %3112 = vmatpush1.msra.mxu0 0.0
      %3113 = vmatprep.mubr.f32.mxu0 0.0
      %3114 = vmatmul.mubr.f32.gmra.mrb[0].mxu0 %v2952
      %v3115 = vpop.f32.mrb[0].mxu0
      %v3116 = vadd.f32 0.0, %v3115
      %v3117 = vpop.f32.mrb[0].mxu0
      %v3118 = vadd.f32 0.0, %v3117
      %3119 = vdwg.mxu0
      %3120 = vmatprep.subr.mxu0 %v2915
      %3121 = vmatpush1.msra.mxu0 %v2914
      %3122 = vmatprep.subr.mxu0 %v2923
      %3123 = vmatpush1.msra.mxu0 %v2922
      %3124 = vmatprep.subr.mxu0 %v2931
      %3125 = vmatpush1.msra.mxu0 %v2930
      %3126 = vmatprep.subr.mxu0 %v2939
      %3127 = vmatpush1.msra.mxu0 %v2938
      %3128 = vmatprep.subr.mxu0 %v2970
      %3129 = vmatpush1.msra.mxu0 %v2967
      %3130 = vmatprep.subr.mxu0 0.0
      %3131 = vmatpush1.msra.mxu0 0.0
      %3132 = vmatprep.subr.mxu0 0.0
      %3133 = vmatpush1.msra.mxu0 0.0
      %3134 = vmatprep.subr.mxu0 0.0
      %3135 = vmatpush1.msra.mxu0 0.0
      %3136 = vmatprep.subr.mxu0 0.0
      %3137 = vmatpush1.msra.mxu0 0.0
      %3138 = vmatprep.subr.mxu0 0.0
      %3139 = vmatpush1.msra.mxu0 0.0
      %3140 = vmatprep.subr.mxu0 0.0
      %3141 = vmatpush1.msra.mxu0 0.0
      %3142 = vmatprep.subr.mxu0 0.0
      %3143 = vmatpush1.msra.mxu0 0.0
      %3144 = vmatprep.subr.mxu0 0.0
      %3145 = vmatpush1.msra.mxu0 0.0
      %3146 = vmatprep.subr.mxu0 0.0
      %3147 = vmatpush1.msra.mxu0 0.0
      %3148 = vmatprep.subr.mxu0 0.0
      %3149 = vmatpush1.msra.mxu0 0.0
      %3150 = vmatprep.subr.mxu0 0.0
      %3151 = vmatpush1.msra.mxu0 0.0
      %3152 = vmatprep.subr.mxu0 0.0
      %3153 = vmatpush1.msra.mxu0 0.0
      %3154 = vmatprep.subr.mxu0 0.0
      %3155 = vmatpush1.msra.mxu0 0.0
      %3156 = vmatprep.subr.mxu0 0.0
      %3157 = vmatpush1.msra.mxu0 0.0
      %3158 = vmatprep.subr.mxu0 0.0
      %3159 = vmatpush1.msra.mxu0 0.0
      %3160 = vmatprep.subr.mxu0 0.0
      %3161 = vmatpush1.msra.mxu0 0.0
      %3162 = vmatprep.subr.mxu0 0.0
      %3163 = vmatpush1.msra.mxu0 0.0
      %3164 = vmatprep.subr.mxu0 0.0
      %3165 = vmatpush1.msra.mxu0 0.0
      %3166 = vmatprep.subr.mxu0 0.0
      %3167 = vmatpush1.msra.mxu0 0.0
      %3168 = vmatprep.subr.mxu0 0.0
      %3169 = vmatpush1.msra.mxu0 0.0
      %3170 = vmatprep.subr.mxu0 0.0
      %3171 = vmatpush1.msra.mxu0 0.0
      %3172 = vmatprep.subr.mxu0 0.0
      %3173 = vmatpush1.msra.mxu0 0.0
      %3174 = vmatprep.subr.mxu0 0.0
      %3175 = vmatpush1.msra.mxu0 0.0
      %3176 = vmatprep.subr.mxu0 0.0
      %3177 = vmatpush1.msra.mxu0 0.0
      %3178 = vmatprep.subr.mxu0 0.0
      %3179 = vmatpush1.msra.mxu0 0.0
      %3180 = vmatprep.subr.mxu0 0.0
      %3181 = vmatpush1.msra.mxu0 0.0
      %3182 = vmatprep.subr.mxu0 0.0
      %3183 = vmatpush1.msra.mxu0 0.0
      %3184 = vmatprep.mubr.f32.mxu0 0.0
      %3185 = vmatmul.mubr.f32.gmra.mrb[0].mxu0 %v2952
      %v3186 = vpop.f32.mrb[0].mxu0
      %v3187 = vadd.f32 0.0, %v3186
      %v3188 = vpop.f32.mrb[0].mxu0
      %v3189 = vadd.f32 0.0, %v3188
      %3190 = vdwg.mxu0
      %3191 = vmatprep.subr.mxu0 %v2917
      %3192 = vmatpush1.msra.mxu0 %v2916
      %3193 = vmatprep.subr.mxu0 %v2925
      %3194 = vmatpush1.msra.mxu0 %v2924
      %3195 = vmatprep.subr.mxu0 %v2933
      %3196 = vmatpush1.msra.mxu0 %v2932
      %3197 = vmatprep.subr.mxu0 %v2941
      %3198 = vmatpush1.msra.mxu0 %v2940
      %3199 = vmatprep.subr.mxu0 %v2976
      %3200 = vmatpush1.msra.mxu0 %v2973
      %3201 = vmatprep.subr.mxu0 0.0
      %3202 = vmatpush1.msra.mxu0 0.0
      %3203 = vmatprep.subr.mxu0 0.0
      %3204 = vmatpush1.msra.mxu0 0.0
      %3205 = vmatprep.subr.mxu0 0.0
      %3206 = vmatpush1.msra.mxu0 0.0
      %3207 = vmatprep.subr.mxu0 0.0
      %3208 = vmatpush1.msra.mxu0 0.0
      %3209 = vmatprep.subr.mxu0 0.0
      %3210 = vmatpush1.msra.mxu0 0.0
      %3211 = vmatprep.subr.mxu0 0.0
      %3212 = vmatpush1.msra.mxu0 0.0
      %3213 = vmatprep.subr.mxu0 0.0
      %3214 = vmatpush1.msra.mxu0 0.0
      %3215 = vmatprep.subr.mxu0 0.0
      %3216 = vmatpush1.msra.mxu0 0.0
      %3217 = vmatprep.subr.mxu0 0.0
      %3218 = vmatpush1.msra.mxu0 0.0
      %3219 = vmatprep.subr.mxu0 0.0
      %3220 = vmatpush1.msra.mxu0 0.0
      %3221 = vmatprep.subr.mxu0 0.0
      %3222 = vmatpush1.msra.mxu0 0.0
      %3223 = vmatprep.subr.mxu0 0.0
      %3224 = vmatpush1.msra.mxu0 0.0
      %3225 = vmatprep.subr.mxu0 0.0
      %3226 = vmatpush1.msra.mxu0 0.0
      %3227 = vmatprep.subr.mxu0 0.0
      %3228 = vmatpush1.msra.mxu0 0.0
      %3229 = vmatprep.subr.mxu0 0.0
      %3230 = vmatpush1.msra.mxu0 0.0
      %3231 = vmatprep.subr.mxu0 0.0
      %3232 = vmatpush1.msra.mxu0 0.0
      %3233 = vmatprep.subr.mxu0 0.0
      %3234 = vmatpush1.msra.mxu0 0.0
      %3235 = vmatprep.subr.mxu0 0.0
      %3236 = vmatpush1.msra.mxu0 0.0
      %3237 = vmatprep.subr.mxu0 0.0
      %3238 = vmatpush1.msra.mxu0 0.0
      %3239 = vmatprep.subr.mxu0 0.0
      %3240 = vmatpush1.msra.mxu0 0.0
      %3241 = vmatprep.subr.mxu0 0.0
      %3242 = vmatpush1.msra.mxu0 0.0
      %3243 = vmatprep.subr.mxu0 0.0
      %3244 = vmatpush1.msra.mxu0 0.0
      %3245 = vmatprep.subr.mxu0 0.0
      %3246 = vmatpush1.msra.mxu0 0.0
      %3247 = vmatprep.subr.mxu0 0.0
      %3248 = vmatpush1.msra.mxu0 0.0
      %3249 = vmatprep.subr.mxu0 0.0
      %3250 = vmatpush1.msra.mxu0 0.0
      %3251 = vmatprep.subr.mxu0 0.0
      %3252 = vmatpush1.msra.mxu0 0.0
      %3253 = vmatprep.subr.mxu0 0.0
      %3254 = vmatpush1.msra.mxu0 0.0
      %3255 = vmatprep.mubr.f32.mxu0 0.0
      %3256 = vmatmul.mubr.f32.gmra.mrb[0].mxu0 %v2952
      %v3257 = vpop.f32.mrb[0].mxu0
      %v3258 = vadd.f32 0.0, %v3257
      %v3259 = vpop.f32.mrb[0].mxu0
      %v3260 = vadd.f32 0.0, %v3259
      %3261 = vdwg.mxu0
      %v3262 = vpack.c.bf16 %v3045, %v3045
      %v3263 = vpack.c.bf16 %v3047, %v3047
      %v3264 = vpack.c.bf16 %v3116, %v3116
      %v3265 = vpack.c.bf16 %v3118, %v3118
      %v3266 = vpack.c.bf16 %v3187, %v3187
      %v3267 = vpack.c.bf16 %v3189, %v3189
      %v3268 = vpack.c.bf16 %v3258, %v3258
      %v3269 = vpack.c.bf16 %v3260, %v3260
      %v3270 = vld [vmem:[%s7] sm:$0xff]
      %v3271 = vld [vmem:[%s7 + $0x8] sm:$0xff]
      %v3272 = vld [vmem:[%s7 + $0x10] sm:$0xff]
      %v3273 = vld [vmem:[%s7 + $0x18] sm:$0xff]
      %v3274 = vld [vmem:[%s7 + $0x20] sm:$0xff]
      %v3275 = vld [vmem:[%s7 + $0x28] sm:$0xff]
      %v3276 = vld [vmem:[%s7 + $0x30] sm:$0xff]
      %v3277 = vld [vmem:[%s7 + $0x38] sm:$0xff]
      %v3278 = vld [vmem:[%s7 + $0x40] sm:$0xff]
      %v3279 = vld [vmem:[%s7 + $0x48] sm:$0xff]
      %v3280 = vld [vmem:[%s7 + $0x50] sm:$0xff]
      %v3281 = vld [vmem:[%s7 + $0x58] sm:$0xff]
      %v3282 = vld [vmem:[%s7 + $0x60] sm:$0xff]
      %v3283 = vld [vmem:[%s7 + $0x68] sm:$0xff]
      %v3284 = vld [vmem:[%s7 + $0x70] sm:$0xff]
      %v3285 = vld [vmem:[%s7 + $0x78] sm:$0xff]
      %v3286 = vld [vmem:[%s7 + $0x80] sm:$0xff]
      %v3287 = vld [vmem:[%s7 + $0x88] sm:$0xff]
      %v3288 = vld [vmem:[%s7 + $0x90] sm:$0xff]
      %v3289 = vld [vmem:[%s7 + $0x98] sm:$0xff]
      %v3290 = vld [vmem:[%s7 + $0xa0] sm:$0xff]
      %v3291 = vld [vmem:[%s7 + $0xa8] sm:$0xff]
      %v3292 = vld [vmem:[%s7 + $0xb0] sm:$0xff]
      %v3293 = vld [vmem:[%s7 + $0xb8] sm:$0xff]
      %v3294 = vld [vmem:[%s7 + $0xc0] sm:$0xff]
      %v3295 = vld [vmem:[%s7 + $0xc8] sm:$0xff]
      %v3296 = vld [vmem:[%s7 + $0xd0] sm:$0xff]
      %v3297 = vld [vmem:[%s7 + $0xd8] sm:$0xff]
      %v3298 = vld [vmem:[%s7 + $0xe0] sm:$0xff]
      %v3299 = vld [vmem:[%s7 + $0xe8] sm:$0xff]
      %v3300 = vld [vmem:[%s7 + $0xf0] sm:$0xff]
      %v3301 = vld [vmem:[%s7 + $0xf8] sm:$0xff]
      %v3302 = vld [vmem:[%s7 + $0x100] sm:$0xff]
      %v3303 = vld [vmem:[%s7 + $0x108] sm:$0xff]
      %v3304 = vld [vmem:[%s7 + $0x110] sm:$0xff]
      %v3305 = vld [vmem:[%s7 + $0x118] sm:$0xff]
      %v3306 = vld [vmem:[%s7 + $0x120] sm:$0xff]
      %v3307 = vld [vmem:[%s7 + $0x128] sm:$0xff]
      %v3308 = vld [vmem:[%s7 + $0x130] sm:$0xff]
      %v3309 = vld [vmem:[%s7 + $0x138] sm:$0xff]
      %v3310 = vld [vmem:[%s7 + $0x140] sm:$0xff]
      %v3311 = vld [vmem:[%s7 + $0x148] sm:$0xff]
      %v3312 = vld [vmem:[%s7 + $0x150] sm:$0xff]
      %v3313 = vld [vmem:[%s7 + $0x158] sm:$0xff]
      %v3314 = vld [vmem:[%s7 + $0x160] sm:$0xff]
      %v3315 = vld [vmem:[%s7 + $0x168] sm:$0xff]
      %v3316 = vld [vmem:[%s7 + $0x170] sm:$0xff]
      %v3317 = vld [vmem:[%s7 + $0x178] sm:$0xff]
      %v3318 = vld [vmem:[%s7 + $0x180] sm:$0xff]
      %v3319 = vld [vmem:[%s7 + $0x188] sm:$0xff]
      %v3320 = vld [vmem:[%s7 + $0x190] sm:$0xff]
      %v3321 = vld [vmem:[%s7 + $0x198] sm:$0xff]
      %v3322 = vld [vmem:[%s7 + $0x1a0] sm:$0xff]
      %v3323 = vld [vmem:[%s7 + $0x1a8] sm:$0xff]
      %v3324 = vld [vmem:[%s7 + $0x1b0] sm:$0xff]
      %v3325 = vld [vmem:[%s7 + $0x1b8] sm:$0xff]
      %v3326 = vld [vmem:[%s7 + $0x1c0] sm:$0xff]
      %v3327 = vld [vmem:[%s7 + $0x1c8] sm:$0xff]
      %v3328 = vld [vmem:[%s7 + $0x1d0] sm:$0xff]
      %v3329 = vld [vmem:[%s7 + $0x1d8] sm:$0xff]
      %v3330 = vld [vmem:[%s7 + $0x1e0] sm:$0xff]
      %v3331 = vld [vmem:[%s7 + $0x1e8] sm:$0xff]
      %v3332 = vld [vmem:[%s7 + $0x1f0] sm:$0xff]
      %v3333 = vld [vmem:[%s7 + $0x1f8] sm:$0xff]
      %v3334 = vld [vmem:[%s7 + $0x200] sm:$0xff]
      %v3335 = vld [vmem:[%s7 + $0x208] sm:$0xff]
      %v3336 = vld [vmem:[%s7 + $0x210] sm:$0xff]
      %v3337 = vld [vmem:[%s7 + $0x218] sm:$0xff]
      %v3338 = vld [vmem:[%s7 + $0x220] sm:$0xff]
      %v3339 = vld [vmem:[%s7 + $0x228] sm:$0xff]
      %v3340 = vld [vmem:[%s7 + $0x230] sm:$0xff]
      %v3341 = vld [vmem:[%s7 + $0x238] sm:$0xff]
      %v3342 = vld [vmem:[%s7 + $0x240] sm:$0xff]
      %v3343 = vld [vmem:[%s7 + $0x248] sm:$0xff]
      %v3344 = vld [vmem:[%s7 + $0x250] sm:$0xff]
      %v3345 = vld [vmem:[%s7 + $0x258] sm:$0xff]
      %v3346 = vld [vmem:[%s7 + $0x260] sm:$0xff]
      %v3347 = vld [vmem:[%s7 + $0x268] sm:$0xff]
      %v3348 = vld [vmem:[%s7 + $0x270] sm:$0xff]
      %v3349 = vld [vmem:[%s7 + $0x278] sm:$0xff]
      %v3350 = vld [vmem:[%s7 + $0x280] sm:$0xff]
      %v3351 = vld [vmem:[%s7 + $0x288] sm:$0xff]
      %v3352 = vld [vmem:[%s7 + $0x290] sm:$0xff]
      %v3353 = vld [vmem:[%s7 + $0x298] sm:$0xff]
      %v3354 = vld [vmem:[%s7 + $0x2a0] sm:$0xff]
      %v3355 = vld [vmem:[%s7 + $0x2a8] sm:$0xff]
      %v3356 = vld [vmem:[%s7 + $0x2b0] sm:$0xff]
      %v3357 = vld [vmem:[%s7 + $0x2b8] sm:$0xff]
      %v3358 = vld [vmem:[%s7 + $0x2c0] sm:$0xff]
      %v3359 = vld [vmem:[%s7 + $0x2c8] sm:$0xff]
      %v3360 = vld [vmem:[%s7 + $0x2d0] sm:$0xff]
      %v3361 = vld [vmem:[%s7 + $0x2d8] sm:$0xff]
      %v3362 = vld [vmem:[%s7 + $0x2e0] sm:$0xff]
      %v3363 = vld [vmem:[%s7 + $0x2e8] sm:$0xff]
      %v3364 = vld [vmem:[%s7 + $0x2f0] sm:$0xff]
      %v3365 = vld [vmem:[%s7 + $0x2f8] sm:$0xff]
      %v3366 = vld [vmem:[%s7 + $0x300] sm:$0xff]
      %v3367 = vld [vmem:[%s7 + $0x308] sm:$0xff]
      %v3368 = vld [vmem:[%s7 + $0x310] sm:$0xff]
      %v3369 = vld [vmem:[%s7 + $0x318] sm:$0xff]
      %v3370 = vld [vmem:[%s7 + $0x320] sm:$0xff]
      %v3371 = vld [vmem:[%s7 + $0x328] sm:$0xff]
      %v3372 = vld [vmem:[%s7 + $0x330] sm:$0xff]
      %v3373 = vld [vmem:[%s7 + $0x338] sm:$0xff]
      %v3374 = vld [vmem:[%s7 + $0x340] sm:$0xff]
      %v3375 = vld [vmem:[%s7 + $0x348] sm:$0xff]
      %v3376 = vld [vmem:[%s7 + $0x350] sm:$0xff]
      %v3377 = vld [vmem:[%s7 + $0x358] sm:$0xff]
      %v3378 = vld [vmem:[%s7 + $0x360] sm:$0xff]
      %v3379 = vld [vmem:[%s7 + $0x368] sm:$0xff]
      %v3380 = vld [vmem:[%s7 + $0x370] sm:$0xff]
      %v3381 = vld [vmem:[%s7 + $0x378] sm:$0xff]
      %v3382 = vld [vmem:[%s7 + $0x380] sm:$0xff]
      %v3383 = vld [vmem:[%s7 + $0x388] sm:$0xff]
      %v3384 = vld [vmem:[%s7 + $0x390] sm:$0xff]
      %v3385 = vld [vmem:[%s7 + $0x398] sm:$0xff]
      %v3386 = vld [vmem:[%s7 + $0x3a0] sm:$0xff]
      %v3387 = vld [vmem:[%s7 + $0x3a8] sm:$0xff]
      %v3388 = vld [vmem:[%s7 + $0x3b0] sm:$0xff]
      %v3389 = vld [vmem:[%s7 + $0x3b8] sm:$0xff]
      %v3390 = vld [vmem:[%s7 + $0x3c0] sm:$0xff]
      %v3391 = vld [vmem:[%s7 + $0x3c8] sm:$0xff]
      %v3392 = vld [vmem:[%s7 + $0x3d0] sm:$0xff]
      %v3393 = vld [vmem:[%s7 + $0x3d8] sm:$0xff]
      %v3394 = vld [vmem:[%s7 + $0x3e0] sm:$0xff]
      %v3395 = vld [vmem:[%s7 + $0x3e8] sm:$0xff]
      %v3396 = vld [vmem:[%s7 + $0x3f0] sm:$0xff]
      %v3397 = vld [vmem:[%s7 + $0x3f8] sm:$0xff]
      %v3526 = vunpack.c.l.b16 %v3270
      %v3527 = vunpack.c.h.b16 %v3270
      %v3528 = vunpack.c.l.b16 %v3271
      %v3529 = vunpack.c.h.b16 %v3271
      %v3530 = vunpack.c.l.b16 %v3272
      %v3531 = vunpack.c.h.b16 %v3272
      %v3532 = vunpack.c.l.b16 %v3273
      %v3533 = vunpack.c.h.b16 %v3273
      %v3534 = vunpack.c.l.b16 %v3274
      %v3535 = vunpack.c.h.b16 %v3274
      %v3536 = vunpack.c.l.b16 %v3275
      %v3537 = vunpack.c.h.b16 %v3275
      %v3538 = vunpack.c.l.b16 %v3276
      %v3539 = vunpack.c.h.b16 %v3276
      %v3540 = vunpack.c.l.b16 %v3277
      %v3541 = vunpack.c.h.b16 %v3277
      %v3542 = vunpack.c.l.b16 %v3278
      %v3543 = vunpack.c.h.b16 %v3278
      %v3544 = vunpack.c.l.b16 %v3279
      %v3545 = vunpack.c.h.b16 %v3279
      %v3546 = vunpack.c.l.b16 %v3280
      %v3547 = vunpack.c.h.b16 %v3280
      %v3548 = vunpack.c.l.b16 %v3281
      %v3549 = vunpack.c.h.b16 %v3281
      %v3550 = vunpack.c.l.b16 %v3282
      %v3551 = vunpack.c.h.b16 %v3282
      %v3552 = vunpack.c.l.b16 %v3283
      %v3553 = vunpack.c.h.b16 %v3283
      %v3554 = vunpack.c.l.b16 %v3284
      %v3555 = vunpack.c.h.b16 %v3284
      %v3556 = vunpack.c.l.b16 %v3285
      %v3557 = vunpack.c.h.b16 %v3285
      %v3558 = vunpack.c.l.b16 %v3286
      %v3559 = vunpack.c.h.b16 %v3286
      %v3560 = vunpack.c.l.b16 %v3287
      %v3561 = vunpack.c.h.b16 %v3287
      %v3562 = vunpack.c.l.b16 %v3288
      %v3563 = vunpack.c.h.b16 %v3288
      %v3564 = vunpack.c.l.b16 %v3289
      %v3565 = vunpack.c.h.b16 %v3289
      %v3566 = vunpack.c.l.b16 %v3290
      %v3567 = vunpack.c.h.b16 %v3290
      %v3568 = vunpack.c.l.b16 %v3291
      %v3569 = vunpack.c.h.b16 %v3291
      %v3570 = vunpack.c.l.b16 %v3292
      %v3571 = vunpack.c.h.b16 %v3292
      %v3572 = vunpack.c.l.b16 %v3293
      %v3573 = vunpack.c.h.b16 %v3293
      %v3574 = vunpack.c.l.b16 %v3294
      %v3575 = vunpack.c.h.b16 %v3294
      %v3576 = vunpack.c.l.b16 %v3295
      %v3577 = vunpack.c.h.b16 %v3295
      %v3578 = vunpack.c.l.b16 %v3296
      %v3579 = vunpack.c.h.b16 %v3296
      %v3580 = vunpack.c.l.b16 %v3297
      %v3581 = vunpack.c.h.b16 %v3297
      %v3582 = vunpack.c.l.b16 %v3298
      %v3583 = vunpack.c.h.b16 %v3298
      %v3584 = vunpack.c.l.b16 %v3299
      %v3585 = vunpack.c.h.b16 %v3299
      %v3586 = vunpack.c.l.b16 %v3300
      %v3587 = vunpack.c.h.b16 %v3300
      %v3588 = vunpack.c.l.b16 %v3301
      %v3589 = vunpack.c.h.b16 %v3301
      %v3590 = vunpack.c.l.b16 %v3302
      %v3591 = vunpack.c.h.b16 %v3302
      %v3592 = vunpack.c.l.b16 %v3303
      %v3593 = vunpack.c.h.b16 %v3303
      %v3594 = vunpack.c.l.b16 %v3304
      %v3595 = vunpack.c.h.b16 %v3304
      %v3596 = vunpack.c.l.b16 %v3305
      %v3597 = vunpack.c.h.b16 %v3305
      %v3598 = vunpack.c.l.b16 %v3306
      %v3599 = vunpack.c.h.b16 %v3306
      %v3600 = vunpack.c.l.b16 %v3307
      %v3601 = vunpack.c.h.b16 %v3307
      %v3602 = vunpack.c.l.b16 %v3308
      %v3603 = vunpack.c.h.b16 %v3308
      %v3604 = vunpack.c.l.b16 %v3309
      %v3605 = vunpack.c.h.b16 %v3309
      %v3606 = vunpack.c.l.b16 %v3310
      %v3607 = vunpack.c.h.b16 %v3310
      %v3608 = vunpack.c.l.b16 %v3311
      %v3609 = vunpack.c.h.b16 %v3311
      %v3610 = vunpack.c.l.b16 %v3312
      %v3611 = vunpack.c.h.b16 %v3312
      %v3612 = vunpack.c.l.b16 %v3313
      %v3613 = vunpack.c.h.b16 %v3313
      %v3614 = vunpack.c.l.b16 %v3314
      %v3615 = vunpack.c.h.b16 %v3314
      %v3616 = vunpack.c.l.b16 %v3315
      %v3617 = vunpack.c.h.b16 %v3315
      %v3618 = vunpack.c.l.b16 %v3316
      %v3619 = vunpack.c.h.b16 %v3316
      %v3620 = vunpack.c.l.b16 %v3317
      %v3621 = vunpack.c.h.b16 %v3317
      %v3622 = vunpack.c.l.b16 %v3318
      %v3623 = vunpack.c.h.b16 %v3318
      %v3624 = vunpack.c.l.b16 %v3319
      %v3625 = vunpack.c.h.b16 %v3319
      %v3626 = vunpack.c.l.b16 %v3320
      %v3627 = vunpack.c.h.b16 %v3320
      %v3628 = vunpack.c.l.b16 %v3321
      %v3629 = vunpack.c.h.b16 %v3321
      %v3630 = vunpack.c.l.b16 %v3322
      %v3631 = vunpack.c.h.b16 %v3322
      %v3632 = vunpack.c.l.b16 %v3323
      %v3633 = vunpack.c.h.b16 %v3323
      %v3634 = vunpack.c.l.b16 %v3324
      %v3635 = vunpack.c.h.b16 %v3324
      %v3636 = vunpack.c.l.b16 %v3325
      %v3637 = vunpack.c.h.b16 %v3325
      %v3638 = vunpack.c.l.b16 %v3326
      %v3639 = vunpack.c.h.b16 %v3326
      %v3640 = vunpack.c.l.b16 %v3327
      %v3641 = vunpack.c.h.b16 %v3327
      %v3642 = vunpack.c.l.b16 %v3328
      %v3643 = vunpack.c.h.b16 %v3328
      %v3644 = vunpack.c.l.b16 %v3329
      %v3645 = vunpack.c.h.b16 %v3329
      %v3646 = vunpack.c.l.b16 %v3330
      %v3647 = vunpack.c.h.b16 %v3330
      %v3648 = vunpack.c.l.b16 %v3331
      %v3649 = vunpack.c.h.b16 %v3331
      %v3650 = vunpack.c.l.b16 %v3332
      %v3651 = vunpack.c.h.b16 %v3332
      %v3652 = vunpack.c.l.b16 %v3333
      %v3653 = vunpack.c.h.b16 %v3333
      %v3654 = vunpack.c.l.b16 %v3334
      %v3655 = vunpack.c.h.b16 %v3334
      %v3656 = vunpack.c.l.b16 %v3335
      %v3657 = vunpack.c.h.b16 %v3335
      %v3658 = vunpack.c.l.b16 %v3336
      %v3659 = vunpack.c.h.b16 %v3336
      %v3660 = vunpack.c.l.b16 %v3337
      %v3661 = vunpack.c.h.b16 %v3337
      %v3662 = vunpack.c.l.b16 %v3338
      %v3663 = vunpack.c.h.b16 %v3338
      %v3664 = vunpack.c.l.b16 %v3339
      %v3665 = vunpack.c.h.b16 %v3339
      %v3666 = vunpack.c.l.b16 %v3340
      %v3667 = vunpack.c.h.b16 %v3340
      %v3668 = vunpack.c.l.b16 %v3341
      %v3669 = vunpack.c.h.b16 %v3341
      %v3670 = vunpack.c.l.b16 %v3342
      %v3671 = vunpack.c.h.b16 %v3342
      %v3672 = vunpack.c.l.b16 %v3343
      %v3673 = vunpack.c.h.b16 %v3343
      %v3674 = vunpack.c.l.b16 %v3344
      %v3675 = vunpack.c.h.b16 %v3344
      %v3676 = vunpack.c.l.b16 %v3345
      %v3677 = vunpack.c.h.b16 %v3345
      %v3678 = vunpack.c.l.b16 %v3346
      %v3679 = vunpack.c.h.b16 %v3346
      %v3680 = vunpack.c.l.b16 %v3347
      %v3681 = vunpack.c.h.b16 %v3347
      %v3682 = vunpack.c.l.b16 %v3348
      %v3683 = vunpack.c.h.b16 %v3348
      %v3684 = vunpack.c.l.b16 %v3349
      %v3685 = vunpack.c.h.b16 %v3349
      %v3686 = vunpack.c.l.b16 %v3350
      %v3687 = vunpack.c.h.b16 %v3350
      %v3688 = vunpack.c.l.b16 %v3351
      %v3689 = vunpack.c.h.b16 %v3351
      %v3690 = vunpack.c.l.b16 %v3352
      %v3691 = vunpack.c.h.b16 %v3352
      %v3692 = vunpack.c.l.b16 %v3353
      %v3693 = vunpack.c.h.b16 %v3353
      %v3694 = vunpack.c.l.b16 %v3354
      %v3695 = vunpack.c.h.b16 %v3354
      %v3696 = vunpack.c.l.b16 %v3355
      %v3697 = vunpack.c.h.b16 %v3355
      %v3698 = vunpack.c.l.b16 %v3356
      %v3699 = vunpack.c.h.b16 %v3356
      %v3700 = vunpack.c.l.b16 %v3357
      %v3701 = vunpack.c.h.b16 %v3357
      %v3702 = vunpack.c.l.b16 %v3358
      %v3703 = vunpack.c.h.b16 %v3358
      %v3704 = vunpack.c.l.b16 %v3359
      %v3705 = vunpack.c.h.b16 %v3359
      %v3706 = vunpack.c.l.b16 %v3360
      %v3707 = vunpack.c.h.b16 %v3360
      %v3708 = vunpack.c.l.b16 %v3361
      %v3709 = vunpack.c.h.b16 %v3361
      %v3710 = vunpack.c.l.b16 %v3362
      %v3711 = vunpack.c.h.b16 %v3362
      %v3712 = vunpack.c.l.b16 %v3363
      %v3713 = vunpack.c.h.b16 %v3363
      %v3714 = vunpack.c.l.b16 %v3364
      %v3715 = vunpack.c.h.b16 %v3364
      %v3716 = vunpack.c.l.b16 %v3365
      %v3717 = vunpack.c.h.b16 %v3365
      %v3718 = vunpack.c.l.b16 %v3366
      %v3719 = vunpack.c.h.b16 %v3366
      %v3720 = vunpack.c.l.b16 %v3367
      %v3721 = vunpack.c.h.b16 %v3367
      %v3722 = vunpack.c.l.b16 %v3368
      %v3723 = vunpack.c.h.b16 %v3368
      %v3724 = vunpack.c.l.b16 %v3369
      %v3725 = vunpack.c.h.b16 %v3369
      %v3726 = vunpack.c.l.b16 %v3370
      %v3727 = vunpack.c.h.b16 %v3370
      %v3728 = vunpack.c.l.b16 %v3371
      %v3729 = vunpack.c.h.b16 %v3371
      %v3730 = vunpack.c.l.b16 %v3372
      %v3731 = vunpack.c.h.b16 %v3372
      %v3732 = vunpack.c.l.b16 %v3373
      %v3733 = vunpack.c.h.b16 %v3373
      %v3734 = vunpack.c.l.b16 %v3374
      %v3735 = vunpack.c.h.b16 %v3374
      %v3736 = vunpack.c.l.b16 %v3375
      %v3737 = vunpack.c.h.b16 %v3375
      %v3738 = vunpack.c.l.b16 %v3376
      %v3739 = vunpack.c.h.b16 %v3376
      %v3740 = vunpack.c.l.b16 %v3377
      %v3741 = vunpack.c.h.b16 %v3377
      %v3742 = vunpack.c.l.b16 %v3378
      %v3743 = vunpack.c.h.b16 %v3378
      %v3744 = vunpack.c.l.b16 %v3379
      %v3745 = vunpack.c.h.b16 %v3379
      %v3746 = vunpack.c.l.b16 %v3380
      %v3747 = vunpack.c.h.b16 %v3380
      %v3748 = vunpack.c.l.b16 %v3381
      %v3749 = vunpack.c.h.b16 %v3381
      %v3750 = vunpack.c.l.b16 %v3382
      %v3751 = vunpack.c.h.b16 %v3382
      %v3752 = vunpack.c.l.b16 %v3383
      %v3753 = vunpack.c.h.b16 %v3383
      %v3754 = vunpack.c.l.b16 %v3384
      %v3755 = vunpack.c.h.b16 %v3384
      %v3756 = vunpack.c.l.b16 %v3385
      %v3757 = vunpack.c.h.b16 %v3385
      %v3758 = vunpack.c.l.b16 %v3386
      %v3759 = vunpack.c.h.b16 %v3386
      %v3760 = vunpack.c.l.b16 %v3387
      %v3761 = vunpack.c.h.b16 %v3387
      %v3762 = vunpack.c.l.b16 %v3388
      %v3763 = vunpack.c.h.b16 %v3388
      %v3764 = vunpack.c.l.b16 %v3389
      %v3765 = vunpack.c.h.b16 %v3389
      %v3766 = vunpack.c.l.b16 %v3390
      %v3767 = vunpack.c.h.b16 %v3390
      %v3768 = vunpack.c.l.b16 %v3391
      %v3769 = vunpack.c.h.b16 %v3391
      %v3770 = vunpack.c.l.b16 %v3392
      %v3771 = vunpack.c.h.b16 %v3392
      %v3772 = vunpack.c.l.b16 %v3393
      %v3773 = vunpack.c.h.b16 %v3393
      %v3774 = vunpack.c.l.b16 %v3394
      %v3775 = vunpack.c.h.b16 %v3394
      %v3776 = vunpack.c.l.b16 %v3395
      %v3777 = vunpack.c.h.b16 %v3395
      %v3778 = vunpack.c.l.b16 %v3396
      %v3779 = vunpack.c.h.b16 %v3396
      %v3780 = vunpack.c.l.b16 %v3397
      %v3781 = vunpack.c.h.b16 %v3397
      %v3782 = vpack.c.b16 %v3528, %v3526
      %v3783 = vpack.c.b16 %v3529, %v3527
      %v3784 = vpack.c.b16 %v3532, %v3530
      %v3785 = vpack.c.b16 %v3533, %v3531
      %v3786 = vpack.c.b16 %v3536, %v3534
      %v3787 = vpack.c.b16 %v3537, %v3535
      %v3788 = vpack.c.b16 %v3540, %v3538
      %v3789 = vpack.c.b16 %v3541, %v3539
      %v3790 = vpack.c.b16 %v3544, %v3542
      %v3791 = vpack.c.b16 %v3545, %v3543
      %v3792 = vpack.c.b16 %v3548, %v3546
      %v3793 = vpack.c.b16 %v3549, %v3547
      %v3794 = vpack.c.b16 %v3552, %v3550
      %v3795 = vpack.c.b16 %v3553, %v3551
      %v3796 = vpack.c.b16 %v3556, %v3554
      %v3797 = vpack.c.b16 %v3557, %v3555
      %v3798 = vpack.c.b16 %v3560, %v3558
      %v3799 = vpack.c.b16 %v3561, %v3559
      %v3800 = vpack.c.b16 %v3564, %v3562
      %v3801 = vpack.c.b16 %v3565, %v3563
      %v3802 = vpack.c.b16 %v3568, %v3566
      %v3803 = vpack.c.b16 %v3569, %v3567
      %v3804 = vpack.c.b16 %v3572, %v3570
      %v3805 = vpack.c.b16 %v3573, %v3571
      %v3806 = vpack.c.b16 %v3576, %v3574
      %v3807 = vpack.c.b16 %v3577, %v3575
      %v3808 = vpack.c.b16 %v3580, %v3578
      %v3809 = vpack.c.b16 %v3581, %v3579
      %v3810 = vpack.c.b16 %v3584, %v3582
      %v3811 = vpack.c.b16 %v3585, %v3583
      %v3812 = vpack.c.b16 %v3588, %v3586
      %v3813 = vpack.c.b16 %v3589, %v3587
      %v3814 = vpack.c.b16 %v3592, %v3590
      %v3815 = vpack.c.b16 %v3593, %v3591
      %v3816 = vpack.c.b16 %v3596, %v3594
      %v3817 = vpack.c.b16 %v3597, %v3595
      %v3818 = vpack.c.b16 %v3600, %v3598
      %v3819 = vpack.c.b16 %v3601, %v3599
      %v3820 = vpack.c.b16 %v3604, %v3602
      %v3821 = vpack.c.b16 %v3605, %v3603
      %v3822 = vpack.c.b16 %v3608, %v3606
      %v3823 = vpack.c.b16 %v3609, %v3607
      %v3824 = vpack.c.b16 %v3612, %v3610
      %v3825 = vpack.c.b16 %v3613, %v3611
      %v3826 = vpack.c.b16 %v3616, %v3614
      %v3827 = vpack.c.b16 %v3617, %v3615
      %v3828 = vpack.c.b16 %v3620, %v3618
      %v3829 = vpack.c.b16 %v3621, %v3619
      %v3830 = vpack.c.b16 %v3624, %v3622
      %v3831 = vpack.c.b16 %v3625, %v3623
      %v3832 = vpack.c.b16 %v3628, %v3626
      %v3833 = vpack.c.b16 %v3629, %v3627
      %v3834 = vpack.c.b16 %v3632, %v3630
      %v3835 = vpack.c.b16 %v3633, %v3631
      %v3836 = vpack.c.b16 %v3636, %v3634
      %v3837 = vpack.c.b16 %v3637, %v3635
      %v3838 = vpack.c.b16 %v3640, %v3638
      %v3839 = vpack.c.b16 %v3641, %v3639
      %v3840 = vpack.c.b16 %v3644, %v3642
      %v3841 = vpack.c.b16 %v3645, %v3643
      %v3842 = vpack.c.b16 %v3648, %v3646
      %v3843 = vpack.c.b16 %v3649, %v3647
      %v3844 = vpack.c.b16 %v3652, %v3650
      %v3845 = vpack.c.b16 %v3653, %v3651
      %v3846 = vpack.c.b16 %v3656, %v3654
      %v3847 = vpack.c.b16 %v3657, %v3655
      %v3848 = vpack.c.b16 %v3660, %v3658
      %v3849 = vpack.c.b16 %v3661, %v3659
      %v3850 = vpack.c.b16 %v3664, %v3662
      %v3851 = vpack.c.b16 %v3665, %v3663
      %v3852 = vpack.c.b16 %v3668, %v3666
      %v3853 = vpack.c.b16 %v3669, %v3667
      %v3854 = vpack.c.b16 %v3672, %v3670
      %v3855 = vpack.c.b16 %v3673, %v3671
      %v3856 = vpack.c.b16 %v3676, %v3674
      %v3857 = vpack.c.b16 %v3677, %v3675
      %v3858 = vpack.c.b16 %v3680, %v3678
      %v3859 = vpack.c.b16 %v3681, %v3679
      %v3860 = vpack.c.b16 %v3684, %v3682
      %v3861 = vpack.c.b16 %v3685, %v3683
      %v3862 = vpack.c.b16 %v3688, %v3686
      %v3863 = vpack.c.b16 %v3689, %v3687
      %v3864 = vpack.c.b16 %v3692, %v3690
      %v3865 = vpack.c.b16 %v3693, %v3691
      %v3866 = vpack.c.b16 %v3696, %v3694
      %v3867 = vpack.c.b16 %v3697, %v3695
      %v3868 = vpack.c.b16 %v3700, %v3698
      %v3869 = vpack.c.b16 %v3701, %v3699
      %v3870 = vpack.c.b16 %v3704, %v3702
      %v3871 = vpack.c.b16 %v3705, %v3703
      %v3872 = vpack.c.b16 %v3708, %v3706
      %v3873 = vpack.c.b16 %v3709, %v3707
      %v3874 = vpack.c.b16 %v3712, %v3710
      %v3875 = vpack.c.b16 %v3713, %v3711
      %v3876 = vpack.c.b16 %v3716, %v3714
      %v3877 = vpack.c.b16 %v3717, %v3715
      %v3878 = vpack.c.b16 %v3720, %v3718
      %v3879 = vpack.c.b16 %v3721, %v3719
      %v3880 = vpack.c.b16 %v3724, %v3722
      %v3881 = vpack.c.b16 %v3725, %v3723
      %v3882 = vpack.c.b16 %v3728, %v3726
      %v3883 = vpack.c.b16 %v3729, %v3727
      %v3884 = vpack.c.b16 %v3732, %v3730
      %v3885 = vpack.c.b16 %v3733, %v3731
      %v3886 = vpack.c.b16 %v3736, %v3734
      %v3887 = vpack.c.b16 %v3737, %v3735
      %v3888 = vpack.c.b16 %v3740, %v3738
      %v3889 = vpack.c.b16 %v3741, %v3739
      %v3890 = vpack.c.b16 %v3744, %v3742
      %v3891 = vpack.c.b16 %v3745, %v3743
      %v3892 = vpack.c.b16 %v3748, %v3746
      %v3893 = vpack.c.b16 %v3749, %v3747
      %v3894 = vpack.c.b16 %v3752, %v3750
      %v3895 = vpack.c.b16 %v3753, %v3751
      %v3896 = vpack.c.b16 %v3756, %v3754
      %v3897 = vpack.c.b16 %v3757, %v3755
      %v3898 = vpack.c.b16 %v3760, %v3758
      %v3899 = vpack.c.b16 %v3761, %v3759
      %v3900 = vpack.c.b16 %v3764, %v3762
      %v3901 = vpack.c.b16 %v3765, %v3763
      %v3902 = vpack.c.b16 %v3768, %v3766
      %v3903 = vpack.c.b16 %v3769, %v3767
      %v3904 = vpack.c.b16 %v3772, %v3770
      %v3905 = vpack.c.b16 %v3773, %v3771
      %v3906 = vpack.c.b16 %v3776, %v3774
      %v3907 = vpack.c.b16 %v3777, %v3775
      %v3908 = vpack.c.b16 %v3780, %v3778
      %v3909 = vpack.c.b16 %v3781, %v3779
      %4038 = vmatprep.subr.bf16.mxu0 %v3783
      %4039 = vmatpush1.bf16.msra.mxu0 %v3782
      %4040 = vmatprep.subr.bf16.mxu0 %v3785
      %4041 = vmatpush1.bf16.msra.mxu0 %v3784
      %4042 = vmatprep.subr.bf16.mxu0 %v3787
      %4043 = vmatpush1.bf16.msra.mxu0 %v3786
      %4044 = vmatprep.subr.bf16.mxu0 %v3789
      %4045 = vmatpush1.bf16.msra.mxu0 %v3788
      %4046 = vmatprep.subr.bf16.mxu0 %v3791
      %4047 = vmatpush1.bf16.msra.mxu0 %v3790
      %4048 = vmatprep.subr.bf16.mxu0 %v3793
      %4049 = vmatpush1.bf16.msra.mxu0 %v3792
      %4050 = vmatprep.subr.bf16.mxu0 %v3795
      %4051 = vmatpush1.bf16.msra.mxu0 %v3794
      %4052 = vmatprep.subr.bf16.mxu0 %v3797
      %4053 = vmatpush1.bf16.msra.mxu0 %v3796
      %4054 = vmatprep.subr.bf16.mxu0 %v3799
      %4055 = vmatpush1.bf16.msra.mxu0 %v3798
      %4056 = vmatprep.subr.bf16.mxu0 %v3801
      %4057 = vmatpush1.bf16.msra.mxu0 %v3800
      %4058 = vmatprep.subr.bf16.mxu0 %v3803
      %4059 = vmatpush1.bf16.msra.mxu0 %v3802
      %4060 = vmatprep.subr.bf16.mxu0 %v3805
      %4061 = vmatpush1.bf16.msra.mxu0 %v3804
      %4062 = vmatprep.subr.bf16.mxu0 %v3807
      %4063 = vmatpush1.bf16.msra.mxu0 %v3806
      %4064 = vmatprep.subr.bf16.mxu0 %v3809
      %4065 = vmatpush1.bf16.msra.mxu0 %v3808
      %4066 = vmatprep.subr.bf16.mxu0 %v3811
      %4067 = vmatpush1.bf16.msra.mxu0 %v3810
      %4068 = vmatprep.subr.bf16.mxu0 %v3813
      %4069 = vmatpush1.bf16.msra.mxu0 %v3812
      %4070 = vmatprep.mubr.bf16.mxu0 %v3263
      %4071 = vmatmul.mubr.bf16.gmra.mrb[0].mxu0 %v3262
      %v4072 = vpop.f32.mrb[0].mxu0
      %v4073 = vadd.f32 0.0, %v4072
      %v4074 = vpop.f32.mrb[0].mxu0
      %v4075 = vadd.f32 0.0, %v4074
      %v4076 = vpop.f32.mrb[0].mxu0
      %v4077 = vpop.f32.mrb[0].mxu0
      %4078 = vdwg.mxu0
      %4079 = vmatprep.subr.bf16.mxu0 %v3815
      %4080 = vmatpush1.bf16.msra.mxu0 %v3814
      %4081 = vmatprep.subr.bf16.mxu0 %v3817
      %4082 = vmatpush1.bf16.msra.mxu0 %v3816
      %4083 = vmatprep.subr.bf16.mxu0 %v3819
      %4084 = vmatpush1.bf16.msra.mxu0 %v3818
      %4085 = vmatprep.subr.bf16.mxu0 %v3821
      %4086 = vmatpush1.bf16.msra.mxu0 %v3820
      %4087 = vmatprep.subr.bf16.mxu0 %v3823
      %4088 = vmatpush1.bf16.msra.mxu0 %v3822
      %4089 = vmatprep.subr.bf16.mxu0 %v3825
      %4090 = vmatpush1.bf16.msra.mxu0 %v3824
      %4091 = vmatprep.subr.bf16.mxu0 %v3827
      %4092 = vmatpush1.bf16.msra.mxu0 %v3826
      %4093 = vmatprep.subr.bf16.mxu0 %v3829
      %4094 = vmatpush1.bf16.msra.mxu0 %v3828
      %4095 = vmatprep.subr.bf16.mxu0 %v3831
      %4096 = vmatpush1.bf16.msra.mxu0 %v3830
      %4097 = vmatprep.subr.bf16.mxu0 %v3833
      %4098 = vmatpush1.bf16.msra.mxu0 %v3832
      %4099 = vmatprep.subr.bf16.mxu0 %v3835
      %4100 = vmatpush1.bf16.msra.mxu0 %v3834
      %4101 = vmatprep.subr.bf16.mxu0 %v3837
      %4102 = vmatpush1.bf16.msra.mxu0 %v3836
      %4103 = vmatprep.subr.bf16.mxu0 %v3839
      %4104 = vmatpush1.bf16.msra.mxu0 %v3838
      %4105 = vmatprep.subr.bf16.mxu0 %v3841
      %4106 = vmatpush1.bf16.msra.mxu0 %v3840
      %4107 = vmatprep.subr.bf16.mxu0 %v3843
      %4108 = vmatpush1.bf16.msra.mxu0 %v3842
      %4109 = vmatprep.subr.bf16.mxu0 %v3845
      %4110 = vmatpush1.bf16.msra.mxu0 %v3844
      %4111 = vmatprep.mubr.bf16.mxu0 %v3265
      %4112 = vmatmul.mubr.bf16.gmra.mrb[0].mxu0 %v3264
      %v4113 = vpop.f32.mrb[0].mxu0
      %v4114 = vadd.f32 %v4073, %v4113
      %v4115 = vpop.f32.mrb[0].mxu0
      %v4116 = vadd.f32 %v4075, %v4115
      %v4117 = vpop.f32.mrb[0].mxu0
      %v4118 = vpop.f32.mrb[0].mxu0
      %4119 = vdwg.mxu0
      %4120 = vmatprep.subr.bf16.mxu0 %v3847
      %4121 = vmatpush1.bf16.msra.mxu0 %v3846
      %4122 = vmatprep.subr.bf16.mxu0 %v3849
      %4123 = vmatpush1.bf16.msra.mxu0 %v3848
      %4124 = vmatprep.subr.bf16.mxu0 %v3851
      %4125 = vmatpush1.bf16.msra.mxu0 %v3850
      %4126 = vmatprep.subr.bf16.mxu0 %v3853
      %4127 = vmatpush1.bf16.msra.mxu0 %v3852
      %4128 = vmatprep.subr.bf16.mxu0 %v3855
      %4129 = vmatpush1.bf16.msra.mxu0 %v3854
      %4130 = vmatprep.subr.bf16.mxu0 %v3857
      %4131 = vmatpush1.bf16.msra.mxu0 %v3856
      %4132 = vmatprep.subr.bf16.mxu0 %v3859
      %4133 = vmatpush1.bf16.msra.mxu0 %v3858
      %4134 = vmatprep.subr.bf16.mxu0 %v3861
      %4135 = vmatpush1.bf16.msra.mxu0 %v3860
      %4136 = vmatprep.subr.bf16.mxu0 %v3863
      %4137 = vmatpush1.bf16.msra.mxu0 %v3862
      %4138 = vmatprep.subr.bf16.mxu0 %v3865
      %4139 = vmatpush1.bf16.msra.mxu0 %v3864
      %4140 = vmatprep.subr.bf16.mxu0 %v3867
      %4141 = vmatpush1.bf16.msra.mxu0 %v3866
      %4142 = vmatprep.subr.bf16.mxu0 %v3869
      %4143 = vmatpush1.bf16.msra.mxu0 %v3868
      %4144 = vmatprep.subr.bf16.mxu0 %v3871
      %4145 = vmatpush1.bf16.msra.mxu0 %v3870
      %4146 = vmatprep.subr.bf16.mxu0 %v3873
      %4147 = vmatpush1.bf16.msra.mxu0 %v3872
      %4148 = vmatprep.subr.bf16.mxu0 %v3875
      %4149 = vmatpush1.bf16.msra.mxu0 %v3874
      %4150 = vmatprep.subr.bf16.mxu0 %v3877
      %4151 = vmatpush1.bf16.msra.mxu0 %v3876
      %4152 = vmatprep.mubr.bf16.mxu0 %v3267
      %4153 = vmatmul.mubr.bf16.gmra.mrb[0].mxu0 %v3266
      %v4154 = vpop.f32.mrb[0].mxu0
      %v4155 = vadd.f32 %v4114, %v4154
      %v4156 = vpop.f32.mrb[0].mxu0
      %v4157 = vadd.f32 %v4116, %v4156
      %v4158 = vpop.f32.mrb[0].mxu0
      %v4159 = vpop.f32.mrb[0].mxu0
      %4160 = vdwg.mxu0
      %4161 = vmatprep.subr.bf16.mxu0 %v3879
      %4162 = vmatpush1.bf16.msra.mxu0 %v3878
      %4163 = vmatprep.subr.bf16.mxu0 %v3881
      %4164 = vmatpush1.bf16.msra.mxu0 %v3880
      %4165 = vmatprep.subr.bf16.mxu0 %v3883
      %4166 = vmatpush1.bf16.msra.mxu0 %v3882
      %4167 = vmatprep.subr.bf16.mxu0 %v3885
      %4168 = vmatpush1.bf16.msra.mxu0 %v3884
      %4169 = vmatprep.subr.bf16.mxu0 %v3887
      %4170 = vmatpush1.bf16.msra.mxu0 %v3886
      %4171 = vmatprep.subr.bf16.mxu0 %v3889
      %4172 = vmatpush1.bf16.msra.mxu0 %v3888
      %4173 = vmatprep.subr.bf16.mxu0 %v3891
      %4174 = vmatpush1.bf16.msra.mxu0 %v3890
      %4175 = vmatprep.subr.bf16.mxu0 %v3893
      %4176 = vmatpush1.bf16.msra.mxu0 %v3892
      %4177 = vmatprep.subr.bf16.mxu0 %v3895
      %4178 = vmatpush1.bf16.msra.mxu0 %v3894
      %4179 = vmatprep.subr.bf16.mxu0 %v3897
      %4180 = vmatpush1.bf16.msra.mxu0 %v3896
      %4181 = vmatprep.subr.bf16.mxu0 %v3899
      %4182 = vmatpush1.bf16.msra.mxu0 %v3898
      %4183 = vmatprep.subr.bf16.mxu0 %v3901
      %4184 = vmatpush1.bf16.msra.mxu0 %v3900
      %4185 = vmatprep.subr.bf16.mxu0 %v3903
      %4186 = vmatpush1.bf16.msra.mxu0 %v3902
      %4187 = vmatprep.subr.bf16.mxu0 %v3905
      %4188 = vmatpush1.bf16.msra.mxu0 %v3904
      %4189 = vmatprep.subr.bf16.mxu0 %v3907
      %4190 = vmatpush1.bf16.msra.mxu0 %v3906
      %4191 = vmatprep.subr.bf16.mxu0 %v3909
      %4192 = vmatpush1.bf16.msra.mxu0 %v3908
      %4193 = vmatprep.mubr.bf16.mxu0 %v3269
      %4194 = vmatmul.mubr.bf16.gmra.mrb[0].mxu0 %v3268
      %v4195 = vpop.f32.mrb[0].mxu0
      %v4196 = vadd.f32 %v4155, %v4195
      %v4197 = vpop.f32.mrb[0].mxu0
      %v4198 = vadd.f32 %v4157, %v4197
      %v4199 = vpop.f32.mrb[0].mxu0
      %v4200 = vpop.f32.mrb[0].mxu0
      %4201 = vdwg.mxu0
      %v4202 = vmul.f32 %v4196, 0.1
      %v4203 = vmul.f32 %v4198, 0.1
      %v4204 = vmax.f32 %v4196, %v4202
      %v4205 = vmax.f32 %v4198, %v4203
      %4206 = vrot.lane.b32.xlu0 %v4204, 17
      %v4207 = vpop.permute.xlu0 %4206
      %4208 = vrot.lane.b32.xlu0 %v4205, 17
      %v4209 = vpop.permute.xlu0 %4208
      %vm4210 = vcmp.lt.s32.totalorder %v716, 17
      %v4211 = vsel %vm4210, %v4207, %v4209
      %v4212 = vsel %vm4210, %v4209, %v4207
      %v4213 = vlaneseq
      %v4214 = vshrl.u32 %v4213, 7
      %v4215 = vsub.s32 0, %v4214
      %v4216 = vrot.slane %v643, %v4215
      %v4217 = vlaneseq
      %v4218 = vshrl.u32 %v4217, 7
      %v4219 = vsub.s32 0, %v4218
      %v4220 = vrot.slane %v644, %v4219
      %v4221 = vmul.f32 %v4212, %v4216
      %v4222 = vmul.f32 %v4211, %v4220
      %4223 = vrot.lane.b32.xlu0 %v4204, 16
      %v4224 = vpop.permute.xlu0 %4223
      %4225 = vrot.lane.b32.xlu0 %v4205, 16
      %v4226 = vpop.permute.xlu0 %4225
      %vm4227 = vcmp.lt.s32.totalorder %v716, 16
      %v4228 = vsel %vm4227, %v4224, %v4226
      %v4229 = vsel %vm4227, %v4226, %v4224
      %v4230 = vlaneseq
      %v4231 = vshrl.u32 %v4230, 7
      %v4232 = vsub.s32 1, %v4231
      %v4233 = vrot.slane %v643, %v4232
      %v4234 = vlaneseq
      %v4235 = vshrl.u32 %v4234, 7
      %v4236 = vsub.s32 1, %v4235
      %v4237 = vrot.slane %v644, %v4236
      %v4238 = vmul.f32 %v4229, %v4233
      %v4239 = vmul.f32 %v4228, %v4237
      %4240 = vrot.lane.b32.xlu0 %v4204, 15
      %v4241 = vpop.permute.xlu0 %4240
      %4242 = vrot.lane.b32.xlu0 %v4205, 15
      %v4243 = vpop.permute.xlu0 %4242
      %vm4244 = vcmp.lt.s32.totalorder %v716, 15
      %v4245 = vsel %vm4244, %v4241, %v4243
      %v4246 = vsel %vm4244, %v4243, %v4241
      %v4247 = vlaneseq
      %v4248 = vshrl.u32 %v4247, 7
      %v4249 = vsub.s32 2, %v4248
      %v4250 = vrot.slane %v643, %v4249
      %v4251 = vlaneseq
      %v4252 = vshrl.u32 %v4251, 7
      %v4253 = vsub.s32 2, %v4252
      %v4254 = vrot.slane %v644, %v4253
      %v4255 = vmul.f32 %v4246, %v4250
      %v4256 = vmul.f32 %v4245, %v4254
      %4257 = vrot.lane.b32.xlu0 %v4204, 1
      %v4258 = vpop.permute.xlu0 %4257
      %4259 = vrot.lane.b32.xlu0 %v4205, 1
      %v4260 = vpop.permute.xlu0 %4259
      %v4261 = vsel %vm935, %v4258, %v4260
      %v4262 = vsel %vm935, %v4260, %v4258
      %v4263 = vlaneseq
      %v4264 = vshrl.u32 %v4263, 7
      %v4265 = vsub.s32 3, %v4264
      %v4266 = vrot.slane %v643, %v4265
      %v4267 = vlaneseq
      %v4268 = vshrl.u32 %v4267, 7
      %v4269 = vsub.s32 3, %v4268
      %v4270 = vrot.slane %v644, %v4269
      %v4271 = vmul.f32 %v4262, %v4266
      %v4272 = vmul.f32 %v4261, %v4270
      %4273 = vrot.lane.b32.xlu0 %v4204, 127
      %v4274 = vpop.permute.xlu0 %4273
      %4275 = vrot.lane.b32.xlu0 %v4205, 127
      %v4276 = vpop.permute.xlu0 %4275
      %v4277 = vsel %vm1825, %v4274, %v4276
      %v4278 = vsel %vm1825, %v4276, %v4274
      %v4279 = vlaneseq
      %v4280 = vshrl.u32 %v4279, 7
      %v4281 = vsub.s32 5, %v4280
      %v4282 = vrot.slane %v643, %v4281
      %v4283 = vlaneseq
      %v4284 = vshrl.u32 %v4283, 7
      %v4285 = vsub.s32 5, %v4284
      %v4286 = vrot.slane %v644, %v4285
      %v4287 = vmul.f32 %v4277, %v4282
      %v4288 = vmul.f32 %v4278, %v4286
      %4289 = vrot.lane.b32.xlu0 %v4204, 113
      %v4290 = vpop.permute.xlu0 %4289
      %4291 = vrot.lane.b32.xlu0 %v4205, 113
      %v4292 = vpop.permute.xlu0 %4291
      %vm4293 = vcmp.lt.s32.totalorder %v716, 113
      %v4294 = vsel %vm4293, %v4290, %v4292
      %v4295 = vsel %vm4293, %v4292, %v4290
      %v4296 = vlaneseq
      %v4297 = vshrl.u32 %v4296, 7
      %v4298 = vsub.s32 6, %v4297
      %v4299 = vrot.slane %v643, %v4298
      %v4300 = vlaneseq
      %v4301 = vshrl.u32 %v4300, 7
      %v4302 = vsub.s32 6, %v4301
      %v4303 = vrot.slane %v644, %v4302
      %v4304 = vmul.f32 %v4294, %v4299
      %v4305 = vmul.f32 %v4295, %v4303
      %4306 = vrot.lane.b32.xlu0 %v4204, 112
      %v4307 = vpop.permute.xlu0 %4306
      %4308 = vrot.lane.b32.xlu0 %v4205, 112
      %v4309 = vpop.permute.xlu0 %4308
      %vm4310 = vcmp.lt.s32.totalorder %v716, 112
      %v4311 = vsel %vm4310, %v4307, %v4309
      %v4312 = vsel %vm4310, %v4309, %v4307
      %v4313 = vlaneseq
      %v4314 = vshrl.u32 %v4313, 7
      %v4315 = vsub.s32 7, %v4314
      %v4316 = vrot.slane %v643, %v4315
      %v4317 = vlaneseq
      %v4318 = vshrl.u32 %v4317, 7
      %v4319 = vsub.s32 7, %v4318
      %v4320 = vrot.slane %v644, %v4319
      %v4321 = vmul.f32 %v4311, %v4316
      %v4322 = vmul.f32 %v4312, %v4320
      %4323 = vrot.lane.b32.xlu0 %v4204, 111
      %v4324 = vpop.permute.xlu0 %4323
      %4325 = vrot.lane.b32.xlu0 %v4205, 111
      %v4326 = vpop.permute.xlu0 %4325
      %vm4327 = vcmp.lt.s32.totalorder %v716, 111
      %v4328 = vsel %vm4327, %v4324, %v4326
      %v4329 = vsel %vm4327, %v4326, %v4324
      %v4330 = vlaneseq
      %v4331 = vshrl.u32 %v4330, 7
      %v4332 = vsub.s32 0, %v4331
      %v4333 = vrot.slane %v645, %v4332
      %v4334 = vlaneseq
      %v4335 = vshrl.u32 %v4334, 7
      %v4336 = vsub.s32 0, %v4335
      %v4337 = vrot.slane %v646, %v4336
      %v4338 = vmul.f32 %v4328, %v4333
      %v4339 = vmul.f32 %v4329, %v4337
      %v4342 = vrot.slane %v4238, 4
      %v4343 = vrot.slane %v4239, 4
      %v4348 = vrot.slane %v4271, 4
      %v4349 = vrot.slane %v4272, 4
      %v4354 = vrot.slane %v4287, 4
      %v4355 = vrot.slane %v4288, 4
      %v4360 = vrot.slane %v4321, 4
      %v4361 = vrot.slane %v4322, 4
      %v4364 = vsel %vm1179, %v4221, %v4342
      %v4365 = vsel %vm1179, %v4222, %v4343
      %v4366 = vsel %vm1179, %v4255, %v4348
      %v4367 = vsel %vm1179, %v4256, %v4349
      %v4368 = vsel %vm1179, %v4204, %v4354
      %v4369 = vsel %vm1179, %v4205, %v4355
      %v4370 = vsel %vm1179, %v4304, %v4360
      %v4371 = vsel %vm1179, %v4305, %v4361
      %v4372 = vsel %vm1179, %v4338, 1.0
      %v4373 = vsel %vm1179, %v4339, 1.0
      %v4374 = vld [vmem:[%s13] sm:$0xf]
      %v4377 = vrot.slane %v4196, 4
      %v4378 = vrot.slane %v4198, 4
      %v4382 = vsel %vm2230, %v4374, 0
      %v4385 = vsel %vm1188, %v4372, 0
      %v4388 = vsel %vm1188, %v4373, 0
      %4390 = vmatprep.subr.mxu0 %v4365
      %4391 = vmatpush1.msra.mxu0 %v4364
      %4392 = vmatprep.subr.mxu0 %v4367
      %4393 = vmatpush1.msra.mxu0 %v4366
      %4394 = vmatprep.subr.mxu0 %v4369
      %4395 = vmatpush1.msra.mxu0 %v4368
      %4396 = vmatprep.subr.mxu0 %v4371
      %4397 = vmatpush1.msra.mxu0 %v4370
      %4398 = vmatprep.subr.mxu0 %v4388
      %4399 = vmatpush1.msra.mxu0 %v4385
      %4400 = vmatprep.subr.mxu0 0.0
      %4401 = vmatpush1.msra.mxu0 0.0
      %4402 = vmatprep.subr.mxu0 0.0
      %4403 = vmatpush1.msra.mxu0 0.0
      %4404 = vmatprep.subr.mxu0 0.0
      %4405 = vmatpush1.msra.mxu0 0.0
      %4406 = vmatprep.subr.mxu0 0.0
      %4407 = vmatpush1.msra.mxu0 0.0
      %4408 = vmatprep.subr.mxu0 0.0
      %4409 = vmatpush1.msra.mxu0 0.0
      %4410 = vmatprep.subr.mxu0 0.0
      %4411 = vmatpush1.msra.mxu0 0.0
      %4412 = vmatprep.subr.mxu0 0.0
      %4413 = vmatpush1.msra.mxu0 0.0
      %4414 = vmatprep.subr.mxu0 0.0
      %4415 = vmatpush1.msra.mxu0 0.0
      %4416 = vmatprep.subr.mxu0 0.0
      %4417 = vmatpush1.msra.mxu0 0.0
      %4418 = vmatprep.subr.mxu0 0.0
      %4419 = vmatpush1.msra.mxu0 0.0
      %4420 = vmatprep.subr.mxu0 0.0
      %4421 = vmatpush1.msra.mxu0 0.0
      %4422 = vmatprep.subr.mxu0 0.0
      %4423 = vmatpush1.msra.mxu0 0.0
      %4424 = vmatprep.subr.mxu0 0.0
      %4425 = vmatpush1.msra.mxu0 0.0
      %4426 = vmatprep.subr.mxu0 0.0
      %4427 = vmatpush1.msra.mxu0 0.0
      %4428 = vmatprep.subr.mxu0 0.0
      %4429 = vmatpush1.msra.mxu0 0.0
      %4430 = vmatprep.subr.mxu0 0.0
      %4431 = vmatpush1.msra.mxu0 0.0
      %4432 = vmatprep.subr.mxu0 0.0
      %4433 = vmatpush1.msra.mxu0 0.0
      %4434 = vmatprep.subr.mxu0 0.0
      %4435 = vmatpush1.msra.mxu0 0.0
      %4436 = vmatprep.subr.mxu0 0.0
      %4437 = vmatpush1.msra.mxu0 0.0
      %4438 = vmatprep.subr.mxu0 0.0
      %4439 = vmatpush1.msra.mxu0 0.0
      %4440 = vmatprep.subr.mxu0 0.0
      %4441 = vmatpush1.msra.mxu0 0.0
      %4442 = vmatprep.subr.mxu0 0.0
      %4443 = vmatpush1.msra.mxu0 0.0
      %4444 = vmatprep.subr.mxu0 0.0
      %4445 = vmatpush1.msra.mxu0 0.0
      %4446 = vmatprep.subr.mxu0 0.0
      %4447 = vmatpush1.msra.mxu0 0.0
      %4448 = vmatprep.subr.mxu0 0.0
      %4449 = vmatpush1.msra.mxu0 0.0
      %4450 = vmatprep.subr.mxu0 0.0
      %4451 = vmatpush1.msra.mxu0 0.0
      %4452 = vmatprep.subr.mxu0 0.0
      %4453 = vmatpush1.msra.mxu0 0.0
      %4454 = vmatprep.mubr.f32.mxu0 0.0
      %4455 = vmatmul.mubr.f32.gmra.mrb[0].mxu0 %v4382
      %v4456 = vpop.f32.mrb[0].mxu0
      %v4457 = vadd.f32 %v4377, %v4456
      %v4458 = vpop.f32.mrb[0].mxu0
      %v4459 = vadd.f32 %v4378, %v4458
      %4460 = vdwg.mxu0
      %v4461 = vmul.f32 %v4457, 0.1
      %v4462 = vmul.f32 %v4459, 0.1
      %v4463 = vmax.f32 %v4457, %v4461
      %v4464 = vmax.f32 %v4459, %v4462
      %4465 = vrot.lane.b32.xlu0 %v4463, 17
      %v4466 = vpop.permute.xlu0 %4465
      %4467 = vrot.lane.b32.xlu0 %v4464, 17
      %v4468 = vpop.permute.xlu0 %4467
      %v4469 = vsel %vm4210, %v4466, %v4468
      %v4470 = vsel %vm4210, %v4468, %v4466
      %v4471 = vmul.f32 %v4470, %v4216
      %v4472 = vmul.f32 %v4469, %v4220
      %4473 = vrot.lane.b32.xlu0 %v4463, 16
      %v4474 = vpop.permute.xlu0 %4473
      %4475 = vrot.lane.b32.xlu0 %v4464, 16
      %v4476 = vpop.permute.xlu0 %4475
      %v4477 = vsel %vm4227, %v4474, %v4476
      %v4478 = vsel %vm4227, %v4476, %v4474
      %v4479 = vmul.f32 %v4478, %v4233
      %v4480 = vmul.f32 %v4477, %v4237
      %4481 = vrot.lane.b32.xlu0 %v4463, 15
      %v4482 = vpop.permute.xlu0 %4481
      %4483 = vrot.lane.b32.xlu0 %v4464, 15
      %v4484 = vpop.permute.xlu0 %4483
      %v4485 = vsel %vm4244, %v4482, %v4484
      %v4486 = vsel %vm4244, %v4484, %v4482
      %v4487 = vmul.f32 %v4486, %v4250
      %v4488 = vmul.f32 %v4485, %v4254
      %4489 = vrot.lane.b32.xlu0 %v4463, 1
      %v4490 = vpop.permute.xlu0 %4489
      %4491 = vrot.lane.b32.xlu0 %v4464, 1
      %v4492 = vpop.permute.xlu0 %4491
      %v4493 = vsel %vm935, %v4490, %v4492
      %v4494 = vsel %vm935, %v4492, %v4490
      %v4495 = vmul.f32 %v4494, %v4266
      %v4496 = vmul.f32 %v4493, %v4270
      %4497 = vrot.lane.b32.xlu0 %v4463, 127
      %v4498 = vpop.permute.xlu0 %4497
      %4499 = vrot.lane.b32.xlu0 %v4464, 127
      %v4500 = vpop.permute.xlu0 %4499
      %v4501 = vsel %vm1825, %v4498, %v4500
      %v4502 = vsel %vm1825, %v4500, %v4498
      %v4503 = vmul.f32 %v4501, %v4282
      %v4504 = vmul.f32 %v4502, %v4286
      %4505 = vrot.lane.b32.xlu0 %v4463, 113
      %v4506 = vpop.permute.xlu0 %4505
      %4507 = vrot.lane.b32.xlu0 %v4464, 113
      %v4508 = vpop.permute.xlu0 %4507
      %v4509 = vsel %vm4293, %v4506, %v4508
      %v4510 = vsel %vm4293, %v4508, %v4506
      %v4511 = vmul.f32 %v4509, %v4299
      %v4512 = vmul.f32 %v4510, %v4303
      %4513 = vrot.lane.b32.xlu0 %v4463, 112
      %v4514 = vpop.permute.xlu0 %4513
      %4515 = vrot.lane.b32.xlu0 %v4464, 112
      %v4516 = vpop.permute.xlu0 %4515
      %v4517 = vsel %vm4310, %v4514, %v4516
      %v4518 = vsel %vm4310, %v4516, %v4514
      %v4519 = vmul.f32 %v4517, %v4316
      %v4520 = vmul.f32 %v4518, %v4320
      %4521 = vrot.lane.b32.xlu0 %v4463, 111
      %v4522 = vpop.permute.xlu0 %4521
      %4523 = vrot.lane.b32.xlu0 %v4464, 111
      %v4524 = vpop.permute.xlu0 %4523
      %v4525 = vsel %vm4327, %v4522, %v4524
      %v4526 = vsel %vm4327, %v4524, %v4522
      %v4527 = vmul.f32 %v4525, %v4333
      %v4528 = vmul.f32 %v4526, %v4337
      %v4531 = vrot.slane %v4479, 4
      %v4532 = vrot.slane %v4480, 4
      %v4537 = vrot.slane %v4495, 4
      %v4538 = vrot.slane %v4496, 4
      %v4543 = vrot.slane %v4503, 4
      %v4544 = vrot.slane %v4504, 4
      %v4549 = vrot.slane %v4519, 4
      %v4550 = vrot.slane %v4520, 4
      %v4553 = vsel %vm1179, %v4471, %v4531
      %v4554 = vsel %vm1179, %v4472, %v4532
      %v4555 = vsel %vm1179, %v4487, %v4537
      %v4556 = vsel %vm1179, %v4488, %v4538
      %v4557 = vsel %vm1179, %v4463, %v4543
      %v4558 = vsel %vm1179, %v4464, %v4544
      %v4559 = vsel %vm1179, %v4511, %v4549
      %v4560 = vsel %vm1179, %v4512, %v4550
      %v4561 = vsel %vm1179, %v4527, 1.0
      %v4562 = vsel %vm1179, %v4528, 1.0
      %v4563 = vld [vmem:[%s14] sm:$0xff]
      %v4565 = vsel %vm2230, %v4563, 0
      %v4568 = vsel %vm1188, %v4561, 0
      %v4571 = vsel %vm1188, %v4562, 0
      %4573 = vmatprep.subr.mxu0 %v4554
      %4574 = vmatpush1.msra.mxu0 %v4553
      %4575 = vmatprep.subr.mxu0 %v4556
      %4576 = vmatpush1.msra.mxu0 %v4555
      %4577 = vmatprep.subr.mxu0 %v4558
      %4578 = vmatpush1.msra.mxu0 %v4557
      %4579 = vmatprep.subr.mxu0 %v4560
      %4580 = vmatpush1.msra.mxu0 %v4559
      %4581 = vmatprep.subr.mxu0 %v4571
      %4582 = vmatpush1.msra.mxu0 %v4568
      %4583 = vmatprep.subr.mxu0 0.0
      %4584 = vmatpush1.msra.mxu0 0.0
      %4585 = vmatprep.subr.mxu0 0.0
      %4586 = vmatpush1.msra.mxu0 0.0
      %4587 = vmatprep.subr.mxu0 0.0
      %4588 = vmatpush1.msra.mxu0 0.0
      %4589 = vmatprep.subr.mxu0 0.0
      %4590 = vmatpush1.msra.mxu0 0.0
      %4591 = vmatprep.subr.mxu0 0.0
      %4592 = vmatpush1.msra.mxu0 0.0
      %4593 = vmatprep.subr.mxu0 0.0
      %4594 = vmatpush1.msra.mxu0 0.0
      %4595 = vmatprep.subr.mxu0 0.0
      %4596 = vmatpush1.msra.mxu0 0.0
      %4597 = vmatprep.subr.mxu0 0.0
      %4598 = vmatpush1.msra.mxu0 0.0
      %4599 = vmatprep.subr.mxu0 0.0
      %4600 = vmatpush1.msra.mxu0 0.0
      %4601 = vmatprep.subr.mxu0 0.0
      %4602 = vmatpush1.msra.mxu0 0.0
      %4603 = vmatprep.subr.mxu0 0.0
      %4604 = vmatpush1.msra.mxu0 0.0
      %4605 = vmatprep.subr.mxu0 0.0
      %4606 = vmatpush1.msra.mxu0 0.0
      %4607 = vmatprep.subr.mxu0 0.0
      %4608 = vmatpush1.msra.mxu0 0.0
      %4609 = vmatprep.subr.mxu0 0.0
      %4610 = vmatpush1.msra.mxu0 0.0
      %4611 = vmatprep.subr.mxu0 0.0
      %4612 = vmatpush1.msra.mxu0 0.0
      %4613 = vmatprep.subr.mxu0 0.0
      %4614 = vmatpush1.msra.mxu0 0.0
      %4615 = vmatprep.subr.mxu0 0.0
      %4616 = vmatpush1.msra.mxu0 0.0
      %4617 = vmatprep.subr.mxu0 0.0
      %4618 = vmatpush1.msra.mxu0 0.0
      %4619 = vmatprep.subr.mxu0 0.0
      %4620 = vmatpush1.msra.mxu0 0.0
      %4621 = vmatprep.subr.mxu0 0.0
      %4622 = vmatpush1.msra.mxu0 0.0
      %4623 = vmatprep.subr.mxu0 0.0
      %4624 = vmatpush1.msra.mxu0 0.0
      %4625 = vmatprep.subr.mxu0 0.0
      %4626 = vmatpush1.msra.mxu0 0.0
      %4627 = vmatprep.subr.mxu0 0.0
      %4628 = vmatpush1.msra.mxu0 0.0
      %4629 = vmatprep.subr.mxu0 0.0
      %4630 = vmatpush1.msra.mxu0 0.0
      %4631 = vmatprep.subr.mxu0 0.0
      %4632 = vmatpush1.msra.mxu0 0.0
      %4633 = vmatprep.subr.mxu0 0.0
      %4634 = vmatpush1.msra.mxu0 0.0
      %4635 = vmatprep.subr.mxu0 0.0
      %4636 = vmatpush1.msra.mxu0 0.0
      %4637 = vmatprep.mubr.f32.mxu0 0.0
      %4638 = vmatmul.mubr.f32.gmra.mrb[0].mxu0 %v4565
      %v4639 = vpop.f32.mrb[0].mxu0
      %v4640 = vadd.f32 0.0, %v4639
      %v4641 = vpop.f32.mrb[0].mxu0
      %v4642 = vadd.f32 0.0, %v4641
      %4643 = vdwg.mxu0
      %v4644 = vpack.c.bf16 %v4640, %v4640
      %v4645 = vpack.c.bf16 %v4642, %v4642
      %v4646 = vld [vmem:[%s8] sm:$0xf]
      %v4647 = vld [vmem:[%s8 + $0x4] sm:$0xf]
      %v4648 = vld [vmem:[%s8 + $0x8] sm:$0xf]
      %v4649 = vld [vmem:[%s8 + $0xc] sm:$0xf]
      %v4650 = vld [vmem:[%s8 + $0x10] sm:$0xf]
      %v4651 = vld [vmem:[%s8 + $0x14] sm:$0xf]
      %v4652 = vld [vmem:[%s8 + $0x18] sm:$0xf]
      %v4653 = vld [vmem:[%s8 + $0x1c] sm:$0xf]
      %v4654 = vld [vmem:[%s8 + $0x20] sm:$0xf]
      %v4655 = vld [vmem:[%s8 + $0x24] sm:$0xf]
      %v4656 = vld [vmem:[%s8 + $0x28] sm:$0xf]
      %v4657 = vld [vmem:[%s8 + $0x2c] sm:$0xf]
      %v4658 = vld [vmem:[%s8 + $0x30] sm:$0xf]
      %v4659 = vld [vmem:[%s8 + $0x34] sm:$0xf]
      %v4660 = vld [vmem:[%s8 + $0x38] sm:$0xf]
      %v4661 = vld [vmem:[%s8 + $0x3c] sm:$0xf]
      %v4662 = vld [vmem:[%s8 + $0x40] sm:$0xf]
      %v4663 = vld [vmem:[%s8 + $0x44] sm:$0xf]
      %v4664 = vld [vmem:[%s8 + $0x48] sm:$0xf]
      %v4665 = vld [vmem:[%s8 + $0x4c] sm:$0xf]
      %v4666 = vld [vmem:[%s8 + $0x50] sm:$0xf]
      %v4667 = vld [vmem:[%s8 + $0x54] sm:$0xf]
      %v4668 = vld [vmem:[%s8 + $0x58] sm:$0xf]
      %v4669 = vld [vmem:[%s8 + $0x5c] sm:$0xf]
      %v4670 = vld [vmem:[%s8 + $0x60] sm:$0xf]
      %v4671 = vld [vmem:[%s8 + $0x64] sm:$0xf]
      %v4672 = vld [vmem:[%s8 + $0x68] sm:$0xf]
      %v4673 = vld [vmem:[%s8 + $0x6c] sm:$0xf]
      %v4674 = vld [vmem:[%s8 + $0x70] sm:$0xf]
      %v4675 = vld [vmem:[%s8 + $0x74] sm:$0xf]
      %v4676 = vld [vmem:[%s8 + $0x78] sm:$0xf]
      %v4677 = vld [vmem:[%s8 + $0x7c] sm:$0xf]
      %v4710 = vunpack.c.l.b16 %v4646
      %v4711 = vunpack.c.l.b16 %v4647
      %v4712 = vunpack.c.l.b16 %v4648
      %v4713 = vunpack.c.l.b16 %v4649
      %v4714 = vunpack.c.l.b16 %v4650
      %v4715 = vunpack.c.l.b16 %v4651
      %v4716 = vunpack.c.l.b16 %v4652
      %v4717 = vunpack.c.l.b16 %v4653
      %v4718 = vunpack.c.l.b16 %v4654
      %v4719 = vunpack.c.l.b16 %v4655
      %v4720 = vunpack.c.l.b16 %v4656
      %v4721 = vunpack.c.l.b16 %v4657
      %v4722 = vunpack.c.l.b16 %v4658
      %v4723 = vunpack.c.l.b16 %v4659
      %v4724 = vunpack.c.l.b16 %v4660
      %v4725 = vunpack.c.l.b16 %v4661
      %v4726 = vunpack.c.l.b16 %v4662
      %v4727 = vunpack.c.l.b16 %v4663
      %v4728 = vunpack.c.l.b16 %v4664
      %v4729 = vunpack.c.l.b16 %v4665
      %v4730 = vunpack.c.l.b16 %v4666
      %v4731 = vunpack.c.l.b16 %v4667
      %v4732 = vunpack.c.l.b16 %v4668
      %v4733 = vunpack.c.l.b16 %v4669
      %v4734 = vunpack.c.l.b16 %v4670
      %v4735 = vunpack.c.l.b16 %v4671
      %v4736 = vunpack.c.l.b16 %v4672
      %v4737 = vunpack.c.l.b16 %v4673
      %v4738 = vunpack.c.l.b16 %v4674
      %v4739 = vunpack.c.l.b16 %v4675
      %v4740 = vunpack.c.l.b16 %v4676
      %v4741 = vunpack.c.l.b16 %v4677
      %v4742 = vpack.c.b16 %v4711, %v4710
      %v4743 = vpack.c.b16 %v4713, %v4712
      %v4744 = vpack.c.b16 %v4715, %v4714
      %v4745 = vpack.c.b16 %v4717, %v4716
      %v4746 = vpack.c.b16 %v4719, %v4718
      %v4747 = vpack.c.b16 %v4721, %v4720
      %v4748 = vpack.c.b16 %v4723, %v4722
      %v4749 = vpack.c.b16 %v4725, %v4724
      %v4750 = vpack.c.b16 %v4727, %v4726
      %v4751 = vpack.c.b16 %v4729, %v4728
      %v4752 = vpack.c.b16 %v4731, %v4730
      %v4753 = vpack.c.b16 %v4733, %v4732
      %v4754 = vpack.c.b16 %v4735, %v4734
      %v4755 = vpack.c.b16 %v4737, %v4736
      %v4756 = vpack.c.b16 %v4739, %v4738
      %v4757 = vpack.c.b16 %v4741, %v4740
      %4774 = vmatprep.subr.bf16.mxu0 0
      %4775 = vmatpush1.bf16.msra.mxu0 %v4742
      %4776 = vmatprep.subr.bf16.mxu0 0
      %4777 = vmatpush1.bf16.msra.mxu0 %v4743
      %4778 = vmatprep.subr.bf16.mxu0 0
      %4779 = vmatpush1.bf16.msra.mxu0 %v4744
      %4780 = vmatprep.subr.bf16.mxu0 0
      %4781 = vmatpush1.bf16.msra.mxu0 %v4745
      %4782 = vmatprep.subr.bf16.mxu0 0
      %4783 = vmatpush1.bf16.msra.mxu0 %v4746
      %4784 = vmatprep.subr.bf16.mxu0 0
      %4785 = vmatpush1.bf16.msra.mxu0 %v4747
      %4786 = vmatprep.subr.bf16.mxu0 0
      %4787 = vmatpush1.bf16.msra.mxu0 %v4748
      %4788 = vmatprep.subr.bf16.mxu0 0
      %4789 = vmatpush1.bf16.msra.mxu0 %v4749
      %4790 = vmatprep.subr.bf16.mxu0 0
      %4791 = vmatpush1.bf16.msra.mxu0 %v4750
      %4792 = vmatprep.subr.bf16.mxu0 0
      %4793 = vmatpush1.bf16.msra.mxu0 %v4751
      %4794 = vmatprep.subr.bf16.mxu0 0
      %4795 = vmatpush1.bf16.msra.mxu0 %v4752
      %4796 = vmatprep.subr.bf16.mxu0 0
      %4797 = vmatpush1.bf16.msra.mxu0 %v4753
      %4798 = vmatprep.subr.bf16.mxu0 0
      %4799 = vmatpush1.bf16.msra.mxu0 %v4754
      %4800 = vmatprep.subr.bf16.mxu0 0
      %4801 = vmatpush1.bf16.msra.mxu0 %v4755
      %4802 = vmatprep.subr.bf16.mxu0 0
      %4803 = vmatpush1.bf16.msra.mxu0 %v4756
      %4804 = vmatprep.subr.bf16.mxu0 0
      %4805 = vmatpush1.bf16.msra.mxu0 %v4757
      %4806 = vmatprep.mubr.bf16.mxu0 %v4645
      %4807 = vmatmul.mubr.bf16.gmra.mrb[0].mxu0 %v4644
      %v4808 = vpop.f32.mrb[0].mxu0
      %v4809 = vadd.f32 0.0, %v4808
      %v4810 = vpop.f32.mrb[0].mxu0
      %v4811 = vpop.f32.mrb[0].mxu0
      %v4812 = vpop.f32.mrb[0].mxu0
      %4813 = vdwg.mxu0
      %v4814 = vmul.f32 %v4809, 0.1
      %v4815 = vmax.f32 %v4809, %v4814
      %4817 = vrot.lane.b32.xlu0 %v4815, 73
      %v4818 = vpop.permute.xlu0 %4817
      %4820 = vrot.lane.b32.xlu0 %v4815, 9
      %v4821 = vpop.permute.xlu0 %4820
      %vm4823 = vcmask 72704
      %v4824 = vsel %vm4823, %v4818, %v4821
      %v4825 = vlaneseq
      %v4826 = vshrl.u32 %v4825, 7
      %v4827 = vsub.s32 0, %v4826
      %v4828 = vrot.slane %v647, %v4827
      %v4829 = vmul.f32 %v4824, %v4828
      %4830 = vrot.lane.b32.xlu0 %v4815, 72
      %v4831 = vpop.permute.xlu0 %4830
      %4833 = vrot.lane.b32.xlu0 %v4815, 8
      %v4834 = vpop.permute.xlu0 %4833
      %vm4836 = vcmask 64512
      %v4837 = vsel %vm4836, %v4831, %v4834
      %v4838 = vlaneseq
      %v4839 = vshrl.u32 %v4838, 7
      %v4840 = vsub.s32 1, %v4839
      %v4841 = vrot.slane %v647, %v4840
      %v4842 = vmul.f32 %v4837, %v4841
      %4843 = vrot.lane.b32.xlu0 %v4815, 71
      %v4844 = vpop.permute.xlu0 %4843
      %4846 = vrot.lane.b32.xlu0 %v4815, 7
      %v4847 = vpop.permute.xlu0 %4846
      %vm4849 = vcmask 56320
      %v4850 = vsel %vm4849, %v4844, %v4847
      %v4851 = vlaneseq
      %v4852 = vshrl.u32 %v4851, 7
      %v4853 = vsub.s32 2, %v4852
      %v4854 = vrot.slane %v647, %v4853
      %v4855 = vmul.f32 %v4850, %v4854
      %4856 = vrot.lane.b32.xlu0 %v4815, 65
      %v4857 = vpop.permute.xlu0 %4856
      %4859 = vrot.lane.b32.xlu0 %v4815, 1
      %v4860 = vpop.permute.xlu0 %4859
      %vm4862 = vcmask 7168
      %v4863 = vsel %vm4862, %v4857, %v4860
      %v4864 = vlaneseq
      %v4865 = vshrl.u32 %v4864, 7
      %v4866 = vsub.s32 3, %v4865
      %v4867 = vrot.slane %v647, %v4866
      %v4868 = vmul.f32 %v4863, %v4867
      %4869 = vrot.lane.b32.xlu0 %v4815, 127
      %v4870 = vpop.permute.xlu0 %4869
      %4872 = vrot.lane.b32.xlu0 %v4815, 63
      %v4873 = vpop.permute.xlu0 %4872
      %vm4875 = vcmask 515072
      %v4876 = vsel %vm4875, %v4870, %v4873
      %v4877 = vlaneseq
      %v4878 = vshrl.u32 %v4877, 7
      %v4879 = vsub.s32 5, %v4878
      %v4880 = vrot.slane %v647, %v4879
      %v4881 = vmul.f32 %v4876, %v4880
      %4882 = vrot.lane.b32.xlu0 %v4815, 121
      %v4883 = vpop.permute.xlu0 %4882
      %4885 = vrot.lane.b32.xlu0 %v4815, 57
      %v4886 = vpop.permute.xlu0 %4885
      %vm4888 = vcmask 465920
      %v4889 = vsel %vm4888, %v4883, %v4886
      %v4890 = vlaneseq
      %v4891 = vshrl.u32 %v4890, 7
      %v4892 = vsub.s32 6, %v4891
      %v4893 = vrot.slane %v647, %v4892
      %v4894 = vmul.f32 %v4889, %v4893
      %4895 = vrot.lane.b32.xlu0 %v4815, 120
      %v4896 = vpop.permute.xlu0 %4895
      %4898 = vrot.lane.b32.xlu0 %v4815, 56
      %v4899 = vpop.permute.xlu0 %4898
      %vm4901 = vcmask 457728
      %v4902 = vsel %vm4901, %v4896, %v4899
      %v4903 = vlaneseq
      %v4904 = vshrl.u32 %v4903, 7
      %v4905 = vsub.s32 7, %v4904
      %v4906 = vrot.slane %v647, %v4905
      %v4907 = vmul.f32 %v4902, %v4906
      %4908 = vrot.lane.b32.xlu0 %v4815, 119
      %v4909 = vpop.permute.xlu0 %4908
      %4911 = vrot.lane.b32.xlu0 %v4815, 55
      %v4912 = vpop.permute.xlu0 %4911
      %vm4914 = vcmask 449536
      %v4915 = vsel %vm4914, %v4909, %v4912
      %v4916 = vlaneseq
      %v4917 = vshrl.u32 %v4916, 7
      %v4918 = vsub.s32 0, %v4917
      %v4919 = vrot.slane %v648, %v4918
      %v4920 = vmul.f32 %v4915, %v4919
      %v4922 = vrot.slane %v4842, 4
      %v4925 = vrot.slane %v4868, 4
      %v4928 = vrot.slane %v4881, 4
      %v4931 = vrot.slane %v4907, 4
      %v4933 = vsel %vm1179, %v4829, %v4922
      %v4934 = vsel %vm1179, %v4855, %v4925
      %v4935 = vsel %vm1179, %v4815, %v4928
      %v4936 = vsel %vm1179, %v4894, %v4931
      %v4937 = vsel %vm1179, %v4920, 1.0
      %v4938 = vld [vmem:[%s15] sm:$0xf]
      %v4940 = vrot.slane %v4809, 4
      %v4943 = vsel %vm2230, %v4938, 0
      %v4946 = vsel %vm1188, %v4937, 0
      %4948 = vmatprep.subr.mxu0 0.0
      %4949 = vmatpush1.msra.mxu0 %v4933
      %4950 = vmatprep.subr.mxu0 0.0
      %4951 = vmatpush1.msra.mxu0 %v4934
      %4952 = vmatprep.subr.mxu0 0.0
      %4953 = vmatpush1.msra.mxu0 %v4935
      %4954 = vmatprep.subr.mxu0 0.0
      %4955 = vmatpush1.msra.mxu0 %v4936
      %4956 = vmatprep.subr.mxu0 0.0
      %4957 = vmatpush1.msra.mxu0 %v4946
      %4958 = vmatprep.subr.mxu0 0.0
      %4959 = vmatpush1.msra.mxu0 0.0
      %4960 = vmatprep.subr.mxu0 0.0
      %4961 = vmatpush1.msra.mxu0 0.0
      %4962 = vmatprep.subr.mxu0 0.0
      %4963 = vmatpush1.msra.mxu0 0.0
      %4964 = vmatprep.subr.mxu0 0.0
      %4965 = vmatpush1.msra.mxu0 0.0
      %4966 = vmatprep.subr.mxu0 0.0
      %4967 = vmatpush1.msra.mxu0 0.0
      %4968 = vmatprep.subr.mxu0 0.0
      %4969 = vmatpush1.msra.mxu0 0.0
      %4970 = vmatprep.subr.mxu0 0.0
      %4971 = vmatpush1.msra.mxu0 0.0
      %4972 = vmatprep.subr.mxu0 0.0
      %4973 = vmatpush1.msra.mxu0 0.0
      %4974 = vmatprep.subr.mxu0 0.0
      %4975 = vmatpush1.msra.mxu0 0.0
      %4976 = vmatprep.subr.mxu0 0.0
      %4977 = vmatpush1.msra.mxu0 0.0
      %4978 = vmatprep.subr.mxu0 0.0
      %4979 = vmatpush1.msra.mxu0 0.0
      %4980 = vmatprep.subr.mxu0 0.0
      %4981 = vmatpush1.msra.mxu0 0.0
      %4982 = vmatprep.subr.mxu0 0.0
      %4983 = vmatpush1.msra.mxu0 0.0
      %4984 = vmatprep.subr.mxu0 0.0
      %4985 = vmatpush1.msra.mxu0 0.0
      %4986 = vmatprep.subr.mxu0 0.0
      %4987 = vmatpush1.msra.mxu0 0.0
      %4988 = vmatprep.subr.mxu0 0.0
      %4989 = vmatpush1.msra.mxu0 0.0
      %4990 = vmatprep.subr.mxu0 0.0
      %4991 = vmatpush1.msra.mxu0 0.0
      %4992 = vmatprep.subr.mxu0 0.0
      %4993 = vmatpush1.msra.mxu0 0.0
      %4994 = vmatprep.subr.mxu0 0.0
      %4995 = vmatpush1.msra.mxu0 0.0
      %4996 = vmatprep.subr.mxu0 0.0
      %4997 = vmatpush1.msra.mxu0 0.0
      %4998 = vmatprep.subr.mxu0 0.0
      %4999 = vmatpush1.msra.mxu0 0.0
      %5000 = vmatprep.subr.mxu0 0.0
      %5001 = vmatpush1.msra.mxu0 0.0
      %5002 = vmatprep.subr.mxu0 0.0
      %5003 = vmatpush1.msra.mxu0 0.0
      %5004 = vmatprep.subr.mxu0 0.0
      %5005 = vmatpush1.msra.mxu0 0.0
      %5006 = vmatprep.subr.mxu0 0.0
      %5007 = vmatpush1.msra.mxu0 0.0
      %5008 = vmatprep.subr.mxu0 0.0
      %5009 = vmatpush1.msra.mxu0 0.0
      %5010 = vmatprep.subr.mxu0 0.0
      %5011 = vmatpush1.msra.mxu0 0.0
      %5012 = vmatprep.mubr.f32.mxu0 0.0
      %5013 = vmatmul.mubr.f32.gmra.mrb[0].mxu0 %v4943
      %v5014 = vpop.f32.mrb[0].mxu0
      %v5015 = vadd.f32 %v4940, %v5014
      %v5016 = vpop.f32.mrb[0].mxu0
      %5017 = vdwg.mxu0
      %v5018 = vmul.f32 %v5015, 0.1
      %v5019 = vmax.f32 %v5015, %v5018
      %5021 = vrot.lane.b32.xlu0 %v5019, 73
      %v5022 = vpop.permute.xlu0 %5021
      %5024 = vrot.lane.b32.xlu0 %v5019, 9
      %v5025 = vpop.permute.xlu0 %5024
      %v5027 = vsel %vm4823, %v5022, %v5025
      %v5028 = vmul.f32 %v5027, %v4828
      %5029 = vrot.lane.b32.xlu0 %v5019, 72
      %v5030 = vpop.permute.xlu0 %5029
      %5032 = vrot.lane.b32.xlu0 %v5019, 8
      %v5033 = vpop.permute.xlu0 %5032
      %v5035 = vsel %vm4836, %v5030, %v5033
      %v5036 = vmul.f32 %v5035, %v4841
      %5037 = vrot.lane.b32.xlu0 %v5019, 71
      %v5038 = vpop.permute.xlu0 %5037
      %5040 = vrot.lane.b32.xlu0 %v5019, 7
      %v5041 = vpop.permute.xlu0 %5040
      %v5043 = vsel %vm4849, %v5038, %v5041
      %v5044 = vmul.f32 %v5043, %v4854
      %5045 = vrot.lane.b32.xlu0 %v5019, 65
      %v5046 = vpop.permute.xlu0 %5045
      %5048 = vrot.lane.b32.xlu0 %v5019, 1
      %v5049 = vpop.permute.xlu0 %5048
      %v5051 = vsel %vm4862, %v5046, %v5049
      %v5052 = vmul.f32 %v5051, %v4867
      %5053 = vrot.lane.b32.xlu0 %v5019, 127
      %v5054 = vpop.permute.xlu0 %5053
      %5056 = vrot.lane.b32.xlu0 %v5019, 63
      %v5057 = vpop.permute.xlu0 %5056
      %v5059 = vsel %vm4875, %v5054, %v5057
      %v5060 = vmul.f32 %v5059, %v4880
      %5061 = vrot.lane.b32.xlu0 %v5019, 121
      %v5062 = vpop.permute.xlu0 %5061
      %5064 = vrot.lane.b32.xlu0 %v5019, 57
      %v5065 = vpop.permute.xlu0 %5064
      %v5067 = vsel %vm4888, %v5062, %v5065
      %v5068 = vmul.f32 %v5067, %v4893
      %5069 = vrot.lane.b32.xlu0 %v5019, 120
      %v5070 = vpop.permute.xlu0 %5069
      %5072 = vrot.lane.b32.xlu0 %v5019, 56
      %v5073 = vpop.permute.xlu0 %5072
      %v5075 = vsel %vm4901, %v5070, %v5073
      %v5076 = vmul.f32 %v5075, %v4906
      %5077 = vrot.lane.b32.xlu0 %v5019, 119
      %v5078 = vpop.permute.xlu0 %5077
      %5080 = vrot.lane.b32.xlu0 %v5019, 55
      %v5081 = vpop.permute.xlu0 %5080
      %v5083 = vsel %vm4914, %v5078, %v5081
      %v5084 = vmul.f32 %v5083, %v4919
      %v5086 = vrot.slane %v5036, 4
      %v5089 = vrot.slane %v5052, 4
      %v5092 = vrot.slane %v5060, 4
      %v5095 = vrot.slane %v5076, 4
      %v5097 = vsel %vm1179, %v5028, %v5086
      %v5098 = vsel %vm1179, %v5044, %v5089
      %v5099 = vsel %vm1179, %v5019, %v5092
      %v5100 = vsel %vm1179, %v5068, %v5095
      %v5101 = vsel %vm1179, %v5084, 1.0
      %v5102 = vld [vmem:[%s16] sm:$0xff]
      %v5103 = vld [vmem:[%s16 + $0x8] sm:$0xff]
      %v5105 = vsel %vm2230, %v5102, 0
      %v5108 = vsel %vm2230, %v5103, 0
      %v5111 = vsel %vm1188, %v5101, 0
      %5113 = vmatprep.subr.mxu0 0.0
      %5114 = vmatpush1.msra.mxu0 %v5097
      %5115 = vmatprep.subr.mxu0 0.0
      %5116 = vmatpush1.msra.mxu0 %v5098
      %5117 = vmatprep.subr.mxu0 0.0
      %5118 = vmatpush1.msra.mxu0 %v5099
      %5119 = vmatprep.subr.mxu0 0.0
      %5120 = vmatpush1.msra.mxu0 %v5100
      %5121 = vmatprep.subr.mxu0 0.0
      %5122 = vmatpush1.msra.mxu0 %v5111
      %5123 = vmatprep.subr.mxu0 0.0
      %5124 = vmatpush1.msra.mxu0 0.0
      %5125 = vmatprep.subr.mxu0 0.0
      %5126 = vmatpush1.msra.mxu0 0.0
      %5127 = vmatprep.subr.mxu0 0.0
      %5128 = vmatpush1.msra.mxu0 0.0
      %5129 = vmatprep.subr.mxu0 0.0
      %5130 = vmatpush1.msra.mxu0 0.0
      %5131 = vmatprep.subr.mxu0 0.0
      %5132 = vmatpush1.msra.mxu0 0.0
      %5133 = vmatprep.subr.mxu0 0.0
      %5134 = vmatpush1.msra.mxu0 0.0
      %5135 = vmatprep.subr.mxu0 0.0
      %5136 = vmatpush1.msra.mxu0 0.0
      %5137 = vmatprep.subr.mxu0 0.0
      %5138 = vmatpush1.msra.mxu0 0.0
      %5139 = vmatprep.subr.mxu0 0.0
      %5140 = vmatpush1.msra.mxu0 0.0
      %5141 = vmatprep.subr.mxu0 0.0
      %5142 = vmatpush1.msra.mxu0 0.0
      %5143 = vmatprep.subr.mxu0 0.0
      %5144 = vmatpush1.msra.mxu0 0.0
      %5145 = vmatprep.subr.mxu0 0.0
      %5146 = vmatpush1.msra.mxu0 0.0
      %5147 = vmatprep.subr.mxu0 0.0
      %5148 = vmatpush1.msra.mxu0 0.0
      %5149 = vmatprep.subr.mxu0 0.0
      %5150 = vmatpush1.msra.mxu0 0.0
      %5151 = vmatprep.subr.mxu0 0.0
      %5152 = vmatpush1.msra.mxu0 0.0
      %5153 = vmatprep.subr.mxu0 0.0
      %5154 = vmatpush1.msra.mxu0 0.0
      %5155 = vmatprep.subr.mxu0 0.0
      %5156 = vmatpush1.msra.mxu0 0.0
      %5157 = vmatprep.subr.mxu0 0.0
      %5158 = vmatpush1.msra.mxu0 0.0
      %5159 = vmatprep.subr.mxu0 0.0
      %5160 = vmatpush1.msra.mxu0 0.0
      %5161 = vmatprep.subr.mxu0 0.0
      %5162 = vmatpush1.msra.mxu0 0.0
      %5163 = vmatprep.subr.mxu0 0.0
      %5164 = vmatpush1.msra.mxu0 0.0
      %5165 = vmatprep.subr.mxu0 0.0
      %5166 = vmatpush1.msra.mxu0 0.0
      %5167 = vmatprep.subr.mxu0 0.0
      %5168 = vmatpush1.msra.mxu0 0.0
      %5169 = vmatprep.subr.mxu0 0.0
      %5170 = vmatpush1.msra.mxu0 0.0
      %5171 = vmatprep.subr.mxu0 0.0
      %5172 = vmatpush1.msra.mxu0 0.0
      %5173 = vmatprep.subr.mxu0 0.0
      %5174 = vmatpush1.msra.mxu0 0.0
      %5175 = vmatprep.subr.mxu0 0.0
      %5176 = vmatpush1.msra.mxu0 0.0
      %5177 = vmatprep.mubr.f32.mxu0 0.0
      %5178 = vmatmul.mubr.f32.gmra.mrb[0].mxu0 %v5105
      %v5179 = vpop.f32.mrb[0].mxu0
      %v5180 = vadd.f32 0.0, %v5179
      %v5181 = vpop.f32.mrb[0].mxu0
      %5182 = vmatprep.mubr.f32.mxu0 0.0
      %5183 = vmatmul.mubr.f32.gmra.mrb[0].mxu0 %v5108
      %v5184 = vpop.f32.mrb[0].mxu0
      %v5185 = vadd.f32 0.0, %v5184
      %v5186 = vpop.f32.mrb[0].mxu0
      %5187 = vdwg.mxu0
      %v5188 = vpack.c.bf16 %v5185, %v5180
      %v5189 = vld [vmem:[%s9] sm:$0xf]
      %v5190 = vld [vmem:[%s9 + $0x4] sm:$0xf]
      %v5191 = vld [vmem:[%s9 + $0x8] sm:$0xf]
      %v5192 = vld [vmem:[%s9 + $0xc] sm:$0xf]
      %v5193 = vld [vmem:[%s9 + $0x10] sm:$0xf]
      %v5194 = vld [vmem:[%s9 + $0x14] sm:$0xf]
      %v5195 = vld [vmem:[%s9 + $0x18] sm:$0xf]
      %v5196 = vld [vmem:[%s9 + $0x1c] sm:$0xf]
      %v5205 = vunpack.c.l.b16 %v5189
      %v5206 = vunpack.c.l.b16 %v5190
      %v5207 = vunpack.c.l.b16 %v5191
      %v5208 = vunpack.c.l.b16 %v5192
      %v5209 = vunpack.c.l.b16 %v5193
      %v5210 = vunpack.c.l.b16 %v5194
      %v5211 = vunpack.c.l.b16 %v5195
      %v5212 = vunpack.c.l.b16 %v5196
      %v5213 = vpack.c.b16 %v5206, %v5205
      %v5214 = vpack.c.b16 %v5208, %v5207
      %v5215 = vpack.c.b16 %v5210, %v5209
      %v5216 = vpack.c.b16 %v5212, %v5211
      %vm5221 = vcmask 523264
      %v5223 = vsel %vm5221, %v5188, 0
      %5225 = vmatprep.subr.bf16.mxu0 0
      %5226 = vmatpush1.bf16.msra.mxu0 %v5213
      %5227 = vmatprep.subr.bf16.mxu0 0
      %5228 = vmatpush1.bf16.msra.mxu0 %v5214
      %5229 = vmatprep.subr.bf16.mxu0 0
      %5230 = vmatpush1.bf16.msra.mxu0 %v5215
      %5231 = vmatprep.subr.bf16.mxu0 0
      %5232 = vmatpush1.bf16.msra.mxu0 %v5216
      %5233 = vmatprep.subr.bf16.mxu0 0
      %5234 = vmatpush1.bf16.msra.mxu0 0
      %5235 = vmatprep.subr.bf16.mxu0 0
      %5236 = vmatpush1.bf16.msra.mxu0 0
      %5237 = vmatprep.subr.bf16.mxu0 0
      %5238 = vmatpush1.bf16.msra.mxu0 0
      %5239 = vmatprep.subr.bf16.mxu0 0
      %5240 = vmatpush1.bf16.msra.mxu0 0
      %5241 = vmatprep.subr.bf16.mxu0 0
      %5242 = vmatpush1.bf16.msra.mxu0 0
      %5243 = vmatprep.subr.bf16.mxu0 0
      %5244 = vmatpush1.bf16.msra.mxu0 0
      %5245 = vmatprep.subr.bf16.mxu0 0
      %5246 = vmatpush1.bf16.msra.mxu0 0
      %5247 = vmatprep.subr.bf16.mxu0 0
      %5248 = vmatpush1.bf16.msra.mxu0 0
      %5249 = vmatprep.subr.bf16.mxu0 0
      %5250 = vmatpush1.bf16.msra.mxu0 0
      %5251 = vmatprep.subr.bf16.mxu0 0
      %5252 = vmatpush1.bf16.msra.mxu0 0
      %5253 = vmatprep.subr.bf16.mxu0 0
      %5254 = vmatpush1.bf16.msra.mxu0 0
      %5255 = vmatprep.subr.bf16.mxu0 0
      %5256 = vmatpush1.bf16.msra.mxu0 0
      %5257 = vmatprep.mubr.bf16.mxu0 0
      %5258 = vmatmul.mubr.bf16.gmra.mrb[0].mxu0 %v5223
      %v5259 = vpop.f32.mrb[0].mxu0
      %v5260 = vadd.f32 0.0, %v5259
      %v5261 = vpop.f32.mrb[0].mxu0
      %v5262 = vpop.f32.mrb[0].mxu0
      %v5263 = vadd.f32 0.0, %v5262
      %v5264 = vpop.f32.mrb[0].mxu0
      %5265 = vdwg.mxu0
      %v5266 = vmul.f32 %v5260, 0.1
      %v5267 = vmax.f32 %v5260, %v5266
      %5269 = vrot.lane.b32.xlu0 %v5267, 117
      %v5270 = vpop.permute.xlu0 %5269
      %5272 = vrot.lane.b32.xlu0 %v5267, 5
      %v5273 = vpop.permute.xlu0 %5272
      %vm5275 = vcmask 39936
      %v5276 = vsel %vm5275, %v5270, %v5273
      %v5277 = vlaneseq
      %v5278 = vshrl.u32 %v5277, 7
      %v5279 = vsub.s32 0, %v5278
      %v5280 = vrot.slane %v649, %v5279
      %v5281 = vmul.f32 %v5276, %v5280
      %5282 = vrot.lane.b32.xlu0 %v5267, 116
      %v5283 = vpop.permute.xlu0 %5282
      %5285 = vrot.lane.b32.xlu0 %v5267, 4
      %v5286 = vpop.permute.xlu0 %5285
      %vm5288 = vcmask 31744
      %v5289 = vsel %vm5288, %v5283, %v5286
      %v5290 = vlaneseq
      %v5291 = vshrl.u32 %v5290, 7
      %v5292 = vsub.s32 1, %v5291
      %v5293 = vrot.slane %v649, %v5292
      %v5294 = vmul.f32 %v5289, %v5293
      %5295 = vrot.lane.b32.xlu0 %v5267, 115
      %v5296 = vpop.permute.xlu0 %5295
      %5298 = vrot.lane.b32.xlu0 %v5267, 3
      %v5299 = vpop.permute.xlu0 %5298
      %vm5301 = vcmask 23552
      %v5302 = vsel %vm5301, %v5296, %v5299
      %v5303 = vlaneseq
      %v5304 = vshrl.u32 %v5303, 7
      %v5305 = vsub.s32 2, %v5304
      %v5306 = vrot.slane %v649, %v5305
      %v5307 = vmul.f32 %v5302, %v5306
      %5308 = vrot.lane.b32.xlu0 %v5267, 113
      %v5309 = vpop.permute.xlu0 %5308
      %5311 = vrot.lane.b32.xlu0 %v5267, 1
      %v5312 = vpop.permute.xlu0 %5311
      %v5314 = vsel %vm4862, %v5309, %v5312
      %v5315 = vlaneseq
      %v5316 = vshrl.u32 %v5315, 7
      %v5317 = vsub.s32 3, %v5316
      %v5318 = vrot.slane %v649, %v5317
      %v5319 = vmul.f32 %v5314, %v5318
      %5320 = vrot.lane.b32.xlu0 %v5267, 127
      %v5321 = vpop.permute.xlu0 %5320
      %5323 = vrot.lane.b32.xlu0 %v5267, 15
      %v5324 = vpop.permute.xlu0 %5323
      %vm5326 = vcmask 121856
      %v5327 = vsel %vm5326, %v5321, %v5324
      %v5328 = vlaneseq
      %v5329 = vshrl.u32 %v5328, 7
      %v5330 = vsub.s32 5, %v5329
      %v5331 = vrot.slane %v649, %v5330
      %v5332 = vmul.f32 %v5327, %v5331
      %5333 = vrot.lane.b32.xlu0 %v5267, 125
      %v5334 = vpop.permute.xlu0 %5333
      %5336 = vrot.lane.b32.xlu0 %v5267, 13
      %v5337 = vpop.permute.xlu0 %5336
      %vm5339 = vcmask 105472
      %v5340 = vsel %vm5339, %v5334, %v5337
      %v5341 = vlaneseq
      %v5342 = vshrl.u32 %v5341, 7
      %v5343 = vsub.s32 6, %v5342
      %v5344 = vrot.slane %v649, %v5343
      %v5345 = vmul.f32 %v5340, %v5344
      %5346 = vrot.lane.b32.xlu0 %v5267, 124
      %v5347 = vpop.permute.xlu0 %5346
      %5349 = vrot.lane.b32.xlu0 %v5267, 12
      %v5350 = vpop.permute.xlu0 %5349
      %vm5352 = vcmask 97280
      %v5353 = vsel %vm5352, %v5347, %v5350
      %v5354 = vlaneseq
      %v5355 = vshrl.u32 %v5354, 7
      %v5356 = vsub.s32 7, %v5355
      %v5357 = vrot.slane %v649, %v5356
      %v5358 = vmul.f32 %v5353, %v5357
      %5359 = vrot.lane.b32.xlu0 %v5267, 123
      %v5360 = vpop.permute.xlu0 %5359
      %5362 = vrot.lane.b32.xlu0 %v5267, 11
      %v5363 = vpop.permute.xlu0 %5362
      %vm5365 = vcmask 89088
      %v5366 = vsel %vm5365, %v5360, %v5363
      %v5367 = vlaneseq
      %v5368 = vshrl.u32 %v5367, 7
      %v5369 = vsub.s32 0, %v5368
      %v5370 = vrot.slane %v650, %v5369
      %v5371 = vmul.f32 %v5366, %v5370
      %v5372 = vld [vmem:[%s17] sm:$0xff]
      %vm5373 = vcmask 596992
      %v5375 = vsel %vm5373, %v5372, 0
      %v5378 = vsel %vm1152, 1.0, 0
      %5380 = vmatprep.subr.mxu0 0.0
      %5381 = vmatpush1.msra.mxu0 %v5281
      %5382 = vmatprep.subr.mxu0 0.0
      %5383 = vmatpush1.msra.mxu0 %v5294
      %5384 = vmatprep.subr.mxu0 0.0
      %5385 = vmatpush1.msra.mxu0 %v5307
      %5386 = vmatprep.subr.mxu0 0.0
      %5387 = vmatpush1.msra.mxu0 %v5319
      %5388 = vmatprep.subr.mxu0 0.0
      %5389 = vmatpush1.msra.mxu0 %v5267
      %5390 = vmatprep.subr.mxu0 0.0
      %5391 = vmatpush1.msra.mxu0 %v5332
      %5392 = vmatprep.subr.mxu0 0.0
      %5393 = vmatpush1.msra.mxu0 %v5345
      %5394 = vmatprep.subr.mxu0 0.0
      %5395 = vmatpush1.msra.mxu0 %v5358
      %5396 = vmatprep.subr.mxu0 0.0
      %5397 = vmatpush1.msra.mxu0 %v5371
      %5398 = vmatprep.subr.mxu0 0.0
      %5399 = vmatpush1.msra.mxu0 %v5378
      %5400 = vmatprep.subr.mxu0 0.0
      %5401 = vmatpush1.msra.mxu0 0.0
      %5402 = vmatprep.subr.mxu0 0.0
      %5403 = vmatpush1.msra.mxu0 0.0
      %5404 = vmatprep.subr.mxu0 0.0
      %5405 = vmatpush1.msra.mxu0 0.0
      %5406 = vmatprep.subr.mxu0 0.0
      %5407 = vmatpush1.msra.mxu0 0.0
      %5408 = vmatprep.subr.mxu0 0.0
      %5409 = vmatpush1.msra.mxu0 0.0
      %5410 = vmatprep.subr.mxu0 0.0
      %5411 = vmatpush1.msra.mxu0 0.0
      %5412 = vmatprep.subr.mxu0 0.0
      %5413 = vmatpush1.msra.mxu0 0.0
      %5414 = vmatprep.subr.mxu0 0.0
      %5415 = vmatpush1.msra.mxu0 0.0
      %5416 = vmatprep.subr.mxu0 0.0
      %5417 = vmatpush1.msra.mxu0 0.0
      %5418 = vmatprep.subr.mxu0 0.0
      %5419 = vmatpush1.msra.mxu0 0.0
      %5420 = vmatprep.subr.mxu0 0.0
      %5421 = vmatpush1.msra.mxu0 0.0
      %5422 = vmatprep.subr.mxu0 0.0
      %5423 = vmatpush1.msra.mxu0 0.0
      %5424 = vmatprep.subr.mxu0 0.0
      %5425 = vmatpush1.msra.mxu0 0.0
      %5426 = vmatprep.subr.mxu0 0.0
      %5427 = vmatpush1.msra.mxu0 0.0
      %5428 = vmatprep.subr.mxu0 0.0
      %5429 = vmatpush1.msra.mxu0 0.0
      %5430 = vmatprep.subr.mxu0 0.0
      %5431 = vmatpush1.msra.mxu0 0.0
      %5432 = vmatprep.subr.mxu0 0.0
      %5433 = vmatpush1.msra.mxu0 0.0
      %5434 = vmatprep.subr.mxu0 0.0
      %5435 = vmatpush1.msra.mxu0 0.0
      %5436 = vmatprep.subr.mxu0 0.0
      %5437 = vmatpush1.msra.mxu0 0.0
      %5438 = vmatprep.subr.mxu0 0.0
      %5439 = vmatpush1.msra.mxu0 0.0
      %5440 = vmatprep.subr.mxu0 0.0
      %5441 = vmatpush1.msra.mxu0 0.0
      %5442 = vmatprep.subr.mxu0 0.0
      %5443 = vmatpush1.msra.mxu0 0.0
      %5444 = vmatprep.mubr.f32.mxu0 0.0
      %5445 = vmatmul.mubr.f32.gmra.mrb[0].mxu0 %v5375
      %v5446 = vpop.f32.mrb[0].mxu0
      %v5447 = vadd.f32 %v5263, %v5446
      %v5448 = vpop.f32.mrb[0].mxu0
      %5449 = vdwg.mxu0
      %v5450 = vmul.f32 %v5447, 0.1
      %v5451 = vmax.f32 %v5447, %v5450
      %v5452 = vld [vmem:[%s613] sm:$0xff]
      %5454 = vrot.lane.b32.xlu0 %v5452, 117
      %v5455 = vpop.permute.xlu0 %5454
      %5457 = vrot.lane.b32.xlu0 %v5452, 5
      %v5458 = vpop.permute.xlu0 %5457
      %v5460 = vsel %vm5275, %v5455, %v5458
      %v5461 = vmul.f32 %v5460, %v5280
      %5462 = vrot.lane.b32.xlu0 %v5452, 116
      %v5463 = vpop.permute.xlu0 %5462
      %5465 = vrot.lane.b32.xlu0 %v5452, 4
      %v5466 = vpop.permute.xlu0 %5465
      %v5468 = vsel %vm5288, %v5463, %v5466
      %v5469 = vmul.f32 %v5468, %v5293
      %5470 = vrot.lane.b32.xlu0 %v5452, 115
      %v5471 = vpop.permute.xlu0 %5470
      %5473 = vrot.lane.b32.xlu0 %v5452, 3
      %v5474 = vpop.permute.xlu0 %5473
      %v5476 = vsel %vm5301, %v5471, %v5474
      %v5477 = vmul.f32 %v5476, %v5306
      %5478 = vrot.lane.b32.xlu0 %v5452, 113
      %v5479 = vpop.permute.xlu0 %5478
      %5481 = vrot.lane.b32.xlu0 %v5452, 1
      %v5482 = vpop.permute.xlu0 %5481
      %v5484 = vsel %vm4862, %v5479, %v5482
      %v5485 = vmul.f32 %v5484, %v5318
      %5486 = vrot.lane.b32.xlu0 %v5452, 127
      %v5487 = vpop.permute.xlu0 %5486
      %5489 = vrot.lane.b32.xlu0 %v5452, 15
      %v5490 = vpop.permute.xlu0 %5489
      %v5492 = vsel %vm5326, %v5487, %v5490
      %v5493 = vmul.f32 %v5492, %v5331
      %5494 = vrot.lane.b32.xlu0 %v5452, 125
      %v5495 = vpop.permute.xlu0 %5494
      %5497 = vrot.lane.b32.xlu0 %v5452, 13
      %v5498 = vpop.permute.xlu0 %5497
      %v5500 = vsel %vm5339, %v5495, %v5498
      %v5501 = vmul.f32 %v5500, %v5344
      %5502 = vrot.lane.b32.xlu0 %v5452, 124
      %v5503 = vpop.permute.xlu0 %5502
      %5505 = vrot.lane.b32.xlu0 %v5452, 12
      %v5506 = vpop.permute.xlu0 %5505
      %v5508 = vsel %vm5352, %v5503, %v5506
      %v5509 = vmul.f32 %v5508, %v5357
      %5510 = vrot.lane.b32.xlu0 %v5452, 123
      %v5511 = vpop.permute.xlu0 %5510
      %5513 = vrot.lane.b32.xlu0 %v5452, 11
      %v5514 = vpop.permute.xlu0 %5513
      %v5516 = vsel %vm5365, %v5511, %v5514
      %v5517 = vmul.f32 %v5516, %v5370
      %v5518 = vld [vmem:[%s18] sm:$0xff]
      %vm5519 = vcmask 588800
      %v5521 = vsel %vm5519, %v5518, 0
      %5523 = vmatprep.subr.mxu0 0.0
      %5524 = vmatpush1.msra.mxu0 %v5461
      %5525 = vmatprep.subr.mxu0 0.0
      %5526 = vmatpush1.msra.mxu0 %v5469
      %5527 = vmatprep.subr.mxu0 0.0
      %5528 = vmatpush1.msra.mxu0 %v5477
      %5529 = vmatprep.subr.mxu0 0.0
      %5530 = vmatpush1.msra.mxu0 %v5485
      %5531 = vmatprep.subr.mxu0 0.0
      %5532 = vmatpush1.msra.mxu0 %v5452
      %5533 = vmatprep.subr.mxu0 0.0
      %5534 = vmatpush1.msra.mxu0 %v5493
      %5535 = vmatprep.subr.mxu0 0.0
      %5536 = vmatpush1.msra.mxu0 %v5501
      %5537 = vmatprep.subr.mxu0 0.0
      %5538 = vmatpush1.msra.mxu0 %v5509
      %5539 = vmatprep.subr.mxu0 0.0
      %5540 = vmatpush1.msra.mxu0 %v5517
      %5541 = vmatprep.subr.mxu0 0.0
      %5542 = vmatpush1.msra.mxu0 0.0
      %5543 = vmatprep.subr.mxu0 0.0
      %5544 = vmatpush1.msra.mxu0 0.0
      %5545 = vmatprep.subr.mxu0 0.0
      %5546 = vmatpush1.msra.mxu0 0.0
      %5547 = vmatprep.subr.mxu0 0.0
      %5548 = vmatpush1.msra.mxu0 0.0
      %5549 = vmatprep.subr.mxu0 0.0
      %5550 = vmatpush1.msra.mxu0 0.0
      %5551 = vmatprep.subr.mxu0 0.0
      %5552 = vmatpush1.msra.mxu0 0.0
      %5553 = vmatprep.subr.mxu0 0.0
      %5554 = vmatpush1.msra.mxu0 0.0
      %5555 = vmatprep.subr.mxu0 0.0
      %5556 = vmatpush1.msra.mxu0 0.0
      %5557 = vmatprep.subr.mxu0 0.0
      %5558 = vmatpush1.msra.mxu0 0.0
      %5559 = vmatprep.subr.mxu0 0.0
      %5560 = vmatpush1.msra.mxu0 0.0
      %5561 = vmatprep.subr.mxu0 0.0
      %5562 = vmatpush1.msra.mxu0 0.0
      %5563 = vmatprep.subr.mxu0 0.0
      %5564 = vmatpush1.msra.mxu0 0.0
      %5565 = vmatprep.subr.mxu0 0.0
      %5566 = vmatpush1.msra.mxu0 0.0
      %5567 = vmatprep.subr.mxu0 0.0
      %5568 = vmatpush1.msra.mxu0 0.0
      %5569 = vmatprep.subr.mxu0 0.0
      %5570 = vmatpush1.msra.mxu0 0.0
      %5571 = vmatprep.subr.mxu0 0.0
      %5572 = vmatpush1.msra.mxu0 0.0
      %5573 = vmatprep.subr.mxu0 0.0
      %5574 = vmatpush1.msra.mxu0 0.0
      %5575 = vmatprep.subr.mxu0 0.0
      %5576 = vmatpush1.msra.mxu0 0.0
      %5577 = vmatprep.subr.mxu0 0.0
      %5578 = vmatpush1.msra.mxu0 0.0
      %5579 = vmatprep.subr.mxu0 0.0
      %5580 = vmatpush1.msra.mxu0 0.0
      %5581 = vmatprep.subr.mxu0 0.0
      %5582 = vmatpush1.msra.mxu0 0.0
      %5583 = vmatprep.subr.mxu0 0.0
      %5584 = vmatpush1.msra.mxu0 0.0
      %5585 = vmatprep.subr.mxu0 0.0
      %5586 = vmatpush1.msra.mxu0 0.0
      %5587 = vmatprep.mubr.f32.mxu0 0.0
      %5588 = vmatmul.mubr.f32.gmra.mrb[0].mxu0 %v5521
      %v5589 = vpop.f32.mrb[0].mxu0
      %v5590 = vadd.f32 0.0, %v5589
      %v5591 = vpop.f32.mrb[0].mxu0
      %5592 = vdwg.mxu0
      %v5593 = vxor.u32 %v5451, 2147483648
      %v5594 = vmul.f32 %v5593, 1.442695
      %v5595 = vpow.pop %v5594
      %v5596 = vadd.f32 %v5595, 1.0
      %v5597 = vrcp.pop %v5596
      %v5598 = vmul.f32 1.0, %v5597
      %v5599 = vmul.f32 %v5590, %v5598
      %v5600 = vadd.f32 %v5599, %v5452
      %vm5601 = vcmask 130048
      %5602 = vst.msk [vmem:[%s617] sm:$0xff] %vm5601, %v5600
      %p5603 = scmp.lt.s32.totalorder %s30, 1
      %s5604 = scalar_select %p5603, %s30, 1
      %s5605 = smul.addr %s5604, 8
      %s5606 = scalar_lea.vmem %s19, %s5605
      // Predicated region
      $region97: #{igs_forward.1} parent=95 // pred_check
        %p5607 = pneg %p457
      $region98: #{igs_forward.1} parent=95 // pred_check_branch
        %5609 = sbr.rel (%p5607) target = $region100
      $region99: #{igs_forward.1} parent=95 // pred_region
        _
      $region100: #{igs_forward.1} parent=95 // pred_fallthru
        _
    $region96: #{igs_forward.1} parent=5 // pred_fallthru
      _
    %p5610 = scmp.le.s32.totalorder 2, %s25
    // Predicated region
    $region101: #{igs_forward.1} parent=5 // pred_check
      %p5611 = pneg %p5610
    $region102: #{igs_forward.1} parent=5 // pred_check_branch
      %5613 = sbr.rel (%p5611) target = $region104
    $region103: #{igs_forward.1} parent=5 // pred_region
      %s5614 = ssub.s32 %s25, 2
      // Predicated region
      $region105: #{igs_forward.1} parent=103 // pred_check
        %p5615 = pneg %p463
      $region106: #{igs_forward.1} parent=103 // pred_check_branch
        %5617 = sbr.rel (%p5615) target = $region108
      $region107: #{igs_forward.1} parent=103 // pred_region
        %p5618 = scmp.lt.s32.totalorder %s31, 1
        %s5619 = scalar_select %p5618, %s31, 1
        %s5620 = smul.addr %s5619, 8
        %s5621 = scalar_lea.vmem %s19, %s5620
      $region108: #{igs_forward.1} parent=103 // pred_fallthru
        _
    $region104: #{igs_forward.1} parent=5 // pred_fallthru
      _
  $region6: #{igs_forward.1} parent=0 // loop_footer
    %s29 = sadd.s32 1, %s25
  $region7: #{igs_forward.1} parent=0 // loop_footer_branch
    %24 = sbr.rel target = $region3
  $region8: #{igs_forward.1} parent=0 // loop_exit
    _

</llo_original>
